<compile_context>
chip_gen: v6e
topology: v6e:2x2x1
jax: 0.10.0
libtpu: 0.0.40
codegen_flags: <defaults>
</compile_context>

<pallas_src>
import math

import jax
import jax.numpy as jnp
from jax.experimental import pallas as pl
from jax.experimental.pallas import tpu as pltpu

LANE = 128

C1, C2 = 20, 50                          # true conv channel counts
C1P = C2P = LANE                         # lane-padded conv output channel counts
NK1 = 32                                 # conv1 contraction 25 -> 32
NK2 = 512                                # conv2 contraction 500 -> 512
NK_FC1 = 1280                            # fc1 contraction 1250 -> 1280
NF1, NF1P = 320, 384                     # fc1 out 320 -> 384
NOUT, NOUTP = 10, 128                    # logits 10 -> 128

_GRANULE = 16                            # bf16 sublane tile -> keep tm a multiple of 16


def _round_up(n, m):
    return ((n + m - 1) // m) * m


# ----------------------------------------------------------------------------
# Per-generation VMEM budget + M-tile selection
# ----------------------------------------------------------------------------

_VMEM_LIMIT_CACHE = None


def _vmem_limit():
    """Scoped-VMEM budget: 64 MiB on 128 MiB parts (v5e/v6e), 32 MiB otherwise (v7x)."""
    global _VMEM_LIMIT_CACHE
    if _VMEM_LIMIT_CACHE is None:
        limit = 32 * 1024 * 1024
        try:
            info = pltpu.get_tpu_info()
            cap = getattr(info, "vmem_capacity_bytes", None)
            if cap is not None and cap >= 100 * 1024 * 1024:
                limit = 64 * 1024 * 1024
        except Exception:
            pass
        _VMEM_LIMIT_CACHE = limit
    return _VMEM_LIMIT_CACHE


def _choose_tm(m_rows, bytes_in_per_row, bytes_out_per_row, fixed_bytes, vmem_limit):
    """Pick an M-tile size (multiple of 16) from a conservative VMEM byte budget that
    includes the (double-buffered) weight blocks, prefers >= 2 grid steps (v7x dual TC),
    and prefers tile sizes that divide M exactly (no pad / output-slice copies)."""
    cap = 512 if vmem_limit > 33 * 1024 * 1024 else 256
    budget = int(vmem_limit * 0.7) - fixed_bytes
    per_row = 2 * (bytes_in_per_row + bytes_out_per_row)      # double-buffered in/out tiles
    tm = budget // max(per_row, 1)
    tm = (tm // _GRANULE) * _GRANULE
    tm = max(_GRANULE, min(cap, tm))
    tm = min(tm, _round_up(m_rows, _GRANULE))                  # never exceed padded M
    if m_rows >= 2 * _GRANULE:
        tm = min(tm, _round_up((m_rows + 1) // 2, _GRANULE))   # at least 2 grid steps
    if m_rows % _GRANULE == 0:
        for cand in range(tm, _GRANULE - 1, -_GRANULE):        # exact divisor if possible
            if m_rows % cand == 0:
                return cand
    return tm


# ----------------------------------------------------------------------------
# Pallas kernels
# ----------------------------------------------------------------------------

def _make_conv_pool_kernel(tm):
    """Fused conv-as-matmul + 2x2 max-pool + bias + ReLU.

    The LHS block stacks the four pool-window patch slabs along M (rows p*tm..(p+1)*tm
    hold pool position p), so ONE matmul feeds the MXU per tile; the pool is then three
    VPU maximums over static sublane slices.  max_p relu(x_p@W + b) == relu(max_p(x_p@W) + b).
    """
    def kernel(p_ref, w_ref, b_ref, o_ref):
        y = jnp.dot(p_ref[...], w_ref[...], preferred_element_type=jnp.float32)
        m = jnp.maximum(jnp.maximum(y[0 * tm:1 * tm], y[1 * tm:2 * tm]),
                        jnp.maximum(y[2 * tm:3 * tm], y[3 * tm:4 * tm]))
        o_ref[...] = jnp.maximum(m + b_ref[...], 0.0).astype(o_ref.dtype)
    return kernel


def _mlp2_kernel(x_ref, w1_ref, b1_ref, w2_ref, b2_ref, o_ref):
    """Fused fc1 + ReLU + fc2 (+ bias); the fc1 activation never leaves VMEM."""
    h = jnp.dot(x_ref[...], w1_ref[...], preferred_element_type=jnp.float32) + b1_ref[...]
    h = jnp.maximum(h, 0.0).astype(w2_ref.dtype)
    o_ref[...] = (jnp.dot(h, w2_ref[...], preferred_element_type=jnp.float32)
                  + b2_ref[...]).astype(o_ref.dtype)


# ----------------------------------------------------------------------------
# Pallas call wrappers (M-grid tiling, parallel semantics, explicit VMEM limit)
# ----------------------------------------------------------------------------

def _stack_pool_patches(mats, tm):
    """Arrange the 4 pool-position patch matrices (each (M, K)) as one 2-D array whose
    per-tile rows are [pool0 | pool1 | pool2 | pool3], each tm rows."""
    M, K = mats[0].shape
    Mp = _round_up(M, tm)
    if Mp != M:
        mats = [jnp.pad(m, ((0, Mp - M), (0, 0))) for m in mats]
    n_tiles = Mp // tm
    st = jnp.stack(mats, axis=0)                                   # (4, Mp, K)
    st = st.reshape(4, n_tiles, tm, K).transpose(1, 0, 2, 3)        # (tiles, 4, tm, K)
    return st.reshape(n_tiles * 4 * tm, K), Mp


def fused_conv_relu_pool_matmul(mats, w, b2d, out_dtype):
    M, K = mats[0].shape
    N = w.shape[1]
    vmem_limit = _vmem_limit()
    fixed = 2 * (w.size * w.dtype.itemsize) + 2 * (b2d.size * 4)
    tm = _choose_tm(M,
                    bytes_in_per_row=4 * K * 2,                    # 4 pool positions, bf16
                    bytes_out_per_row=N * jnp.dtype(out_dtype).itemsize,
                    fixed_bytes=fixed, vmem_limit=vmem_limit)
    stacked, Mp = _stack_pool_patches(mats, tm)

    out = pl.pallas_call(
        _make_conv_pool_kernel(tm),
        out_shape=jax.ShapeDtypeStruct((Mp, N), out_dtype),
        grid=(Mp // tm,),
        in_specs=[pl.BlockSpec((4 * tm, K), lambda i: (i, 0)),
                  pl.BlockSpec((K, N), lambda i: (0, 0)),
                  pl.BlockSpec((1, N), lambda i: (0, 0))],
        out_specs=pl.BlockSpec((tm, N), lambda i: (i, 0)),
        compiler_params=pltpu.CompilerParams(
            dimension_semantics=("parallel",),
            vmem_limit_bytes=vmem_limit),
    )(stacked, w, b2d)
    return out if Mp == M else out[:M]


def mlp2(x, w1, b1, w2, b2, out_dtype=jnp.float32):
    M, K = x.shape
    N1, N2 = w1.shape[1], w2.shape[1]
    vmem_limit = _vmem_limit()
    fixed = (2 * (w1.size * w1.dtype.itemsize + w2.size * w2.dtype.itemsize)
             + 2 * 4 * (N1 + N2))
    tm = _choose_tm(M,
                    bytes_in_per_row=K * x.dtype.itemsize,
                    bytes_out_per_row=N2 * jnp.dtype(out_dtype).itemsize + N1 * 4,
                    fixed_bytes=fixed, vmem_limit=vmem_limit)
    Mp = _round_up(M, tm)
    if Mp != M:
        x = jnp.pad(x, ((0, Mp - M), (0, 0)))

    out = pl.pallas_call(
        _mlp2_kernel,
        out_shape=jax.ShapeDtypeStruct((Mp, N2), out_dtype),
        grid=(Mp // tm,),
        in_specs=[pl.BlockSpec((tm, K), lambda i: (i, 0)),
                  pl.BlockSpec((K, N1), lambda i: (0, 0)),
                  pl.BlockSpec((1, N1), lambda i: (0, 0)),
                  pl.BlockSpec((N1, N2), lambda i: (0, 0)),
                  pl.BlockSpec((1, N2), lambda i: (0, 0))],
        out_specs=pl.BlockSpec((tm, N2), lambda i: (i, 0)),
        compiler_params=pltpu.CompilerParams(
            dimension_semantics=("parallel",),
            vmem_limit_bytes=vmem_limit),
    )(x, w1, b1, w2, b2)
    return out if Mp == M else out[:M]


# ----------------------------------------------------------------------------
# Glue: pool-aware im2col on REAL channels only (plain JAX strided slicing)
# ----------------------------------------------------------------------------

def conv_relu_pool(x_nhwc, c_real, w, b2d, ksize, padding, out_dtype=jnp.bfloat16):
    """Conv (stride 1) + bias + ReLU + MaxPool2d(2,2); NHWC in / NHWC out (lane-padded C).

    Only the `c_real` real channels of the (possibly lane-padded) input participate, so
    the contraction dim K stays small (conv2: 512 instead of 3200)."""
    B, H, W, C = x_nhwc.shape
    x = x_nhwc[..., :c_real] if c_real < C else x_nhwc
    if padding:
        x = jnp.pad(x, ((0, 0), (padding, padding), (padding, padding), (0, 0)))
    Hp, Wp = H + 2 * padding, W + 2 * padding
    OH, OW = Hp - ksize + 1, Wp - ksize + 1
    PH, PW = OH // 2, OW // 2
    K = w.shape[0]                                   # aligned K of the packed weight
    Kreal = ksize * ksize * c_real
    mats = []
    for i in range(2):
        for j in range(2):
            cols = []
            for kh in range(ksize):
                for kw in range(ksize):
                    hs, ws = i + kh, j + kw
                    cols.append(x[:, hs:hs + 2 * PH - 1:2, ws:ws + 2 * PW - 1:2, :])
            patch = jnp.stack(cols, axis=3)          # (B, PH, PW, k*k, c_real): (kh,kw,c)
            mats.append(patch.reshape(B * PH * PW, Kreal).astype(jnp.bfloat16))
    if Kreal < K:
        mats = [jnp.pad(m, ((0, 0), (0, K - Kreal))) for m in mats]
    out = fused_conv_relu_pool_matmul(mats, w, b2d, out_dtype)
    return out.reshape(B, PH, PW, w.shape[1])


# ----------------------------------------------------------------------------
# Tensor-ring parameterization (parameter setup, plain JAX)
# ----------------------------------------------------------------------------

def init_tr_cores(key, mode_sizes, rank, scale=0.2):
    keys = jax.random.split(key, len(mode_sizes))
    return [jax.random.normal(k, (rank, n, rank), jnp.float32) * scale
            for k, n in zip(keys, mode_sizes)]


def tr_chain(cores):
    t = cores[0]
    for c in cores[1:]:
        r, m, _ = t.shape
        n = c.shape[1]
        t = jnp.einsum('amb,bnc->amnc', t, c).reshape(r, m * n, r)
    return t


def tr_conv_weight(cores, in_factors, out_factors, ksize):
    """Dense conv weight as a matmul matrix (Cin*k*k, Cout), rows ordered (c, kh, kw)."""
    n_in, n_out = len(in_factors), len(out_factors)
    cin, cout = math.prod(in_factors), math.prod(out_factors)
    A = tr_chain(cores[:n_in])
    Bo = tr_chain(cores[n_in:n_in + n_out])
    K = cores[-1]
    M1 = jnp.einsum('aib,boc->aioc', A, Bo)
    W = jnp.einsum('aioc,cka->iok', M1, K)
    W = W.reshape(cin, cout, ksize, ksize).transpose(1, 0, 2, 3)
    return W.reshape(cout, cin * ksize * ksize).T


def tr_linear_weight(cores, in_factors, out_factors):
    n_in = len(in_factors)
    A = tr_chain(cores[:n_in])
    Bo = tr_chain(cores[n_in:])
    return jnp.einsum('aib,boa->io', A, Bo)


def init_params(seed=42, layer_ranks=(20, 20, 20, 20)):
    r = layer_ranks
    key = jax.random.PRNGKey(seed)
    k1, k2, k3, k4, kb = jax.random.split(key, 5)
    kb1, kb2, kb3, kb4 = jax.random.split(kb, 4)

    c1_cores = init_tr_cores(k1, [1, 4, 5, 25], r[0])
    w1 = tr_conv_weight(c1_cores, [1], [4, 5], 5)                 # (25, 20)
    b1 = jax.random.normal(kb1, (C1,), jnp.float32) * 0.01

    c2_cores = init_tr_cores(k2, [4, 5, 5, 10, 25], r[1])
    w2 = tr_conv_weight(c2_cores, [4, 5], [5, 10], 5)             # (500, 50)
    b2 = jax.random.normal(kb2, (C2,), jnp.float32) * 0.01

    f1_cores = init_tr_cores(k3, [5, 5, 5, 10, 5, 8, 8], r[2])
    w_fc1 = tr_linear_weight(f1_cores, [5, 5, 5, 10], [5, 8, 8])  # (1250, 320)
    b_fc1 = jax.random.normal(kb3, (NF1,), jnp.float32) * 0.01

    f2_cores = init_tr_cores(k4, [5, 8, 8, 10], r[3])
    w_fc2 = tr_linear_weight(f2_cores, [5, 8, 8], [10])           # (320, 10)
    b_fc2 = jax.random.normal(kb4, (NOUT,), jnp.float32) * 0.01

    return dict(w1=w1, b1=b1, w2=w2, b2=b2,
                w_fc1=w_fc1, b_fc1=b_fc1, w_fc2=w_fc2, b_fc2=b_fc2)


def pack_params(p):
    """One-time weight transform: permute rows to NHWC/(kh,kw,c) order, zero-pad the
    lane (N) dims to 128-multiples and the contraction (K) dims to small aligned sizes
    (25->32, 500->512, 1250->1280, 320->384), and cast the matmul operands to bf16.
    Biases stay f32 (added onto the f32 accumulator)."""
    bf = jnp.bfloat16

    # conv1: (25, 20) rows (c=1, kh, kw) == (kh, kw); K 25->32, N 20->128.
    w1 = p['w1'].reshape(1, 5, 5, C1).transpose(1, 2, 0, 3).reshape(25, C1)
    w1 = jnp.pad(w1, ((0, NK1 - 25), (0, C1P - C1))).astype(bf)
    b1 = jnp.pad(p['b1'], (0, C1P - C1)).reshape(1, C1P)

    # conv2: (500, 50) rows (c, kh, kw) -> rows (kh, kw, c); K 500->512, N 50->128.
    w2 = p['w2'].reshape(C1, 5, 5, C2).transpose(1, 2, 0, 3).reshape(25 * C1, C2)
    w2 = jnp.pad(w2, ((0, NK2 - 25 * C1), (0, C2P - C2))).astype(bf)
    b2 = jnp.pad(p['b2'], (0, C2P - C2)).reshape(1, C2P)

    # fc1: (1250, 320) rows in torch NCHW flatten order (c, h, w) -> rows (h, w, c);
    #      K 1250->1280 (zero rows align with the activation's zero K-pad), N 320->384.
    wf1 = p['w_fc1'].reshape(C2, 5, 5, NF1).transpose(1, 2, 0, 3).reshape(25 * C2, NF1)
    wf1 = jnp.pad(wf1, ((0, NK_FC1 - 25 * C2), (0, NF1P - NF1))).astype(bf)
    bf1 = jnp.pad(p['b_fc1'], (0, NF1P - NF1)).reshape(1, NF1P)

    # fc2: (320, 10); K 320->384 (zero rows align with fc1's zero padded cols), N 10->128.
    wf2 = jnp.pad(p['w_fc2'], ((0, NF1P - NF1), (0, NOUTP - NOUT))).astype(bf)
    bf2 = jnp.pad(p['b_fc2'], (0, NOUTP - NOUT)).reshape(1, NOUTP)

    return dict(w1=w1, b1=b1, w2=w2, b2=b2, wf1=wf1, bf1=bf1, wf2=wf2, bf2=bf2)


# ----------------------------------------------------------------------------
# Forward pass (mirrors LeNet5_TR.forward)
# ----------------------------------------------------------------------------

def lenet5_tr_forward(params, x):
    """x: (B, 1, 28, 28) NCHW float32 -> logits (B, 10) float32."""
    B = x.shape[0]
    # NCHW -> NHWC: Cin == 1, so this is a pure reshape (no relayout copy).
    x = x.reshape(B, x.shape[2], x.shape[3], 1)

    out = conv_relu_pool(x, 1, params['w1'], params['b1'], ksize=5, padding=2)      # (B,14,14,128) bf16
    out = conv_relu_pool(out, C1, params['w2'], params['b2'], ksize=5, padding=0)   # (B, 5, 5,128) bf16

    # NHWC flatten of the 50 real channels; fc1 weight rows were permuted at pack time
    # to match torch's NCHW view(B, -1) exactly, so no transpose is needed here.
    flat = out[..., :C2].reshape(B, 25 * C2)                                        # (B, 1250)
    flat = jnp.pad(flat, ((0, 0), (0, NK_FC1 - 25 * C2)))                           # (B, 1280)

    logits = mlp2(flat, params['wf1'], params['bf1'], params['wf2'], params['bf2'])
    return logits[:, :NOUT]


if __name__ == "__main__":
    params = pack_params(init_params(seed=42, layer_ranks=(20, 20, 20, 20)))

    key = jax.random.PRNGKey(0)
    x = jax.random.normal(key, (2, 1, 28, 28), jnp.float32)        # MNIST-shaped input

    fwd = jax.jit(lenet5_tr_forward)
    logits = fwd(params, x)
    jax.block_until_ready(logits)

    assert logits.shape == (2, 10) and logits.dtype == jnp.float32
    assert bool(jnp.all(jnp.isfinite(logits)))
    print("KERNEL_OK")
</pallas_src>

<mosaic_0001>
module attributes {stable_mosaic.version = 11 : i64} {
  func.func @kernel(%arg0: i32, %arg1: memref<832x32xbf16, #tpu.memory_space<vmem>>, %arg2: memref<32x128xbf16, #tpu.memory_space<vmem>>, %arg3: memref<1x128xf32, #tpu.memory_space<vmem>>, %arg4: memref<208x128xbf16, #tpu.memory_space<vmem>>) attributes {dimension_semantics = [#tpu.dimension_semantics<parallel>], iteration_bounds = array<i64: 2>, scalar_prefetch = 0 : i64, scratch_operands = 0 : i64, tpu.core_type = #tpu.core_type<tc>, window_params = [{transform_indices = @transform_0, window_bounds = array<i64: 832, 32>}, {pipeline_mode = #tpu.pipeline_mode<synchronous>, transform_indices = @transform_1, window_bounds = array<i64: 32, 128>}, {pipeline_mode = #tpu.pipeline_mode<synchronous>, transform_indices = @transform_2, window_bounds = array<i64: 1, 128>}, {transform_indices = @transform_3, window_bounds = array<i64: 208, 128>}]} {
    %c0 = arith.constant 0 : index
    %c0_0 = arith.constant 0 : index
    %0 = vector.load %arg1[%c0, %c0_0] : memref<832x32xbf16, #tpu.memory_space<vmem>>, vector<832x32xbf16>
    %c0_1 = arith.constant 0 : index
    %c0_2 = arith.constant 0 : index
    %1 = vector.load %arg2[%c0_1, %c0_2] : memref<32x128xbf16, #tpu.memory_space<vmem>>, vector<32x128xbf16>
    %cst = arith.constant dense<0.000000e+00> : vector<832x128xf32>
    %2 = tpu.matmul %0, %1, %cst {dimension_numbers = #tpu.dot_dimension_numbers<[1], [0], [0], [1], [0, 0, 1, 1], [], []>} : vector<832x32xbf16>, vector<32x128xbf16>, vector<832x128xf32> -> vector<832x128xf32>
    %3 = vector.extract_strided_slice %2 {offsets = [0, 0], sizes = [208, 128], strides = [1, 1]} : vector<832x128xf32> to vector<208x128xf32>
    %4 = vector.extract_strided_slice %2 {offsets = [208, 0], sizes = [208, 128], strides = [1, 1]} : vector<832x128xf32> to vector<208x128xf32>
    %5 = arith.maximumf %3, %4 : vector<208x128xf32>
    %6 = vector.extract_strided_slice %2 {offsets = [416, 0], sizes = [208, 128], strides = [1, 1]} : vector<832x128xf32> to vector<208x128xf32>
    %7 = vector.extract_strided_slice %2 {offsets = [624, 0], sizes = [208, 128], strides = [1, 1]} : vector<832x128xf32> to vector<208x128xf32>
    %8 = arith.maximumf %6, %7 : vector<208x128xf32>
    %9 = arith.maximumf %5, %8 : vector<208x128xf32>
    %c0_3 = arith.constant 0 : index
    %c0_4 = arith.constant 0 : index
    %10 = vector.load %arg3[%c0_3, %c0_4] : memref<1x128xf32, #tpu.memory_space<vmem>>, vector<1x128xf32>
    %11 = vector.broadcast %10 : vector<1x128xf32> to vector<208x128xf32>
    %12 = arith.addf %9, %11 : vector<208x128xf32>
    %cst_5 = arith.constant 0.000000e+00 : f32
    %13 = vector.broadcast %cst_5 : f32 to vector<208x128xf32>
    %14 = arith.maximumf %12, %13 : vector<208x128xf32>
    %15 = arith.truncf %14 : vector<208x128xf32> to vector<208x128xbf16>
    %c0_6 = arith.constant 0 : index
    %c0_7 = arith.constant 0 : index
    %16 = vector.load %arg4[%c0_6, %c0_7] : memref<208x128xbf16, #tpu.memory_space<vmem>>, vector<208x128xbf16>
    tpu.vector_store %arg4[%c0_6, %c0_7], %15 {strides = array<i32>} : memref<208x128xbf16, #tpu.memory_space<vmem>>, vector<208x128xbf16>,
    return
  }
  func.func @transform_0(%arg0: i32) -> (i32, i32) {
    %c0_i32 = arith.constant 0 : i32
    %c0_i32_0 = arith.constant 0 : i32
    return %arg0, %c0_i32 : i32, i32
  }
  func.func @transform_1(%arg0: i32) -> (i32, i32) {
    %c0_i32 = arith.constant 0 : i32
    %c0_i32_0 = arith.constant 0 : i32
    %c0_i32_1 = arith.constant 0 : i32
    return %c0_i32, %c0_i32_0 : i32, i32
  }
  func.func @transform_2(%arg0: i32) -> (i32, i32) {
    %c0_i32 = arith.constant 0 : i32
    %c0_i32_0 = arith.constant 0 : i32
    %c0_i32_1 = arith.constant 0 : i32
    return %c0_i32, %c0_i32_0 : i32, i32
  }
  func.func @transform_3(%arg0: i32) -> (i32, i32) {
    %c0_i32 = arith.constant 0 : i32
    %c0_i32_0 = arith.constant 0 : i32
    return %arg0, %c0_i32 : i32, i32
  }
}

module attributes {stable_mosaic.version = 11 : i64} {
  func.func @kernel(%arg0: i32, %arg1: memref<128x512xbf16, #tpu.memory_space<vmem>>, %arg2: memref<512x128xbf16, #tpu.memory_space<vmem>>, %arg3: memref<1x128xf32, #tpu.memory_space<vmem>>, %arg4: memref<32x128xbf16, #tpu.memory_space<vmem>>) attributes {dimension_semantics = [#tpu.dimension_semantics<parallel>], iteration_bounds = array<i64: 2>, scalar_prefetch = 0 : i64, scratch_operands = 0 : i64, tpu.core_type = #tpu.core_type<tc>, window_params = [{transform_indices = @transform_0, window_bounds = array<i64: 128, 512>}, {pipeline_mode = #tpu.pipeline_mode<synchronous>, transform_indices = @transform_1, window_bounds = array<i64: 512, 128>}, {pipeline_mode = #tpu.pipeline_mode<synchronous>, transform_indices = @transform_2, window_bounds = array<i64: 1, 128>}, {transform_indices = @transform_3, window_bounds = array<i64: 32, 128>}]} {
    %c0 = arith.constant 0 : index
    %c0_0 = arith.constant 0 : index
    %0 = vector.load %arg1[%c0, %c0_0] : memref<128x512xbf16, #tpu.memory_space<vmem>>, vector<128x512xbf16>
    %c0_1 = arith.constant 0 : index
    %c0_2 = arith.constant 0 : index
    %1 = vector.load %arg2[%c0_1, %c0_2] : memref<512x128xbf16, #tpu.memory_space<vmem>>, vector<512x128xbf16>
    %cst = arith.constant dense<0.000000e+00> : vector<128x128xf32>
    %2 = tpu.matmul %0, %1, %cst {dimension_numbers = #tpu.dot_dimension_numbers<[1], [0], [0], [1], [0, 0, 1, 1], [], []>} : vector<128x512xbf16>, vector<512x128xbf16>, vector<128x128xf32> -> vector<128x128xf32>
    %3 = vector.extract_strided_slice %2 {offsets = [0, 0], sizes = [32, 128], strides = [1, 1]} : vector<128x128xf32> to vector<32x128xf32>
    %4 = vector.extract_strided_slice %2 {offsets = [32, 0], sizes = [32, 128], strides = [1, 1]} : vector<128x128xf32> to vector<32x128xf32>
    %5 = arith.maximumf %3, %4 : vector<32x128xf32>
    %6 = vector.extract_strided_slice %2 {offsets = [64, 0], sizes = [32, 128], strides = [1, 1]} : vector<128x128xf32> to vector<32x128xf32>
    %7 = vector.extract_strided_slice %2 {offsets = [96, 0], sizes = [32, 128], strides = [1, 1]} : vector<128x128xf32> to vector<32x128xf32>
    %8 = arith.maximumf %6, %7 : vector<32x128xf32>
    %9 = arith.maximumf %5, %8 : vector<32x128xf32>
    %c0_3 = arith.constant 0 : index
    %c0_4 = arith.constant 0 : index
    %10 = vector.load %arg3[%c0_3, %c0_4] : memref<1x128xf32, #tpu.memory_space<vmem>>, vector<1x128xf32>
    %11 = vector.broadcast %10 : vector<1x128xf32> to vector<32x128xf32>
    %12 = arith.addf %9, %11 : vector<32x128xf32>
    %cst_5 = arith.constant 0.000000e+00 : f32
    %13 = vector.broadcast %cst_5 : f32 to vector<32x128xf32>
    %14 = arith.maximumf %12, %13 : vector<32x128xf32>
    %15 = arith.truncf %14 : vector<32x128xf32> to vector<32x128xbf16>
    %c0_6 = arith.constant 0 : index
    %c0_7 = arith.constant 0 : index
    %16 = vector.load %arg4[%c0_6, %c0_7] : memref<32x128xbf16, #tpu.memory_space<vmem>>, vector<32x128xbf16>
    tpu.vector_store %arg4[%c0_6, %c0_7], %15 {strides = array<i32>} : memref<32x128xbf16, #tpu.memory_space<vmem>>, vector<32x128xbf16>,
    return
  }
  func.func @transform_0(%arg0: i32) -> (i32, i32) {
    %c0_i32 = arith.constant 0 : i32
    %c0_i32_0 = arith.constant 0 : i32
    return %arg0, %c0_i32 : i32, i32
  }
  func.func @transform_1(%arg0: i32) -> (i32, i32) {
    %c0_i32 = arith.constant 0 : i32
    %c0_i32_0 = arith.constant 0 : i32
    %c0_i32_1 = arith.constant 0 : i32
    return %c0_i32, %c0_i32_0 : i32, i32
  }
  func.func @transform_2(%arg0: i32) -> (i32, i32) {
    %c0_i32 = arith.constant 0 : i32
    %c0_i32_0 = arith.constant 0 : i32
    %c0_i32_1 = arith.constant 0 : i32
    return %c0_i32, %c0_i32_0 : i32, i32
  }
  func.func @transform_3(%arg0: i32) -> (i32, i32) {
    %c0_i32 = arith.constant 0 : i32
    %c0_i32_0 = arith.constant 0 : i32
    return %arg0, %c0_i32 : i32, i32
  }
}

module attributes {stable_mosaic.version = 11 : i64} {
  func.func @_mlp2_kernel(%arg0: i32, %arg1: memref<16x1280xbf16, #tpu.memory_space<vmem>>, %arg2: memref<1280x384xbf16, #tpu.memory_space<vmem>>, %arg3: memref<1x384xf32, #tpu.memory_space<vmem>>, %arg4: memref<384x128xbf16, #tpu.memory_space<vmem>>, %arg5: memref<1x128xf32, #tpu.memory_space<vmem>>, %arg6: memref<16x128xf32, #tpu.memory_space<vmem>>) attributes {dimension_semantics = [#tpu.dimension_semantics<parallel>], iteration_bounds = array<i64: 1>, scalar_prefetch = 0 : i64, scratch_operands = 0 : i64, tpu.core_type = #tpu.core_type<tc>, window_params = [{transform_indices = @transform_0, window_bounds = array<i64: 16, 1280>}, {pipeline_mode = #tpu.pipeline_mode<synchronous>, transform_indices = @transform_1, window_bounds = array<i64: 1280, 384>}, {pipeline_mode = #tpu.pipeline_mode<synchronous>, transform_indices = @transform_2, window_bounds = array<i64: 1, 384>}, {pipeline_mode = #tpu.pipeline_mode<synchronous>, transform_indices = @transform_3, window_bounds = array<i64: 384, 128>}, {pipeline_mode = #tpu.pipeline_mode<synchronous>, transform_indices = @transform_4, window_bounds = array<i64: 1, 128>}, {transform_indices = @transform_5, window_bounds = array<i64: 16, 128>}]} {
    %c0 = arith.constant 0 : index
    %c0_0 = arith.constant 0 : index
    %0 = vector.load %arg1[%c0, %c0_0] : memref<16x1280xbf16, #tpu.memory_space<vmem>>, vector<16x1280xbf16>
    %c0_1 = arith.constant 0 : index
    %c0_2 = arith.constant 0 : index
    %1 = vector.load %arg2[%c0_1, %c0_2] : memref<1280x384xbf16, #tpu.memory_space<vmem>>, vector<1280x384xbf16>
    %cst = arith.constant dense<0.000000e+00> : vector<16x384xf32>
    %2 = tpu.matmul %0, %1, %cst {dimension_numbers = #tpu.dot_dimension_numbers<[1], [0], [0], [1], [0, 0, 1, 1], [], []>} : vector<16x1280xbf16>, vector<1280x384xbf16>, vector<16x384xf32> -> vector<16x384xf32>
    %c0_3 = arith.constant 0 : index
    %c0_4 = arith.constant 0 : index
    %3 = vector.load %arg3[%c0_3, %c0_4] : memref<1x384xf32, #tpu.memory_space<vmem>>, vector<1x384xf32>
    %4 = vector.broadcast %3 : vector<1x384xf32> to vector<16x384xf32>
    %5 = arith.addf %2, %4 : vector<16x384xf32>
    %cst_5 = arith.constant 0.000000e+00 : f32
    %6 = vector.broadcast %cst_5 : f32 to vector<16x384xf32>
    %7 = arith.maximumf %5, %6 : vector<16x384xf32>
    %8 = arith.truncf %7 : vector<16x384xf32> to vector<16x384xbf16>
    %c0_6 = arith.constant 0 : index
    %c0_7 = arith.constant 0 : index
    %9 = vector.load %arg4[%c0_6, %c0_7] : memref<384x128xbf16, #tpu.memory_space<vmem>>, vector<384x128xbf16>
    %cst_8 = arith.constant dense<0.000000e+00> : vector<16x128xf32>
    %10 = tpu.matmul %8, %9, %cst_8 {dimension_numbers = #tpu.dot_dimension_numbers<[1], [0], [0], [1], [0, 0, 1, 1], [], []>} : vector<16x384xbf16>, vector<384x128xbf16>, vector<16x128xf32> -> vector<16x128xf32>
    %c0_9 = arith.constant 0 : index
    %c0_10 = arith.constant 0 : index
    %11 = vector.load %arg5[%c0_9, %c0_10] : memref<1x128xf32, #tpu.memory_space<vmem>>, vector<1x128xf32>
    %12 = vector.broadcast %11 : vector<1x128xf32> to vector<16x128xf32>
    %13 = arith.addf %10, %12 : vector<16x128xf32>
    %c0_11 = arith.constant 0 : index
    %c0_12 = arith.constant 0 : index
    %14 = vector.load %arg6[%c0_11, %c0_12] : memref<16x128xf32, #tpu.memory_space<vmem>>, vector<16x128xf32>
    tpu.vector_store %arg6[%c0_11, %c0_12], %13 {strides = array<i32>} : memref<16x128xf32, #tpu.memory_space<vmem>>, vector<16x128xf32>,
    return
  }
  func.func @transform_0(%arg0: i32) -> (i32, i32) {
    %c0_i32 = arith.constant 0 : i32
    %c0_i32_0 = arith.constant 0 : i32
    return %arg0, %c0_i32 : i32, i32
  }
  func.func @transform_1(%arg0: i32) -> (i32, i32) {
    %c0_i32 = arith.constant 0 : i32
    %c0_i32_0 = arith.constant 0 : i32
    %c0_i32_1 = arith.constant 0 : i32
    return %c0_i32, %c0_i32_0 : i32, i32
  }
  func.func @transform_2(%arg0: i32) -> (i32, i32) {
    %c0_i32 = arith.constant 0 : i32
    %c0_i32_0 = arith.constant 0 : i32
    %c0_i32_1 = arith.constant 0 : i32
    return %c0_i32, %c0_i32_0 : i32, i32
  }
  func.func @transform_3(%arg0: i32) -> (i32, i32) {
    %c0_i32 = arith.constant 0 : i32
    %c0_i32_0 = arith.constant 0 : i32
    %c0_i32_1 = arith.constant 0 : i32
    return %c0_i32, %c0_i32_0 : i32, i32
  }
  func.func @transform_4(%arg0: i32) -> (i32, i32) {
    %c0_i32 = arith.constant 0 : i32
    %c0_i32_0 = arith.constant 0 : i32
    %c0_i32_1 = arith.constant 0 : i32
    return %c0_i32, %c0_i32_0 : i32, i32
  }
  func.func @transform_5(%arg0: i32) -> (i32, i32) {
    %c0_i32 = arith.constant 0 : i32
    %c0_i32_0 = arith.constant 0 : i32
    return %arg0, %c0_i32 : i32, i32
  }
}

</mosaic_0001>

<llo_original>
// kernel: lenet5_tr_forward.3
$region0: #{lenet5_tr_forward.3}
  #allocation0 [shape = 'u32[]', space=smem, size = 0x4, offset = 0x4, fixed_abs, tag = 'smem constant byte address 0x4 - core index']
  #allocation1 [shape = 'u32[144,128]{1,0:T(1,128)}', space=vmem, size = 0x12000, scoped, tag = 'internal scratch']
  %s0 = inlined_call_operand.vmem [shape: bf16[1664,32], index: 0, kind: input, shape index: {}]
  %s1 = inlined_call_operand.vmem [shape: bf16[32,128], index: 1, kind: input, shape index: {}]
  %s2 = inlined_call_operand.vmem [shape: f32[1,128], index: 2, kind: input, shape index: {}]
  %s3 = inlined_call_operand.vmem [shape: bf16[416,128], index: 3, kind: output, shape index: {}]
  %s4 = sld [smem:[#allocation0]]
  $region45: #{lenet5_tr_forward.3} parent=0
    _
  %s6 = ssub.s32 1, %s4
  %s7 = scalar_select 0, %s6, %s4
  loop: start=0, step=1, limit=4
  $region2: #{lenet5_tr_forward.3} parent=0 // loop_pre_header
    _
  $region3: #{lenet5_tr_forward.3} parent=0 // loop_header
    %s9 = sphi 0, %s13
    %p10 = scmp.ge.s32.totalorder %s9, 4
    %s19 = sphi 0, %s21
    %s22 = sphi 0, %s19
    %s23 = sphi 0, %s22
    %s39 = sphi 0, %s23
    %s43 = sphi 0, %s43
    %s45 = sphi 0, %s43
    %s46 = sphi 0, %s45
    %s60 = sphi 0, %s46
    %s64 = sphi 0, %s64
    %s66 = sphi 0, %s64
    %s67 = sphi 0, %s66
    %s81 = sphi 0, %s67
    %s87 = sphi 0, %s89
    %s90 = sphi 0, %s87
    %s91 = sphi 0, %s90
    %s107 = sphi 0, %s91
  $region4: #{lenet5_tr_forward.3} parent=0 // loop_header_branch
    %12 = sbr.rel (%p10) target = $region8
  $region5: #{lenet5_tr_forward.3} parent=0 // loop_body
    %s14 = ssub.s32 %s9, 1
    %s15 = ssub.s32 %s9, 2
    %s16 = sadd.s32 %s9, 1
    %s17 = ssub.s32 %s9, %s16
    %p18 = scmp.eq.s32.totalorder %s17, 0
    %s20 = sadd.s32 %s19, 1
    %s21 = scalar_select %p18, %s19, %s20
    %p24 = pneg %p18
    %p25 = scmp.eq.s32.totalorder %s9, 1
    %p26 = por %p24, %p25
    %p27 = scmp.ne.s32.totalorder %s19, %s22
    %p28 = scmp.eq.s32.totalorder %s9, 0
    %p29 = por %p27, %p28
    %p30 = scmp.ne.s32.totalorder %s19, %s22
    %p31 = scmp.eq.s32.totalorder %s14, 1
    %p32 = por %p30, %p31
    %p33 = scmp.ne.s32.totalorder %s22, %s23
    %p34 = scmp.eq.s32.totalorder %s14, 0
    %p35 = por %p33, %p34
    %p36 = scmp.ne.s32.totalorder %s22, %s23
    %p37 = scmp.eq.s32.totalorder %s15, 1
    %p38 = por %p36, %p37
    %p40 = scmp.ne.s32.totalorder %s23, %s39
    %p41 = scmp.eq.s32.totalorder %s15, 0
    %p42 = por %p40, %p41
    %s44 = sadd.s32 %s43, 1
    %p47 = scmp.eq.s32.totalorder %s9, 1
    %p48 = scmp.ne.s32.totalorder %s43, %s45
    %p49 = scmp.eq.s32.totalorder %s9, 0
    %p50 = por %p48, %p49
    %p51 = scmp.ne.s32.totalorder %s43, %s45
    %p52 = scmp.eq.s32.totalorder %s14, 1
    %p53 = por %p51, %p52
    %p54 = scmp.ne.s32.totalorder %s45, %s46
    %p55 = scmp.eq.s32.totalorder %s14, 0
    %p56 = por %p54, %p55
    %p57 = scmp.ne.s32.totalorder %s45, %s46
    %p58 = scmp.eq.s32.totalorder %s15, 1
    %p59 = por %p57, %p58
    %p61 = scmp.ne.s32.totalorder %s46, %s60
    %p62 = scmp.eq.s32.totalorder %s15, 0
    %p63 = por %p61, %p62
    %s65 = sadd.s32 %s64, 1
    %p68 = scmp.eq.s32.totalorder %s9, 1
    %p69 = scmp.ne.s32.totalorder %s64, %s66
    %p70 = scmp.eq.s32.totalorder %s9, 0
    %p71 = por %p69, %p70
    %p72 = scmp.ne.s32.totalorder %s64, %s66
    %p73 = scmp.eq.s32.totalorder %s14, 1
    %p74 = por %p72, %p73
    %p75 = scmp.ne.s32.totalorder %s66, %s67
    %p76 = scmp.eq.s32.totalorder %s14, 0
    %p77 = por %p75, %p76
    %p78 = scmp.ne.s32.totalorder %s66, %s67
    %p79 = scmp.eq.s32.totalorder %s15, 1
    %p80 = por %p78, %p79
    %p82 = scmp.ne.s32.totalorder %s67, %s81
    %p83 = scmp.eq.s32.totalorder %s15, 0
    %p84 = por %p82, %p83
    %s85 = ssub.s32 %s9, %s16
    %p86 = scmp.eq.s32.totalorder %s85, 0
    %s88 = sadd.s32 %s87, 1
    %s89 = scalar_select %p86, %s87, %s88
    %p92 = pneg %p86
    %p93 = scmp.eq.s32.totalorder %s9, 1
    %p94 = por %p92, %p93
    %p95 = scmp.ne.s32.totalorder %s87, %s90
    %p96 = scmp.eq.s32.totalorder %s9, 0
    %p97 = por %p95, %p96
    %p98 = scmp.ne.s32.totalorder %s87, %s90
    %p99 = scmp.eq.s32.totalorder %s14, 1
    %p100 = por %p98, %p99
    %p101 = scmp.ne.s32.totalorder %s90, %s91
    %p102 = scmp.eq.s32.totalorder %s14, 0
    %p103 = por %p101, %p102
    %p104 = scmp.ne.s32.totalorder %s90, %s91
    %p105 = scmp.eq.s32.totalorder %s15, 1
    %p106 = por %p104, %p105
    %p108 = scmp.ne.s32.totalorder %s91, %s107
    %p109 = scmp.eq.s32.totalorder %s15, 0
    %p110 = por %p108, %p109
    %p111 = scmp.le.s32.totalorder 1, %s9
    %p112 = scmp.lt.s32.totalorder %s9, 3
    %p113 = pnand %p111, %p112
    %p114 = pneg %p113
    // Predicated region
    $region9: #{lenet5_tr_forward.3} parent=5 // pred_check
      _
    $region10: #{lenet5_tr_forward.3} parent=5 // pred_check_branch
      %116 = sbr.rel (%p113) target = $region12
    $region11: #{lenet5_tr_forward.3} parent=5 // pred_region
      %s117 = ssub.s32 %s9, 1
      // Predicated region
      $region13: #{lenet5_tr_forward.3} parent=11 // pred_check
        %p118 = pneg %p56
      $region14: #{lenet5_tr_forward.3} parent=11 // pred_check_branch
        %120 = sbr.rel (%p118) target = $region16
      $region15: #{lenet5_tr_forward.3} parent=11 // pred_region
        _
      $region16: #{lenet5_tr_forward.3} parent=11 // pred_fallthru
        _
      // Predicated region
      $region17: #{lenet5_tr_forward.3} parent=11 // pred_check
        %p121 = pneg %p77
      $region18: #{lenet5_tr_forward.3} parent=11 // pred_check_branch
        %123 = sbr.rel (%p121) target = $region20
      $region19: #{lenet5_tr_forward.3} parent=11 // pred_region
        _
      $region20: #{lenet5_tr_forward.3} parent=11 // pred_fallthru
        _
    $region12: #{lenet5_tr_forward.3} parent=5 // pred_fallthru
      _
    %p124 = scmp.lt.s32.totalorder %s9, 2
    // Predicated region
    $region21: #{lenet5_tr_forward.3} parent=5 // pred_check
      %p125 = pneg %p124
    $region22: #{lenet5_tr_forward.3} parent=5 // pred_check_branch
      %127 = sbr.rel (%p125) target = $region24
    $region23: #{lenet5_tr_forward.3} parent=5 // pred_region
      // Predicated region
      $region25: #{lenet5_tr_forward.3} parent=23 // pred_check
        %p128 = pneg %p29
      $region26: #{lenet5_tr_forward.3} parent=23 // pred_check_branch
        %130 = sbr.rel (%p128) target = $region28
      $region27: #{lenet5_tr_forward.3} parent=23 // pred_region
        %s131 = smul.u32 104, %s9
        %p132 = scmp.lt.s32.totalorder %s131, 207
        %s133 = scalar_select %p132, %s131, 207
        %s134 = smul.addr %s133, 4
        %s135 = scalar_lea.vmem %s0, %s134
        %s136 = smul.u32 104, %s9
      $region28: #{lenet5_tr_forward.3} parent=23 // pred_fallthru
        _
    $region24: #{lenet5_tr_forward.3} parent=5 // pred_fallthru
      _
    %p137 = scmp.le.s32.totalorder 1, %s9
    %p138 = scmp.lt.s32.totalorder %s9, 3
    %p139 = pnand %p137, %p138
    %p140 = pneg %p139
    // Predicated region
    $region29: #{lenet5_tr_forward.3} parent=5 // pred_check
      _
    $region30: #{lenet5_tr_forward.3} parent=5 // pred_check_branch
      %142 = sbr.rel (%p139) target = $region32
    $region31: #{lenet5_tr_forward.3} parent=5 // pred_region
      %s143 = ssub.s32 %s9, 1
      %s144 = smul.u32 104, %s14
      %p145 = scmp.lt.s32.totalorder %s144, 207
      %s146 = scalar_select %p145, %s144, 207
      %s147 = smul.addr %s146, 4
      %s148 = scalar_lea.vmem %s0, %s147
      %p149 = pneg %p35
      %p150 = pneg %p32
      %p151 = pneg %p56
      %p152 = pneg %p53
      %p153 = pneg %p77
      %p154 = pneg %p74
      %p155 = pneg %p103
      %p156 = pneg %p100
      %s157 = smul.u32 26, %s14
      %p158 = scmp.lt.s32.totalorder %s157, 51
      %s159 = scalar_select %p158, %s157, 51
      %s160 = smul.addr %s159, 4
      %s161 = scalar_lea.vmem %s3, %s160
      %s162 = smul.u32 104, %s14
      %p163 = scmp.lt.s32.totalorder %s162, 207
      %s164 = scalar_select %p163, %s162, 207
      %s165 = smul.addr %s164, 4
      %s166 = scalar_lea.vmem %s0, %s165
      %s167 = smul.u32 104, %s14
      %s168 = smul.u32 26, %s14
      %p169 = scmp.lt.s32.totalorder %s168, 51
      %s170 = scalar_select %p169, %s168, 51
      %s171 = smul.addr %s170, 4
      %s172 = scalar_lea.vmem %s3, %s171
      %s173 = smul.u32 26, %s14
      %v175 = vld [vmem:[%s166] sm:$0xf]
      %v176 = vld [vmem:[%s166 + $0x4] sm:$0xf]
      %v177 = vld [vmem:[%s166 + $0x8] sm:$0xf]
      %v178 = vld [vmem:[%s166 + $0xc] sm:$0xf]
      %v179 = vld [vmem:[%s166 + $0x10] sm:$0xf]
      %v180 = vld [vmem:[%s166 + $0x14] sm:$0xf]
      %v181 = vld [vmem:[%s166 + $0x18] sm:$0xf]
      %v182 = vld [vmem:[%s166 + $0x1c] sm:$0xf]
      %v183 = vld [vmem:[%s166 + $0x20] sm:$0xf]
      %v184 = vld [vmem:[%s166 + $0x24] sm:$0xf]
      %v185 = vld [vmem:[%s166 + $0x28] sm:$0xf]
      %v186 = vld [vmem:[%s166 + $0x2c] sm:$0xf]
      %v187 = vld [vmem:[%s166 + $0x30] sm:$0xf]
      %v188 = vld [vmem:[%s166 + $0x34] sm:$0xf]
      %v189 = vld [vmem:[%s166 + $0x38] sm:$0xf]
      %v190 = vld [vmem:[%s166 + $0x3c] sm:$0xf]
      %v191 = vld [vmem:[%s166 + $0x40] sm:$0xf]
      %v192 = vld [vmem:[%s166 + $0x44] sm:$0xf]
      %v193 = vld [vmem:[%s166 + $0x48] sm:$0xf]
      %v194 = vld [vmem:[%s166 + $0x4c] sm:$0xf]
      %v195 = vld [vmem:[%s166 + $0x50] sm:$0xf]
      %v196 = vld [vmem:[%s166 + $0x54] sm:$0xf]
      %v197 = vld [vmem:[%s166 + $0x58] sm:$0xf]
      %v198 = vld [vmem:[%s166 + $0x5c] sm:$0xf]
      %v199 = vld [vmem:[%s166 + $0x60] sm:$0xf]
      %v200 = vld [vmem:[%s166 + $0x64] sm:$0xf]
      %v201 = vld [vmem:[%s166 + $0x68] sm:$0xf]
      %v202 = vld [vmem:[%s166 + $0x6c] sm:$0xf]
      %v203 = vld [vmem:[%s166 + $0x70] sm:$0xf]
      %v204 = vld [vmem:[%s166 + $0x74] sm:$0xf]
      %v205 = vld [vmem:[%s166 + $0x78] sm:$0xf]
      %v206 = vld [vmem:[%s166 + $0x7c] sm:$0xf]
      %v207 = vld [vmem:[%s166 + $0x80] sm:$0xf]
      %v208 = vld [vmem:[%s166 + $0x84] sm:$0xf]
      %v209 = vld [vmem:[%s166 + $0x88] sm:$0xf]
      %v210 = vld [vmem:[%s166 + $0x8c] sm:$0xf]
      %v211 = vld [vmem:[%s166 + $0x90] sm:$0xf]
      %v212 = vld [vmem:[%s166 + $0x94] sm:$0xf]
      %v213 = vld [vmem:[%s166 + $0x98] sm:$0xf]
      %v214 = vld [vmem:[%s166 + $0x9c] sm:$0xf]
      %v215 = vld [vmem:[%s166 + $0xa0] sm:$0xf]
      %v216 = vld [vmem:[%s166 + $0xa4] sm:$0xf]
      %v217 = vld [vmem:[%s166 + $0xa8] sm:$0xf]
      %v218 = vld [vmem:[%s166 + $0xac] sm:$0xf]
      %v219 = vld [vmem:[%s166 + $0xb0] sm:$0xf]
      %v220 = vld [vmem:[%s166 + $0xb4] sm:$0xf]
      %v221 = vld [vmem:[%s166 + $0xb8] sm:$0xf]
      %v222 = vld [vmem:[%s166 + $0xbc] sm:$0xf]
      %v223 = vld [vmem:[%s166 + $0xc0] sm:$0xf]
      %v224 = vld [vmem:[%s166 + $0xc4] sm:$0xf]
      %v225 = vld [vmem:[%s166 + $0xc8] sm:$0xf]
      %v226 = vld [vmem:[%s166 + $0xcc] sm:$0xf]
      %v227 = vld [vmem:[%s166 + $0xd0] sm:$0xf]
      %v228 = vld [vmem:[%s166 + $0xd4] sm:$0xf]
      %v229 = vld [vmem:[%s166 + $0xd8] sm:$0xf]
      %v230 = vld [vmem:[%s166 + $0xdc] sm:$0xf]
      %v231 = vld [vmem:[%s166 + $0xe0] sm:$0xf]
      %v232 = vld [vmem:[%s166 + $0xe4] sm:$0xf]
      %v233 = vld [vmem:[%s166 + $0xe8] sm:$0xf]
      %v234 = vld [vmem:[%s166 + $0xec] sm:$0xf]
      %v235 = vld [vmem:[%s166 + $0xf0] sm:$0xf]
      %v236 = vld [vmem:[%s166 + $0xf4] sm:$0xf]
      %v237 = vld [vmem:[%s166 + $0xf8] sm:$0xf]
      %v238 = vld [vmem:[%s166 + $0xfc] sm:$0xf]
      %v239 = vld [vmem:[%s166 + $0x100] sm:$0xf]
      %v240 = vld [vmem:[%s166 + $0x104] sm:$0xf]
      %v241 = vld [vmem:[%s166 + $0x108] sm:$0xf]
      %v242 = vld [vmem:[%s166 + $0x10c] sm:$0xf]
      %v243 = vld [vmem:[%s166 + $0x110] sm:$0xf]
      %v244 = vld [vmem:[%s166 + $0x114] sm:$0xf]
      %v245 = vld [vmem:[%s166 + $0x118] sm:$0xf]
      %v246 = vld [vmem:[%s166 + $0x11c] sm:$0xf]
      %v247 = vld [vmem:[%s166 + $0x120] sm:$0xf]
      %v248 = vld [vmem:[%s166 + $0x124] sm:$0xf]
      %v249 = vld [vmem:[%s166 + $0x128] sm:$0xf]
      %v250 = vld [vmem:[%s166 + $0x12c] sm:$0xf]
      %v251 = vld [vmem:[%s166 + $0x130] sm:$0xf]
      %v252 = vld [vmem:[%s166 + $0x134] sm:$0xf]
      %v253 = vld [vmem:[%s166 + $0x138] sm:$0xf]
      %v254 = vld [vmem:[%s166 + $0x13c] sm:$0xf]
      %v255 = vld [vmem:[%s166 + $0x140] sm:$0xf]
      %v256 = vld [vmem:[%s166 + $0x144] sm:$0xf]
      %v257 = vld [vmem:[%s166 + $0x148] sm:$0xf]
      %v258 = vld [vmem:[%s166 + $0x14c] sm:$0xf]
      %v259 = vld [vmem:[%s166 + $0x150] sm:$0xf]
      %v260 = vld [vmem:[%s166 + $0x154] sm:$0xf]
      %v261 = vld [vmem:[%s166 + $0x158] sm:$0xf]
      %v262 = vld [vmem:[%s166 + $0x15c] sm:$0xf]
      %v263 = vld [vmem:[%s166 + $0x160] sm:$0xf]
      %v264 = vld [vmem:[%s166 + $0x164] sm:$0xf]
      %v265 = vld [vmem:[%s166 + $0x168] sm:$0xf]
      %v266 = vld [vmem:[%s166 + $0x16c] sm:$0xf]
      %v267 = vld [vmem:[%s166 + $0x170] sm:$0xf]
      %v268 = vld [vmem:[%s166 + $0x174] sm:$0xf]
      %v269 = vld [vmem:[%s166 + $0x178] sm:$0xf]
      %v270 = vld [vmem:[%s166 + $0x17c] sm:$0xf]
      %v271 = vld [vmem:[%s166 + $0x180] sm:$0xf]
      %v272 = vld [vmem:[%s166 + $0x184] sm:$0xf]
      %v273 = vld [vmem:[%s166 + $0x188] sm:$0xf]
      %v274 = vld [vmem:[%s166 + $0x18c] sm:$0xf]
      %v275 = vld [vmem:[%s166 + $0x190] sm:$0xf]
      %v276 = vld [vmem:[%s166 + $0x194] sm:$0xf]
      %v277 = vld [vmem:[%s166 + $0x198] sm:$0xf]
      %v278 = vld [vmem:[%s166 + $0x19c] sm:$0xf]
      %v279 = vld [vmem:[%s1] sm:$0xf]
      %v280 = vld [vmem:[%s1 + $0x4] sm:$0xf]
      %v281 = vld [vmem:[%s1 + $0x8] sm:$0xf]
      %v282 = vld [vmem:[%s1 + $0xc] sm:$0xf]
      %v387 = vunpack.c.l.b16 %v175
      %v388 = vunpack.c.l.b16 %v176
      %v389 = vunpack.c.l.b16 %v177
      %v390 = vunpack.c.l.b16 %v178
      %v391 = vunpack.c.l.b16 %v179
      %v392 = vunpack.c.l.b16 %v180
      %v393 = vunpack.c.l.b16 %v181
      %v394 = vunpack.c.l.b16 %v182
      %v395 = vunpack.c.l.b16 %v183
      %v396 = vunpack.c.l.b16 %v184
      %v397 = vunpack.c.l.b16 %v185
      %v398 = vunpack.c.l.b16 %v186
      %v399 = vunpack.c.l.b16 %v187
      %v400 = vunpack.c.l.b16 %v188
      %v401 = vunpack.c.l.b16 %v189
      %v402 = vunpack.c.l.b16 %v190
      %v403 = vunpack.c.l.b16 %v191
      %v404 = vunpack.c.l.b16 %v192
      %v405 = vunpack.c.l.b16 %v193
      %v406 = vunpack.c.l.b16 %v194
      %v407 = vunpack.c.l.b16 %v195
      %v408 = vunpack.c.l.b16 %v196
      %v409 = vunpack.c.l.b16 %v197
      %v410 = vunpack.c.l.b16 %v198
      %v411 = vunpack.c.l.b16 %v199
      %v412 = vunpack.c.l.b16 %v200
      %v413 = vunpack.c.l.b16 %v201
      %v414 = vunpack.c.l.b16 %v202
      %v415 = vunpack.c.l.b16 %v203
      %v416 = vunpack.c.l.b16 %v204
      %v417 = vunpack.c.l.b16 %v205
      %v418 = vunpack.c.l.b16 %v206
      %v419 = vunpack.c.l.b16 %v207
      %v420 = vunpack.c.l.b16 %v208
      %v421 = vunpack.c.l.b16 %v209
      %v422 = vunpack.c.l.b16 %v210
      %v423 = vunpack.c.l.b16 %v211
      %v424 = vunpack.c.l.b16 %v212
      %v425 = vunpack.c.l.b16 %v213
      %v426 = vunpack.c.l.b16 %v214
      %v427 = vunpack.c.l.b16 %v215
      %v428 = vunpack.c.l.b16 %v216
      %v429 = vunpack.c.l.b16 %v217
      %v430 = vunpack.c.l.b16 %v218
      %v431 = vunpack.c.l.b16 %v219
      %v432 = vunpack.c.l.b16 %v220
      %v433 = vunpack.c.l.b16 %v221
      %v434 = vunpack.c.l.b16 %v222
      %v435 = vunpack.c.l.b16 %v223
      %v436 = vunpack.c.l.b16 %v224
      %v437 = vunpack.c.l.b16 %v225
      %v438 = vunpack.c.l.b16 %v226
      %v439 = vunpack.c.l.b16 %v227
      %v440 = vunpack.c.l.b16 %v228
      %v441 = vunpack.c.l.b16 %v229
      %v442 = vunpack.c.l.b16 %v230
      %v443 = vunpack.c.l.b16 %v231
      %v444 = vunpack.c.l.b16 %v232
      %v445 = vunpack.c.l.b16 %v233
      %v446 = vunpack.c.l.b16 %v234
      %v447 = vunpack.c.l.b16 %v235
      %v448 = vunpack.c.l.b16 %v236
      %v449 = vunpack.c.l.b16 %v237
      %v450 = vunpack.c.l.b16 %v238
      %v451 = vunpack.c.l.b16 %v239
      %v452 = vunpack.c.l.b16 %v240
      %v453 = vunpack.c.l.b16 %v241
      %v454 = vunpack.c.l.b16 %v242
      %v455 = vunpack.c.l.b16 %v243
      %v456 = vunpack.c.l.b16 %v244
      %v457 = vunpack.c.l.b16 %v245
      %v458 = vunpack.c.l.b16 %v246
      %v459 = vunpack.c.l.b16 %v247
      %v460 = vunpack.c.l.b16 %v248
      %v461 = vunpack.c.l.b16 %v249
      %v462 = vunpack.c.l.b16 %v250
      %v463 = vunpack.c.l.b16 %v251
      %v464 = vunpack.c.l.b16 %v252
      %v465 = vunpack.c.l.b16 %v253
      %v466 = vunpack.c.l.b16 %v254
      %v467 = vunpack.c.l.b16 %v255
      %v468 = vunpack.c.l.b16 %v256
      %v469 = vunpack.c.l.b16 %v257
      %v470 = vunpack.c.l.b16 %v258
      %v471 = vunpack.c.l.b16 %v259
      %v472 = vunpack.c.l.b16 %v260
      %v473 = vunpack.c.l.b16 %v261
      %v474 = vunpack.c.l.b16 %v262
      %v475 = vunpack.c.l.b16 %v263
      %v476 = vunpack.c.l.b16 %v264
      %v477 = vunpack.c.l.b16 %v265
      %v478 = vunpack.c.l.b16 %v266
      %v479 = vunpack.c.l.b16 %v267
      %v480 = vunpack.c.l.b16 %v268
      %v481 = vunpack.c.l.b16 %v269
      %v482 = vunpack.c.l.b16 %v270
      %v483 = vunpack.c.l.b16 %v271
      %v484 = vunpack.c.l.b16 %v272
      %v485 = vunpack.c.l.b16 %v273
      %v486 = vunpack.c.l.b16 %v274
      %v487 = vunpack.c.l.b16 %v275
      %v488 = vunpack.c.l.b16 %v276
      %v489 = vunpack.c.l.b16 %v277
      %v490 = vunpack.c.l.b16 %v278
      %v491 = vpack.c.b16 %v388, %v387
      %v492 = vpack.c.b16 %v390, %v389
      %v493 = vpack.c.b16 %v392, %v391
      %v494 = vpack.c.b16 %v394, %v393
      %v495 = vpack.c.b16 %v396, %v395
      %v496 = vpack.c.b16 %v398, %v397
      %v497 = vpack.c.b16 %v400, %v399
      %v498 = vpack.c.b16 %v402, %v401
      %v499 = vpack.c.b16 %v404, %v403
      %v500 = vpack.c.b16 %v406, %v405
      %v501 = vpack.c.b16 %v408, %v407
      %v502 = vpack.c.b16 %v410, %v409
      %v503 = vpack.c.b16 %v412, %v411
      %v504 = vpack.c.b16 %v414, %v413
      %v505 = vpack.c.b16 %v416, %v415
      %v506 = vpack.c.b16 %v418, %v417
      %v507 = vpack.c.b16 %v420, %v419
      %v508 = vpack.c.b16 %v422, %v421
      %v509 = vpack.c.b16 %v424, %v423
      %v510 = vpack.c.b16 %v426, %v425
      %v511 = vpack.c.b16 %v428, %v427
      %v512 = vpack.c.b16 %v430, %v429
      %v513 = vpack.c.b16 %v432, %v431
      %v514 = vpack.c.b16 %v434, %v433
      %v515 = vpack.c.b16 %v436, %v435
      %v516 = vpack.c.b16 %v438, %v437
      %v517 = vpack.c.b16 %v440, %v439
      %v518 = vpack.c.b16 %v442, %v441
      %v519 = vpack.c.b16 %v444, %v443
      %v520 = vpack.c.b16 %v446, %v445
      %v521 = vpack.c.b16 %v448, %v447
      %v522 = vpack.c.b16 %v450, %v449
      %v523 = vpack.c.b16 %v452, %v451
      %v524 = vpack.c.b16 %v454, %v453
      %v525 = vpack.c.b16 %v456, %v455
      %v526 = vpack.c.b16 %v458, %v457
      %v527 = vpack.c.b16 %v460, %v459
      %v528 = vpack.c.b16 %v462, %v461
      %v529 = vpack.c.b16 %v464, %v463
      %v530 = vpack.c.b16 %v466, %v465
      %v531 = vpack.c.b16 %v468, %v467
      %v532 = vpack.c.b16 %v470, %v469
      %v533 = vpack.c.b16 %v472, %v471
      %v534 = vpack.c.b16 %v474, %v473
      %v535 = vpack.c.b16 %v476, %v475
      %v536 = vpack.c.b16 %v478, %v477
      %v537 = vpack.c.b16 %v480, %v479
      %v538 = vpack.c.b16 %v482, %v481
      %v539 = vpack.c.b16 %v484, %v483
      %v540 = vpack.c.b16 %v486, %v485
      %v541 = vpack.c.b16 %v488, %v487
      %v542 = vpack.c.b16 %v490, %v489
      %v547 = vunpack.c.l.b16 %v279
      %v548 = vunpack.c.l.b16 %v280
      %v549 = vunpack.c.l.b16 %v281
      %v550 = vunpack.c.l.b16 %v282
      %v551 = vpack.c.b16 %v548, %v547
      %v552 = vpack.c.b16 %v550, %v549
      %vm555 = vcmask 261120
      %v557 = vsel %vm555, %v491, 0
      %v560 = vsel %vm555, %v492, 0
      %v563 = vsel %vm555, %v493, 0
      %v566 = vsel %vm555, %v494, 0
      %v569 = vsel %vm555, %v495, 0
      %v572 = vsel %vm555, %v496, 0
      %v575 = vsel %vm555, %v497, 0
      %v578 = vsel %vm555, %v498, 0
      %v581 = vsel %vm555, %v499, 0
      %v584 = vsel %vm555, %v500, 0
      %v587 = vsel %vm555, %v501, 0
      %v590 = vsel %vm555, %v502, 0
      %v593 = vsel %vm555, %v503, 0
      %v596 = vsel %vm555, %v504, 0
      %v599 = vsel %vm555, %v505, 0
      %v602 = vsel %vm555, %v506, 0
      %v605 = vsel %vm555, %v507, 0
      %v608 = vsel %vm555, %v508, 0
      %v611 = vsel %vm555, %v509, 0
      %v614 = vsel %vm555, %v510, 0
      %v617 = vsel %vm555, %v511, 0
      %v620 = vsel %vm555, %v512, 0
      %v623 = vsel %vm555, %v513, 0
      %v626 = vsel %vm555, %v514, 0
      %v629 = vsel %vm555, %v515, 0
      %v632 = vsel %vm555, %v516, 0
      %v635 = vsel %vm555, %v517, 0
      %v638 = vsel %vm555, %v518, 0
      %v641 = vsel %vm555, %v519, 0
      %v644 = vsel %vm555, %v520, 0
      %v647 = vsel %vm555, %v521, 0
      %v650 = vsel %vm555, %v522, 0
      %v653 = vsel %vm555, %v523, 0
      %v656 = vsel %vm555, %v524, 0
      %v659 = vsel %vm555, %v525, 0
      %v662 = vsel %vm555, %v526, 0
      %v665 = vsel %vm555, %v527, 0
      %v668 = vsel %vm555, %v528, 0
      %v671 = vsel %vm555, %v529, 0
      %v674 = vsel %vm555, %v530, 0
      %v677 = vsel %vm555, %v531, 0
      %v680 = vsel %vm555, %v532, 0
      %v683 = vsel %vm555, %v533, 0
      %v686 = vsel %vm555, %v534, 0
      %v689 = vsel %vm555, %v535, 0
      %v692 = vsel %vm555, %v536, 0
      %v695 = vsel %vm555, %v537, 0
      %v698 = vsel %vm555, %v538, 0
      %v701 = vsel %vm555, %v539, 0
      %v704 = vsel %vm555, %v540, 0
      %v707 = vsel %vm555, %v541, 0
      %v710 = vsel %vm555, %v542, 0
      %712 = vmatprep.subr.bf16.mxu0 0
      %713 = vmatpush1.bf16.msra.mxu0 0
      %714 = vmatprep.subr.bf16.mxu0 0
      %715 = vmatpush1.bf16.msra.mxu0 0
      %716 = vmatprep.subr.bf16.mxu0 0
      %717 = vmatpush1.bf16.msra.mxu0 0
      %718 = vmatprep.subr.bf16.mxu0 0
      %719 = vmatpush1.bf16.msra.mxu0 0
      %720 = vmatprep.subr.bf16.mxu0 0
      %721 = vmatpush1.bf16.msra.mxu0 0
      %722 = vmatprep.subr.bf16.mxu0 0
      %723 = vmatpush1.bf16.msra.mxu0 0
      %724 = vmatprep.subr.bf16.mxu0 0
      %725 = vmatpush1.bf16.msra.mxu0 %v552
      %726 = vmatprep.subr.bf16.mxu0 0
      %727 = vmatpush1.bf16.msra.mxu0 %v551
      %728 = vmatprep.subr.bf16.mxu0 0
      %729 = vmatpush2.bf16.msra.mxu0 0
      %730 = vmatprep.subr.bf16.mxu0 0
      %731 = vmatpush2.bf16.msra.mxu0 0
      %732 = vmatprep.subr.bf16.mxu0 0
      %733 = vmatpush2.bf16.msra.mxu0 0
      %734 = vmatprep.subr.bf16.mxu0 0
      %735 = vmatpush2.bf16.msra.mxu0 0
      %736 = vmatprep.subr.bf16.mxu0 0
      %737 = vmatpush2.bf16.msra.mxu0 0
      %738 = vmatprep.subr.bf16.mxu0 0
      %739 = vmatpush2.bf16.msra.mxu0 0
      %740 = vmatprep.subr.bf16.mxu0 0
      %741 = vmatpush2.bf16.msra.mxu0 0
      %742 = vmatprep.subr.bf16.mxu0 0
      %743 = vmatpush2.bf16.msra.mxu0 0
      %744 = vmatprep.mubr.bf16.mxu0 0
      %745 = vmatmul.mubr.bf16.gmra.mxu0 %v557
      %v746 = vpop.f32.mrf.mxu0
      %v747 = vadd.f32 0.0, %v746
      %v748 = vpop.f32.mrf.mxu0
      %v749 = vpop.f32.mrf.mxu0
      %v750 = vadd.f32 0.0, %v749
      %v751 = vpop.f32.mrf.mxu0
      %752 = vmatprep.mubr.bf16.mxu0 0
      %753 = vmatmul.mubr.bf16.gmra.mxu0 %v560
      %v754 = vpop.f32.mrf.mxu0
      %v755 = vadd.f32 0.0, %v754
      %v756 = vpop.f32.mrf.mxu0
      %v757 = vpop.f32.mrf.mxu0
      %v758 = vadd.f32 0.0, %v757
      %v759 = vpop.f32.mrf.mxu0
      %760 = vmatprep.mubr.bf16.mxu0 0
      %761 = vmatmul.mubr.bf16.gmra.mxu0 %v563
      %v762 = vpop.f32.mrf.mxu0
      %v763 = vadd.f32 0.0, %v762
      %v764 = vpop.f32.mrf.mxu0
      %v765 = vpop.f32.mrf.mxu0
      %v766 = vadd.f32 0.0, %v765
      %v767 = vpop.f32.mrf.mxu0
      %768 = vmatprep.mubr.bf16.mxu0 0
      %769 = vmatmul.mubr.bf16.gmra.mxu0 %v566
      %v770 = vpop.f32.mrf.mxu0
      %v771 = vadd.f32 0.0, %v770
      %v772 = vpop.f32.mrf.mxu0
      %v773 = vpop.f32.mrf.mxu0
      %v774 = vadd.f32 0.0, %v773
      %v775 = vpop.f32.mrf.mxu0
      %776 = vmatprep.mubr.bf16.mxu0 0
      %777 = vmatmul.mubr.bf16.gmra.mxu0 %v569
      %v778 = vpop.f32.mrf.mxu0
      %v779 = vadd.f32 0.0, %v778
      %v780 = vpop.f32.mrf.mxu0
      %v781 = vpop.f32.mrf.mxu0
      %v782 = vadd.f32 0.0, %v781
      %v783 = vpop.f32.mrf.mxu0
      %784 = vmatprep.mubr.bf16.mxu0 0
      %785 = vmatmul.mubr.bf16.gmra.mxu0 %v572
      %v786 = vpop.f32.mrf.mxu0
      %v787 = vadd.f32 0.0, %v786
      %v788 = vpop.f32.mrf.mxu0
      %v789 = vpop.f32.mrf.mxu0
      %v790 = vadd.f32 0.0, %v789
      %v791 = vpop.f32.mrf.mxu0
      %792 = vmatprep.mubr.bf16.mxu0 0
      %793 = vmatmul.mubr.bf16.gmra.mxu0 %v575
      %v794 = vpop.f32.mrf.mxu0
      %v795 = vadd.f32 0.0, %v794
      %v796 = vpop.f32.mrf.mxu0
      %v797 = vpop.f32.mrf.mxu0
      %v798 = vadd.f32 0.0, %v797
      %v799 = vpop.f32.mrf.mxu0
      %800 = vmatprep.mubr.bf16.mxu0 0
      %801 = vmatmul.mubr.bf16.gmra.mxu0 %v578
      %v802 = vpop.f32.mrf.mxu0
      %v803 = vadd.f32 0.0, %v802
      %v804 = vpop.f32.mrf.mxu0
      %v805 = vpop.f32.mrf.mxu0
      %v806 = vadd.f32 0.0, %v805
      %v807 = vpop.f32.mrf.mxu0
      %808 = vmatprep.mubr.bf16.mxu0 0
      %809 = vmatmul.mubr.bf16.gmra.mxu0 %v581
      %v810 = vpop.f32.mrf.mxu0
      %v811 = vadd.f32 0.0, %v810
      %v812 = vpop.f32.mrf.mxu0
      %v813 = vpop.f32.mrf.mxu0
      %v814 = vadd.f32 0.0, %v813
      %v815 = vpop.f32.mrf.mxu0
      %816 = vmatprep.mubr.bf16.mxu0 0
      %817 = vmatmul.mubr.bf16.gmra.mxu0 %v584
      %v818 = vpop.f32.mrf.mxu0
      %v819 = vadd.f32 0.0, %v818
      %v820 = vpop.f32.mrf.mxu0
      %v821 = vpop.f32.mrf.mxu0
      %v822 = vadd.f32 0.0, %v821
      %v823 = vpop.f32.mrf.mxu0
      %824 = vmatprep.mubr.bf16.mxu0 0
      %825 = vmatmul.mubr.bf16.gmra.mxu0 %v587
      %v826 = vpop.f32.mrf.mxu0
      %v827 = vadd.f32 0.0, %v826
      %v828 = vpop.f32.mrf.mxu0
      %v829 = vpop.f32.mrf.mxu0
      %v830 = vadd.f32 0.0, %v829
      %v831 = vpop.f32.mrf.mxu0
      %832 = vmatprep.mubr.bf16.mxu0 0
      %833 = vmatmul.mubr.bf16.gmra.mxu0 %v590
      %v834 = vpop.f32.mrf.mxu0
      %v835 = vadd.f32 0.0, %v834
      %v836 = vpop.f32.mrf.mxu0
      %v837 = vpop.f32.mrf.mxu0
      %v838 = vadd.f32 0.0, %v837
      %v839 = vpop.f32.mrf.mxu0
      %840 = vmatprep.mubr.bf16.mxu0 0
      %841 = vmatmul.mubr.bf16.gmra.mxu0 %v593
      %v842 = vpop.f32.mrf.mxu0
      %v843 = vadd.f32 0.0, %v842
      %v844 = vpop.f32.mrf.mxu0
      %v845 = vpop.f32.mrf.mxu0
      %v846 = vadd.f32 0.0, %v845
      %v847 = vpop.f32.mrf.mxu0
      %848 = vmatprep.mubr.bf16.mxu0 0
      %849 = vmatmul.mubr.bf16.gmra.mxu0 %v596
      %v850 = vpop.f32.mrf.mxu0
      %v851 = vadd.f32 0.0, %v850
      %v852 = vpop.f32.mrf.mxu0
      %v853 = vpop.f32.mrf.mxu0
      %v854 = vadd.f32 0.0, %v853
      %v855 = vpop.f32.mrf.mxu0
      %856 = vmatprep.mubr.bf16.mxu0 0
      %857 = vmatmul.mubr.bf16.gmra.mxu0 %v599
      %v858 = vpop.f32.mrf.mxu0
      %v859 = vadd.f32 0.0, %v858
      %v860 = vpop.f32.mrf.mxu0
      %v861 = vpop.f32.mrf.mxu0
      %v862 = vadd.f32 0.0, %v861
      %v863 = vpop.f32.mrf.mxu0
      %864 = vmatprep.mubr.bf16.mxu0 0
      %865 = vmatmul.mubr.bf16.gmra.mxu0 %v602
      %v866 = vpop.f32.mrf.mxu0
      %v867 = vadd.f32 0.0, %v866
      %v868 = vpop.f32.mrf.mxu0
      %v869 = vpop.f32.mrf.mxu0
      %v870 = vadd.f32 0.0, %v869
      %v871 = vpop.f32.mrf.mxu0
      %872 = vmatprep.mubr.bf16.mxu0 0
      %873 = vmatmul.mubr.bf16.gmra.mxu0 %v605
      %v874 = vpop.f32.mrf.mxu0
      %v875 = vadd.f32 0.0, %v874
      %v876 = vpop.f32.mrf.mxu0
      %v877 = vpop.f32.mrf.mxu0
      %v878 = vadd.f32 0.0, %v877
      %v879 = vpop.f32.mrf.mxu0
      %880 = vmatprep.mubr.bf16.mxu0 0
      %881 = vmatmul.mubr.bf16.gmra.mxu0 %v608
      %v882 = vpop.f32.mrf.mxu0
      %v883 = vadd.f32 0.0, %v882
      %v884 = vpop.f32.mrf.mxu0
      %v885 = vpop.f32.mrf.mxu0
      %v886 = vadd.f32 0.0, %v885
      %v887 = vpop.f32.mrf.mxu0
      %888 = vmatprep.mubr.bf16.mxu0 0
      %889 = vmatmul.mubr.bf16.gmra.mxu0 %v611
      %v890 = vpop.f32.mrf.mxu0
      %v891 = vadd.f32 0.0, %v890
      %v892 = vpop.f32.mrf.mxu0
      %v893 = vpop.f32.mrf.mxu0
      %v894 = vadd.f32 0.0, %v893
      %v895 = vpop.f32.mrf.mxu0
      %896 = vmatprep.mubr.bf16.mxu0 0
      %897 = vmatmul.mubr.bf16.gmra.mxu0 %v614
      %v898 = vpop.f32.mrf.mxu0
      %v899 = vadd.f32 0.0, %v898
      %v900 = vpop.f32.mrf.mxu0
      %v901 = vpop.f32.mrf.mxu0
      %v902 = vadd.f32 0.0, %v901
      %v903 = vpop.f32.mrf.mxu0
      %904 = vmatprep.mubr.bf16.mxu0 0
      %905 = vmatmul.mubr.bf16.gmra.mxu0 %v617
      %v906 = vpop.f32.mrf.mxu0
      %v907 = vadd.f32 0.0, %v906
      %v908 = vpop.f32.mrf.mxu0
      %v909 = vpop.f32.mrf.mxu0
      %v910 = vadd.f32 0.0, %v909
      %v911 = vpop.f32.mrf.mxu0
      %912 = vmatprep.mubr.bf16.mxu0 0
      %913 = vmatmul.mubr.bf16.gmra.mxu0 %v620
      %v914 = vpop.f32.mrf.mxu0
      %v915 = vadd.f32 0.0, %v914
      %v916 = vpop.f32.mrf.mxu0
      %v917 = vpop.f32.mrf.mxu0
      %v918 = vadd.f32 0.0, %v917
      %v919 = vpop.f32.mrf.mxu0
      %920 = vmatprep.mubr.bf16.mxu0 0
      %921 = vmatmul.mubr.bf16.gmra.mxu0 %v623
      %v922 = vpop.f32.mrf.mxu0
      %v923 = vadd.f32 0.0, %v922
      %v924 = vpop.f32.mrf.mxu0
      %v925 = vpop.f32.mrf.mxu0
      %v926 = vadd.f32 0.0, %v925
      %v927 = vpop.f32.mrf.mxu0
      %928 = vmatprep.mubr.bf16.mxu0 0
      %929 = vmatmul.mubr.bf16.gmra.mxu0 %v626
      %v930 = vpop.f32.mrf.mxu0
      %v931 = vadd.f32 0.0, %v930
      %v932 = vpop.f32.mrf.mxu0
      %v933 = vpop.f32.mrf.mxu0
      %v934 = vadd.f32 0.0, %v933
      %v935 = vpop.f32.mrf.mxu0
      %936 = vmatprep.mubr.bf16.mxu0 0
      %937 = vmatmul.mubr.bf16.gmra.mxu0 %v629
      %v938 = vpop.f32.mrf.mxu0
      %v939 = vadd.f32 0.0, %v938
      %v940 = vpop.f32.mrf.mxu0
      %v941 = vpop.f32.mrf.mxu0
      %v942 = vadd.f32 0.0, %v941
      %v943 = vpop.f32.mrf.mxu0
      %944 = vmatprep.mubr.bf16.mxu0 0
      %945 = vmatmul.mubr.bf16.gmra.mxu0 %v632
      %v946 = vpop.f32.mrf.mxu0
      %v947 = vadd.f32 0.0, %v946
      %v948 = vpop.f32.mrf.mxu0
      %v949 = vpop.f32.mrf.mxu0
      %v950 = vadd.f32 0.0, %v949
      %v951 = vpop.f32.mrf.mxu0
      %952 = vmatprep.mubr.bf16.mxu0 0
      %953 = vmatmul.mubr.bf16.gmra.mxu0 %v635
      %v954 = vpop.f32.mrf.mxu0
      %v955 = vadd.f32 0.0, %v954
      %v956 = vpop.f32.mrf.mxu0
      %v957 = vpop.f32.mrf.mxu0
      %v958 = vadd.f32 0.0, %v957
      %v959 = vpop.f32.mrf.mxu0
      %960 = vmatprep.mubr.bf16.mxu0 0
      %961 = vmatmul.mubr.bf16.gmra.mxu0 %v638
      %v962 = vpop.f32.mrf.mxu0
      %v963 = vadd.f32 0.0, %v962
      %v964 = vpop.f32.mrf.mxu0
      %v965 = vpop.f32.mrf.mxu0
      %v966 = vadd.f32 0.0, %v965
      %v967 = vpop.f32.mrf.mxu0
      %968 = vmatprep.mubr.bf16.mxu0 0
      %969 = vmatmul.mubr.bf16.gmra.mxu0 %v641
      %v970 = vpop.f32.mrf.mxu0
      %v971 = vadd.f32 0.0, %v970
      %v972 = vpop.f32.mrf.mxu0
      %v973 = vpop.f32.mrf.mxu0
      %v974 = vadd.f32 0.0, %v973
      %v975 = vpop.f32.mrf.mxu0
      %976 = vmatprep.mubr.bf16.mxu0 0
      %977 = vmatmul.mubr.bf16.gmra.mxu0 %v644
      %v978 = vpop.f32.mrf.mxu0
      %v979 = vadd.f32 0.0, %v978
      %v980 = vpop.f32.mrf.mxu0
      %v981 = vpop.f32.mrf.mxu0
      %v982 = vadd.f32 0.0, %v981
      %v983 = vpop.f32.mrf.mxu0
      %984 = vmatprep.mubr.bf16.mxu0 0
      %985 = vmatmul.mubr.bf16.gmra.mxu0 %v647
      %v986 = vpop.f32.mrf.mxu0
      %v987 = vadd.f32 0.0, %v986
      %v988 = vpop.f32.mrf.mxu0
      %v989 = vpop.f32.mrf.mxu0
      %v990 = vadd.f32 0.0, %v989
      %v991 = vpop.f32.mrf.mxu0
      %992 = vmatprep.mubr.bf16.mxu0 0
      %993 = vmatmul.mubr.bf16.gmra.mxu0 %v650
      %v994 = vpop.f32.mrf.mxu0
      %v995 = vadd.f32 0.0, %v994
      %v996 = vpop.f32.mrf.mxu0
      %v997 = vpop.f32.mrf.mxu0
      %v998 = vadd.f32 0.0, %v997
      %v999 = vpop.f32.mrf.mxu0
      %1000 = vmatprep.mubr.bf16.mxu0 0
      %1001 = vmatmul.mubr.bf16.gmra.mxu0 %v653
      %v1002 = vpop.f32.mrf.mxu0
      %v1003 = vadd.f32 0.0, %v1002
      %v1004 = vpop.f32.mrf.mxu0
      %v1005 = vpop.f32.mrf.mxu0
      %v1006 = vadd.f32 0.0, %v1005
      %v1007 = vpop.f32.mrf.mxu0
      %1008 = vmatprep.mubr.bf16.mxu0 0
      %1009 = vmatmul.mubr.bf16.gmra.mxu0 %v656
      %v1010 = vpop.f32.mrf.mxu0
      %v1011 = vadd.f32 0.0, %v1010
      %v1012 = vpop.f32.mrf.mxu0
      %v1013 = vpop.f32.mrf.mxu0
      %v1014 = vadd.f32 0.0, %v1013
      %v1015 = vpop.f32.mrf.mxu0
      %1016 = vmatprep.mubr.bf16.mxu0 0
      %1017 = vmatmul.mubr.bf16.gmra.mxu0 %v659
      %v1018 = vpop.f32.mrf.mxu0
      %v1019 = vadd.f32 0.0, %v1018
      %v1020 = vpop.f32.mrf.mxu0
      %v1021 = vpop.f32.mrf.mxu0
      %v1022 = vadd.f32 0.0, %v1021
      %v1023 = vpop.f32.mrf.mxu0
      %1024 = vmatprep.mubr.bf16.mxu0 0
      %1025 = vmatmul.mubr.bf16.gmra.mxu0 %v662
      %v1026 = vpop.f32.mrf.mxu0
      %v1027 = vadd.f32 0.0, %v1026
      %v1028 = vpop.f32.mrf.mxu0
      %v1029 = vpop.f32.mrf.mxu0
      %v1030 = vadd.f32 0.0, %v1029
      %v1031 = vpop.f32.mrf.mxu0
      %1032 = vmatprep.mubr.bf16.mxu0 0
      %1033 = vmatmul.mubr.bf16.gmra.mxu0 %v665
      %v1034 = vpop.f32.mrf.mxu0
      %v1035 = vadd.f32 0.0, %v1034
      %v1036 = vpop.f32.mrf.mxu0
      %v1037 = vpop.f32.mrf.mxu0
      %v1038 = vadd.f32 0.0, %v1037
      %v1039 = vpop.f32.mrf.mxu0
      %1040 = vmatprep.mubr.bf16.mxu0 0
      %1041 = vmatmul.mubr.bf16.gmra.mxu0 %v668
      %v1042 = vpop.f32.mrf.mxu0
      %v1043 = vadd.f32 0.0, %v1042
      %v1044 = vpop.f32.mrf.mxu0
      %v1045 = vpop.f32.mrf.mxu0
      %v1046 = vadd.f32 0.0, %v1045
      %v1047 = vpop.f32.mrf.mxu0
      %1048 = vmatprep.mubr.bf16.mxu0 0
      %1049 = vmatmul.mubr.bf16.gmra.mxu0 %v671
      %v1050 = vpop.f32.mrf.mxu0
      %v1051 = vadd.f32 0.0, %v1050
      %v1052 = vpop.f32.mrf.mxu0
      %v1053 = vpop.f32.mrf.mxu0
      %v1054 = vadd.f32 0.0, %v1053
      %v1055 = vpop.f32.mrf.mxu0
      %1056 = vmatprep.mubr.bf16.mxu0 0
      %1057 = vmatmul.mubr.bf16.gmra.mxu0 %v674
      %v1058 = vpop.f32.mrf.mxu0
      %v1059 = vadd.f32 0.0, %v1058
      %v1060 = vpop.f32.mrf.mxu0
      %v1061 = vpop.f32.mrf.mxu0
      %v1062 = vadd.f32 0.0, %v1061
      %v1063 = vpop.f32.mrf.mxu0
      %1064 = vmatprep.mubr.bf16.mxu0 0
      %1065 = vmatmul.mubr.bf16.gmra.mxu0 %v677
      %v1066 = vpop.f32.mrf.mxu0
      %v1067 = vadd.f32 0.0, %v1066
      %v1068 = vpop.f32.mrf.mxu0
      %v1069 = vpop.f32.mrf.mxu0
      %v1070 = vadd.f32 0.0, %v1069
      %v1071 = vpop.f32.mrf.mxu0
      %1072 = vmatprep.mubr.bf16.mxu0 0
      %1073 = vmatmul.mubr.bf16.gmra.mxu0 %v680
      %v1074 = vpop.f32.mrf.mxu0
      %v1075 = vadd.f32 0.0, %v1074
      %v1076 = vpop.f32.mrf.mxu0
      %v1077 = vpop.f32.mrf.mxu0
      %v1078 = vadd.f32 0.0, %v1077
      %v1079 = vpop.f32.mrf.mxu0
      %1080 = vmatprep.mubr.bf16.mxu0 0
      %1081 = vmatmul.mubr.bf16.gmra.mxu0 %v683
      %v1082 = vpop.f32.mrf.mxu0
      %v1083 = vadd.f32 0.0, %v1082
      %v1084 = vpop.f32.mrf.mxu0
      %v1085 = vpop.f32.mrf.mxu0
      %v1086 = vadd.f32 0.0, %v1085
      %v1087 = vpop.f32.mrf.mxu0
      %1088 = vmatprep.mubr.bf16.mxu0 0
      %1089 = vmatmul.mubr.bf16.gmra.mxu0 %v686
      %v1090 = vpop.f32.mrf.mxu0
      %v1091 = vadd.f32 0.0, %v1090
      %v1092 = vpop.f32.mrf.mxu0
      %v1093 = vpop.f32.mrf.mxu0
      %v1094 = vadd.f32 0.0, %v1093
      %v1095 = vpop.f32.mrf.mxu0
      %1096 = vmatprep.mubr.bf16.mxu0 0
      %1097 = vmatmul.mubr.bf16.gmra.mxu0 %v689
      %v1098 = vpop.f32.mrf.mxu0
      %v1099 = vadd.f32 0.0, %v1098
      %v1100 = vpop.f32.mrf.mxu0
      %v1101 = vpop.f32.mrf.mxu0
      %v1102 = vadd.f32 0.0, %v1101
      %v1103 = vpop.f32.mrf.mxu0
      %1104 = vmatprep.mubr.bf16.mxu0 0
      %1105 = vmatmul.mubr.bf16.gmra.mxu0 %v692
      %v1106 = vpop.f32.mrf.mxu0
      %v1107 = vadd.f32 0.0, %v1106
      %v1108 = vpop.f32.mrf.mxu0
      %v1109 = vpop.f32.mrf.mxu0
      %v1110 = vadd.f32 0.0, %v1109
      %v1111 = vpop.f32.mrf.mxu0
      %1112 = vmatprep.mubr.bf16.mxu0 0
      %1113 = vmatmul.mubr.bf16.gmra.mxu0 %v695
      %v1114 = vpop.f32.mrf.mxu0
      %v1115 = vadd.f32 0.0, %v1114
      %v1116 = vpop.f32.mrf.mxu0
      %v1117 = vpop.f32.mrf.mxu0
      %v1118 = vadd.f32 0.0, %v1117
      %v1119 = vpop.f32.mrf.mxu0
      %1120 = vmatprep.mubr.bf16.mxu0 0
      %1121 = vmatmul.mubr.bf16.gmra.mxu0 %v698
      %v1122 = vpop.f32.mrf.mxu0
      %v1123 = vadd.f32 0.0, %v1122
      %v1124 = vpop.f32.mrf.mxu0
      %v1125 = vpop.f32.mrf.mxu0
      %v1126 = vadd.f32 0.0, %v1125
      %v1127 = vpop.f32.mrf.mxu0
      %1128 = vmatprep.mubr.bf16.mxu0 0
      %1129 = vmatmul.mubr.bf16.gmra.mxu0 %v701
      %v1130 = vpop.f32.mrf.mxu0
      %v1131 = vadd.f32 0.0, %v1130
      %v1132 = vpop.f32.mrf.mxu0
      %v1133 = vpop.f32.mrf.mxu0
      %v1134 = vadd.f32 0.0, %v1133
      %v1135 = vpop.f32.mrf.mxu0
      %1136 = vmatprep.mubr.bf16.mxu0 0
      %1137 = vmatmul.mubr.bf16.gmra.mxu0 %v704
      %v1138 = vpop.f32.mrf.mxu0
      %v1139 = vadd.f32 0.0, %v1138
      %v1140 = vpop.f32.mrf.mxu0
      %v1141 = vpop.f32.mrf.mxu0
      %v1142 = vadd.f32 0.0, %v1141
      %v1143 = vpop.f32.mrf.mxu0
      %1144 = vmatprep.mubr.bf16.mxu0 0
      %1145 = vmatmul.mubr.bf16.gmra.mxu0 %v707
      %v1146 = vpop.f32.mrf.mxu0
      %v1147 = vadd.f32 0.0, %v1146
      %v1148 = vpop.f32.mrf.mxu0
      %v1149 = vpop.f32.mrf.mxu0
      %v1150 = vadd.f32 0.0, %v1149
      %v1151 = vpop.f32.mrf.mxu0
      %1152 = vmatprep.mubr.bf16.mxu0 0
      %1153 = vmatmul.mubr.bf16.gmra.mxu0 %v710
      %v1154 = vpop.f32.mrf.mxu0
      %v1155 = vadd.f32 0.0, %v1154
      %v1156 = vpop.f32.mrf.mxu0
      %v1157 = vpop.f32.mrf.mxu0
      %v1158 = vadd.f32 0.0, %v1157
      %v1159 = vpop.f32.mrf.mxu0
      %1160 = vdwg.mxu0
      %v1161 = vmax.f32 %v747, %v851
      %v1162 = vmax.f32 %v750, %v854
      %v1163 = vmax.f32 %v755, %v859
      %v1164 = vmax.f32 %v758, %v862
      %v1165 = vmax.f32 %v763, %v867
      %v1166 = vmax.f32 %v766, %v870
      %v1167 = vmax.f32 %v771, %v875
      %v1168 = vmax.f32 %v774, %v878
      %v1169 = vmax.f32 %v779, %v883
      %v1170 = vmax.f32 %v782, %v886
      %v1171 = vmax.f32 %v787, %v891
      %v1172 = vmax.f32 %v790, %v894
      %v1173 = vmax.f32 %v795, %v899
      %v1174 = vmax.f32 %v798, %v902
      %v1175 = vmax.f32 %v803, %v907
      %v1176 = vmax.f32 %v806, %v910
      %v1177 = vmax.f32 %v811, %v915
      %v1178 = vmax.f32 %v814, %v918
      %v1179 = vmax.f32 %v819, %v923
      %v1180 = vmax.f32 %v822, %v926
      %v1181 = vmax.f32 %v827, %v931
      %v1182 = vmax.f32 %v830, %v934
      %v1183 = vmax.f32 %v835, %v939
      %v1184 = vmax.f32 %v838, %v942
      %v1185 = vmax.f32 %v843, %v947
      %v1186 = vmax.f32 %v846, %v950
      %v1187 = vmax.f32 %v955, %v1059
      %v1188 = vmax.f32 %v958, %v1062
      %v1189 = vmax.f32 %v963, %v1067
      %v1190 = vmax.f32 %v966, %v1070
      %v1191 = vmax.f32 %v971, %v1075
      %v1192 = vmax.f32 %v974, %v1078
      %v1193 = vmax.f32 %v979, %v1083
      %v1194 = vmax.f32 %v982, %v1086
      %v1195 = vmax.f32 %v987, %v1091
      %v1196 = vmax.f32 %v990, %v1094
      %v1197 = vmax.f32 %v995, %v1099
      %v1198 = vmax.f32 %v998, %v1102
      %v1199 = vmax.f32 %v1003, %v1107
      %v1200 = vmax.f32 %v1006, %v1110
      %v1201 = vmax.f32 %v1011, %v1115
      %v1202 = vmax.f32 %v1014, %v1118
      %v1203 = vmax.f32 %v1019, %v1123
      %v1204 = vmax.f32 %v1022, %v1126
      %v1205 = vmax.f32 %v1027, %v1131
      %v1206 = vmax.f32 %v1030, %v1134
      %v1207 = vmax.f32 %v1035, %v1139
      %v1208 = vmax.f32 %v1038, %v1142
      %v1209 = vmax.f32 %v1043, %v1147
      %v1210 = vmax.f32 %v1046, %v1150
      %v1211 = vmax.f32 %v1051, %v1155
      %v1212 = vmax.f32 %v1054, %v1158
      %v1213 = vmax.f32 %v1161, %v1187
      %v1214 = vmax.f32 %v1162, %v1188
      %v1215 = vmax.f32 %v1163, %v1189
      %v1216 = vmax.f32 %v1164, %v1190
      %v1217 = vmax.f32 %v1165, %v1191
      %v1218 = vmax.f32 %v1166, %v1192
      %v1219 = vmax.f32 %v1167, %v1193
      %v1220 = vmax.f32 %v1168, %v1194
      %v1221 = vmax.f32 %v1169, %v1195
      %v1222 = vmax.f32 %v1170, %v1196
      %v1223 = vmax.f32 %v1171, %v1197
      %v1224 = vmax.f32 %v1172, %v1198
      %v1225 = vmax.f32 %v1173, %v1199
      %v1226 = vmax.f32 %v1174, %v1200
      %v1227 = vmax.f32 %v1175, %v1201
      %v1228 = vmax.f32 %v1176, %v1202
      %v1229 = vmax.f32 %v1177, %v1203
      %v1230 = vmax.f32 %v1178, %v1204
      %v1231 = vmax.f32 %v1179, %v1205
      %v1232 = vmax.f32 %v1180, %v1206
      %v1233 = vmax.f32 %v1181, %v1207
      %v1234 = vmax.f32 %v1182, %v1208
      %v1235 = vmax.f32 %v1183, %v1209
      %v1236 = vmax.f32 %v1184, %v1210
      %v1237 = vmax.f32 %v1185, %v1211
      %v1238 = vmax.f32 %v1186, %v1212
      %v1239 = vld [vmem:[%s2] sm:$0x1]
      %v1241 = vlaneseq
      %v1242 = vshrl.u32 %v1241, 7
      %v1243 = vsub.s32 0, %v1242
      %v1244 = vrot.slane %v1239, %v1243
      %v1246 = vadd.f32 %v1213, %v1244
      %v1247 = vadd.f32 %v1214, %v1244
      %v1248 = vadd.f32 %v1215, %v1244
      %v1249 = vadd.f32 %v1216, %v1244
      %v1250 = vadd.f32 %v1217, %v1244
      %v1251 = vadd.f32 %v1218, %v1244
      %v1252 = vadd.f32 %v1219, %v1244
      %v1253 = vadd.f32 %v1220, %v1244
      %v1254 = vadd.f32 %v1221, %v1244
      %v1255 = vadd.f32 %v1222, %v1244
      %v1256 = vadd.f32 %v1223, %v1244
      %v1257 = vadd.f32 %v1224, %v1244
      %v1258 = vadd.f32 %v1225, %v1244
      %v1259 = vadd.f32 %v1226, %v1244
      %v1260 = vadd.f32 %v1227, %v1244
      %v1261 = vadd.f32 %v1228, %v1244
      %v1262 = vadd.f32 %v1229, %v1244
      %v1263 = vadd.f32 %v1230, %v1244
      %v1264 = vadd.f32 %v1231, %v1244
      %v1265 = vadd.f32 %v1232, %v1244
      %v1266 = vadd.f32 %v1233, %v1244
      %v1267 = vadd.f32 %v1234, %v1244
      %v1268 = vadd.f32 %v1235, %v1244
      %v1269 = vadd.f32 %v1236, %v1244
      %v1270 = vadd.f32 %v1237, %v1244
      %v1271 = vadd.f32 %v1238, %v1244
      %v1272 = vmax.f32 %v1246, 0.0
      %v1273 = vmax.f32 %v1247, 0.0
      %v1274 = vmax.f32 %v1248, 0.0
      %v1275 = vmax.f32 %v1249, 0.0
      %v1276 = vmax.f32 %v1250, 0.0
      %v1277 = vmax.f32 %v1251, 0.0
      %v1278 = vmax.f32 %v1252, 0.0
      %v1279 = vmax.f32 %v1253, 0.0
      %v1280 = vmax.f32 %v1254, 0.0
      %v1281 = vmax.f32 %v1255, 0.0
      %v1282 = vmax.f32 %v1256, 0.0
      %v1283 = vmax.f32 %v1257, 0.0
      %v1284 = vmax.f32 %v1258, 0.0
      %v1285 = vmax.f32 %v1259, 0.0
      %v1286 = vmax.f32 %v1260, 0.0
      %v1287 = vmax.f32 %v1261, 0.0
      %v1288 = vmax.f32 %v1262, 0.0
      %v1289 = vmax.f32 %v1263, 0.0
      %v1290 = vmax.f32 %v1264, 0.0
      %v1291 = vmax.f32 %v1265, 0.0
      %v1292 = vmax.f32 %v1266, 0.0
      %v1293 = vmax.f32 %v1267, 0.0
      %v1294 = vmax.f32 %v1268, 0.0
      %v1295 = vmax.f32 %v1269, 0.0
      %v1296 = vmax.f32 %v1270, 0.0
      %v1297 = vmax.f32 %v1271, 0.0
      %v1298 = vpack.c.bf16 %v1273, %v1272
      %v1299 = vpack.c.bf16 %v1275, %v1274
      %v1300 = vpack.c.bf16 %v1277, %v1276
      %v1301 = vpack.c.bf16 %v1279, %v1278
      %v1302 = vpack.c.bf16 %v1281, %v1280
      %v1303 = vpack.c.bf16 %v1283, %v1282
      %v1304 = vpack.c.bf16 %v1285, %v1284
      %v1305 = vpack.c.bf16 %v1287, %v1286
      %v1306 = vpack.c.bf16 %v1289, %v1288
      %v1307 = vpack.c.bf16 %v1291, %v1290
      %v1308 = vpack.c.bf16 %v1293, %v1292
      %v1309 = vpack.c.bf16 %v1295, %v1294
      %v1310 = vpack.c.bf16 %v1297, %v1296
      %v1324 = vunpack.c.l.b16 %v1298
      %v1325 = vunpack.c.h.b16 %v1298
      %v1326 = vunpack.c.l.b16 %v1299
      %v1327 = vunpack.c.h.b16 %v1299
      %v1328 = vunpack.c.l.b16 %v1300
      %v1329 = vunpack.c.h.b16 %v1300
      %v1330 = vunpack.c.l.b16 %v1301
      %v1331 = vunpack.c.h.b16 %v1301
      %v1332 = vunpack.c.l.b16 %v1302
      %v1333 = vunpack.c.h.b16 %v1302
      %v1334 = vunpack.c.l.b16 %v1303
      %v1335 = vunpack.c.h.b16 %v1303
      %v1336 = vunpack.c.l.b16 %v1304
      %v1337 = vunpack.c.h.b16 %v1304
      %v1338 = vunpack.c.l.b16 %v1305
      %v1339 = vunpack.c.h.b16 %v1305
      %v1340 = vunpack.c.l.b16 %v1306
      %v1341 = vunpack.c.h.b16 %v1306
      %v1342 = vunpack.c.l.b16 %v1307
      %v1343 = vunpack.c.h.b16 %v1307
      %v1344 = vunpack.c.l.b16 %v1308
      %v1345 = vunpack.c.h.b16 %v1308
      %v1346 = vunpack.c.l.b16 %v1309
      %v1347 = vunpack.c.h.b16 %v1309
      %v1348 = vunpack.c.l.b16 %v1310
      %v1349 = vunpack.c.h.b16 %v1310
      %v1350 = vpack.c.b16 %v1324, %v1324
      %v1351 = vpack.c.b16 %v1325, %v1325
      %v1352 = vpack.c.b16 %v1326, %v1326
      %v1353 = vpack.c.b16 %v1327, %v1327
      %v1354 = vpack.c.b16 %v1328, %v1328
      %v1355 = vpack.c.b16 %v1329, %v1329
      %v1356 = vpack.c.b16 %v1330, %v1330
      %v1357 = vpack.c.b16 %v1331, %v1331
      %v1358 = vpack.c.b16 %v1332, %v1332
      %v1359 = vpack.c.b16 %v1333, %v1333
      %v1360 = vpack.c.b16 %v1334, %v1334
      %v1361 = vpack.c.b16 %v1335, %v1335
      %v1362 = vpack.c.b16 %v1336, %v1336
      %v1363 = vpack.c.b16 %v1337, %v1337
      %v1364 = vpack.c.b16 %v1338, %v1338
      %v1365 = vpack.c.b16 %v1339, %v1339
      %v1366 = vpack.c.b16 %v1340, %v1340
      %v1367 = vpack.c.b16 %v1341, %v1341
      %v1368 = vpack.c.b16 %v1342, %v1342
      %v1369 = vpack.c.b16 %v1343, %v1343
      %v1370 = vpack.c.b16 %v1344, %v1344
      %v1371 = vpack.c.b16 %v1345, %v1345
      %v1372 = vpack.c.b16 %v1346, %v1346
      %v1373 = vpack.c.b16 %v1347, %v1347
      %v1374 = vpack.c.b16 %v1348, %v1348
      %v1375 = vpack.c.b16 %v1349, %v1349
      %1402 = vst [vmem:[%s172] sm:$0xf] %v1350
      %1403 = vst [vmem:[%s172 + $0x4] sm:$0xf] %v1351
      %1404 = vst [vmem:[%s172 + $0x8] sm:$0xf] %v1352
      %1405 = vst [vmem:[%s172 + $0xc] sm:$0xf] %v1353
      %1406 = vst [vmem:[%s172 + $0x10] sm:$0xf] %v1354
      %1407 = vst [vmem:[%s172 + $0x14] sm:$0xf] %v1355
      %1408 = vst [vmem:[%s172 + $0x18] sm:$0xf] %v1356
      %1409 = vst [vmem:[%s172 + $0x1c] sm:$0xf] %v1357
      %1410 = vst [vmem:[%s172 + $0x20] sm:$0xf] %v1358
      %1411 = vst [vmem:[%s172 + $0x24] sm:$0xf] %v1359
      %1412 = vst [vmem:[%s172 + $0x28] sm:$0xf] %v1360
      %1413 = vst [vmem:[%s172 + $0x2c] sm:$0xf] %v1361
      %1414 = vst [vmem:[%s172 + $0x30] sm:$0xf] %v1362
      %1415 = vst [vmem:[%s172 + $0x34] sm:$0xf] %v1363
      %1416 = vst [vmem:[%s172 + $0x38] sm:$0xf] %v1364
      %1417 = vst [vmem:[%s172 + $0x3c] sm:$0xf] %v1365
      %1418 = vst [vmem:[%s172 + $0x40] sm:$0xf] %v1366
      %1419 = vst [vmem:[%s172 + $0x44] sm:$0xf] %v1367
      %1420 = vst [vmem:[%s172 + $0x48] sm:$0xf] %v1368
      %1421 = vst [vmem:[%s172 + $0x4c] sm:$0xf] %v1369
      %1422 = vst [vmem:[%s172 + $0x50] sm:$0xf] %v1370
      %1423 = vst [vmem:[%s172 + $0x54] sm:$0xf] %v1371
      %1424 = vst [vmem:[%s172 + $0x58] sm:$0xf] %v1372
      %1425 = vst [vmem:[%s172 + $0x5c] sm:$0xf] %v1373
      %1426 = vst [vmem:[%s172 + $0x60] sm:$0xf] %v1374
      %1427 = vst [vmem:[%s172 + $0x64] sm:$0xf] %v1375
      %s1428 = smul.u32 26, %s14
      %p1429 = scmp.lt.s32.totalorder %s1428, 51
      %s1430 = scalar_select %p1429, %s1428, 51
      %s1431 = smul.addr %s1430, 4
      %s1432 = scalar_lea.vmem %s3, %s1431
      // Predicated region
      $region33: #{lenet5_tr_forward.3} parent=31 // pred_check
        %p1433 = pneg %p100
      $region34: #{lenet5_tr_forward.3} parent=31 // pred_check_branch
        %1435 = sbr.rel (%p1433) target = $region36
      $region35: #{lenet5_tr_forward.3} parent=31 // pred_region
        %s1436 = smul.u32 26, %s14
      $region36: #{lenet5_tr_forward.3} parent=31 // pred_fallthru
        _
    $region32: #{lenet5_tr_forward.3} parent=5 // pred_fallthru
      _
    %p1437 = scmp.le.s32.totalorder 2, %s9
    // Predicated region
    $region37: #{lenet5_tr_forward.3} parent=5 // pred_check
      %p1438 = pneg %p1437
    $region38: #{lenet5_tr_forward.3} parent=5 // pred_check_branch
      %1440 = sbr.rel (%p1438) target = $region40
    $region39: #{lenet5_tr_forward.3} parent=5 // pred_region
      %s1441 = ssub.s32 %s9, 2
      // Predicated region
      $region41: #{lenet5_tr_forward.3} parent=39 // pred_check
        %p1442 = pneg %p106
      $region42: #{lenet5_tr_forward.3} parent=39 // pred_check_branch
        %1444 = sbr.rel (%p1442) target = $region44
      $region43: #{lenet5_tr_forward.3} parent=39 // pred_region
        %s1445 = smul.u32 26, %s15
        %p1446 = scmp.lt.s32.totalorder %s1445, 51
        %s1447 = scalar_select %p1446, %s1445, 51
        %s1448 = smul.addr %s1447, 4
        %s1449 = scalar_lea.vmem %s3, %s1448
      $region44: #{lenet5_tr_forward.3} parent=39 // pred_fallthru
        _
    $region40: #{lenet5_tr_forward.3} parent=5 // pred_fallthru
      _
  $region6: #{lenet5_tr_forward.3} parent=0 // loop_footer
    %s13 = sadd.s32 1, %s9
  $region7: #{lenet5_tr_forward.3} parent=0 // loop_footer_branch
    %8 = sbr.rel target = $region3
  $region8: #{lenet5_tr_forward.3} parent=0 // loop_exit
    _

// kernel: lenet5_tr_forward.4
$region0: #{lenet5_tr_forward.4}
  #allocation0 [shape = 'u32[]', space=smem, size = 0x4, offset = 0x4, fixed_abs, tag = 'smem constant byte address 0x4 - core index']
  #allocation1 [shape = 'u32[144,128]{1,0:T(1,128)}', space=vmem, size = 0x12000, scoped, tag = 'internal scratch']
  %s0 = inlined_call_operand.vmem [shape: bf16[256,512], index: 0, kind: input, shape index: {}]
  %s1 = inlined_call_operand.vmem [shape: bf16[512,128], index: 1, kind: input, shape index: {}]
  %s2 = inlined_call_operand.vmem [shape: f32[1,128], index: 2, kind: input, shape index: {}]
  %s3 = inlined_call_operand.vmem [shape: bf16[64,128], index: 3, kind: output, shape index: {}]
  %s4 = sld [smem:[#allocation0]]
  $region45: #{lenet5_tr_forward.4} parent=0
    _
  %s6 = ssub.s32 1, %s4
  %s7 = scalar_select 0, %s6, %s4
  loop: start=0, step=1, limit=4
  $region2: #{lenet5_tr_forward.4} parent=0 // loop_pre_header
    _
  $region3: #{lenet5_tr_forward.4} parent=0 // loop_header
    %s9 = sphi 0, %s13
    %p10 = scmp.ge.s32.totalorder %s9, 4
    %s19 = sphi 0, %s21
    %s22 = sphi 0, %s19
    %s23 = sphi 0, %s22
    %s39 = sphi 0, %s23
    %s43 = sphi 0, %s43
    %s45 = sphi 0, %s43
    %s46 = sphi 0, %s45
    %s60 = sphi 0, %s46
    %s64 = sphi 0, %s64
    %s66 = sphi 0, %s64
    %s67 = sphi 0, %s66
    %s81 = sphi 0, %s67
    %s87 = sphi 0, %s89
    %s90 = sphi 0, %s87
    %s91 = sphi 0, %s90
    %s107 = sphi 0, %s91
  $region4: #{lenet5_tr_forward.4} parent=0 // loop_header_branch
    %12 = sbr.rel (%p10) target = $region8
  $region5: #{lenet5_tr_forward.4} parent=0 // loop_body
    %s14 = ssub.s32 %s9, 1
    %s15 = ssub.s32 %s9, 2
    %s16 = sadd.s32 %s9, 1
    %s17 = ssub.s32 %s9, %s16
    %p18 = scmp.eq.s32.totalorder %s17, 0
    %s20 = sadd.s32 %s19, 1
    %s21 = scalar_select %p18, %s19, %s20
    %p24 = pneg %p18
    %p25 = scmp.eq.s32.totalorder %s9, 1
    %p26 = por %p24, %p25
    %p27 = scmp.ne.s32.totalorder %s19, %s22
    %p28 = scmp.eq.s32.totalorder %s9, 0
    %p29 = por %p27, %p28
    %p30 = scmp.ne.s32.totalorder %s19, %s22
    %p31 = scmp.eq.s32.totalorder %s14, 1
    %p32 = por %p30, %p31
    %p33 = scmp.ne.s32.totalorder %s22, %s23
    %p34 = scmp.eq.s32.totalorder %s14, 0
    %p35 = por %p33, %p34
    %p36 = scmp.ne.s32.totalorder %s22, %s23
    %p37 = scmp.eq.s32.totalorder %s15, 1
    %p38 = por %p36, %p37
    %p40 = scmp.ne.s32.totalorder %s23, %s39
    %p41 = scmp.eq.s32.totalorder %s15, 0
    %p42 = por %p40, %p41
    %s44 = sadd.s32 %s43, 1
    %p47 = scmp.eq.s32.totalorder %s9, 1
    %p48 = scmp.ne.s32.totalorder %s43, %s45
    %p49 = scmp.eq.s32.totalorder %s9, 0
    %p50 = por %p48, %p49
    %p51 = scmp.ne.s32.totalorder %s43, %s45
    %p52 = scmp.eq.s32.totalorder %s14, 1
    %p53 = por %p51, %p52
    %p54 = scmp.ne.s32.totalorder %s45, %s46
    %p55 = scmp.eq.s32.totalorder %s14, 0
    %p56 = por %p54, %p55
    %p57 = scmp.ne.s32.totalorder %s45, %s46
    %p58 = scmp.eq.s32.totalorder %s15, 1
    %p59 = por %p57, %p58
    %p61 = scmp.ne.s32.totalorder %s46, %s60
    %p62 = scmp.eq.s32.totalorder %s15, 0
    %p63 = por %p61, %p62
    %s65 = sadd.s32 %s64, 1
    %p68 = scmp.eq.s32.totalorder %s9, 1
    %p69 = scmp.ne.s32.totalorder %s64, %s66
    %p70 = scmp.eq.s32.totalorder %s9, 0
    %p71 = por %p69, %p70
    %p72 = scmp.ne.s32.totalorder %s64, %s66
    %p73 = scmp.eq.s32.totalorder %s14, 1
    %p74 = por %p72, %p73
    %p75 = scmp.ne.s32.totalorder %s66, %s67
    %p76 = scmp.eq.s32.totalorder %s14, 0
    %p77 = por %p75, %p76
    %p78 = scmp.ne.s32.totalorder %s66, %s67
    %p79 = scmp.eq.s32.totalorder %s15, 1
    %p80 = por %p78, %p79
    %p82 = scmp.ne.s32.totalorder %s67, %s81
    %p83 = scmp.eq.s32.totalorder %s15, 0
    %p84 = por %p82, %p83
    %s85 = ssub.s32 %s9, %s16
    %p86 = scmp.eq.s32.totalorder %s85, 0
    %s88 = sadd.s32 %s87, 1
    %s89 = scalar_select %p86, %s87, %s88
    %p92 = pneg %p86
    %p93 = scmp.eq.s32.totalorder %s9, 1
    %p94 = por %p92, %p93
    %p95 = scmp.ne.s32.totalorder %s87, %s90
    %p96 = scmp.eq.s32.totalorder %s9, 0
    %p97 = por %p95, %p96
    %p98 = scmp.ne.s32.totalorder %s87, %s90
    %p99 = scmp.eq.s32.totalorder %s14, 1
    %p100 = por %p98, %p99
    %p101 = scmp.ne.s32.totalorder %s90, %s91
    %p102 = scmp.eq.s32.totalorder %s14, 0
    %p103 = por %p101, %p102
    %p104 = scmp.ne.s32.totalorder %s90, %s91
    %p105 = scmp.eq.s32.totalorder %s15, 1
    %p106 = por %p104, %p105
    %p108 = scmp.ne.s32.totalorder %s91, %s107
    %p109 = scmp.eq.s32.totalorder %s15, 0
    %p110 = por %p108, %p109
    %p111 = scmp.le.s32.totalorder 1, %s9
    %p112 = scmp.lt.s32.totalorder %s9, 3
    %p113 = pnand %p111, %p112
    %p114 = pneg %p113
    // Predicated region
    $region9: #{lenet5_tr_forward.4} parent=5 // pred_check
      _
    $region10: #{lenet5_tr_forward.4} parent=5 // pred_check_branch
      %116 = sbr.rel (%p113) target = $region12
    $region11: #{lenet5_tr_forward.4} parent=5 // pred_region
      %s117 = ssub.s32 %s9, 1
      // Predicated region
      $region13: #{lenet5_tr_forward.4} parent=11 // pred_check
        %p118 = pneg %p56
      $region14: #{lenet5_tr_forward.4} parent=11 // pred_check_branch
        %120 = sbr.rel (%p118) target = $region16
      $region15: #{lenet5_tr_forward.4} parent=11 // pred_region
        _
      $region16: #{lenet5_tr_forward.4} parent=11 // pred_fallthru
        _
      // Predicated region
      $region17: #{lenet5_tr_forward.4} parent=11 // pred_check
        %p121 = pneg %p77
      $region18: #{lenet5_tr_forward.4} parent=11 // pred_check_branch
        %123 = sbr.rel (%p121) target = $region20
      $region19: #{lenet5_tr_forward.4} parent=11 // pred_region
        _
      $region20: #{lenet5_tr_forward.4} parent=11 // pred_fallthru
        _
    $region12: #{lenet5_tr_forward.4} parent=5 // pred_fallthru
      _
    %p124 = scmp.lt.s32.totalorder %s9, 2
    // Predicated region
    $region21: #{lenet5_tr_forward.4} parent=5 // pred_check
      %p125 = pneg %p124
    $region22: #{lenet5_tr_forward.4} parent=5 // pred_check_branch
      %127 = sbr.rel (%p125) target = $region24
    $region23: #{lenet5_tr_forward.4} parent=5 // pred_region
      // Predicated region
      $region25: #{lenet5_tr_forward.4} parent=23 // pred_check
        %p128 = pneg %p29
      $region26: #{lenet5_tr_forward.4} parent=23 // pred_check_branch
        %130 = sbr.rel (%p128) target = $region28
      $region27: #{lenet5_tr_forward.4} parent=23 // pred_region
        %s131 = smul.u32 16, %s9
        %p132 = scmp.lt.s32.totalorder %s131, 31
        %s133 = scalar_select %p132, %s131, 31
        %s134 = smul.addr %s133, 4
        %s135 = smul.addr %s134, 4
        %s136 = scalar_lea.vmem %s0, %s135
        %s137 = smul.u32 16, %s9
      $region28: #{lenet5_tr_forward.4} parent=23 // pred_fallthru
        _
    $region24: #{lenet5_tr_forward.4} parent=5 // pred_fallthru
      _
    %p138 = scmp.le.s32.totalorder 1, %s9
    %p139 = scmp.lt.s32.totalorder %s9, 3
    %p140 = pnand %p138, %p139
    %p141 = pneg %p140
    // Predicated region
    $region29: #{lenet5_tr_forward.4} parent=5 // pred_check
      _
    $region30: #{lenet5_tr_forward.4} parent=5 // pred_check_branch
      %143 = sbr.rel (%p140) target = $region32
    $region31: #{lenet5_tr_forward.4} parent=5 // pred_region
      %s144 = ssub.s32 %s9, 1
      %s145 = smul.u32 16, %s14
      %p146 = scmp.lt.s32.totalorder %s145, 31
      %s147 = scalar_select %p146, %s145, 31
      %s148 = smul.addr %s147, 4
      %s149 = smul.addr %s148, 4
      %s150 = scalar_lea.vmem %s0, %s149
      %p151 = pneg %p35
      %p152 = pneg %p32
      %p153 = pneg %p56
      %p154 = pneg %p53
      %p155 = pneg %p77
      %p156 = pneg %p74
      %p157 = pneg %p103
      %p158 = pneg %p100
      %s159 = smul.u32 4, %s14
      %p160 = scmp.lt.s32.totalorder %s159, 7
      %s161 = scalar_select %p160, %s159, 7
      %s162 = smul.addr %s161, 4
      %s163 = scalar_lea.vmem %s3, %s162
      %s164 = smul.u32 16, %s14
      %p165 = scmp.lt.s32.totalorder %s164, 31
      %s166 = scalar_select %p165, %s164, 31
      %s167 = smul.addr %s166, 4
      %s168 = smul.addr %s167, 4
      %s169 = scalar_lea.vmem %s0, %s168
      %s170 = smul.u32 16, %s14
      %s171 = smul.u32 4, %s14
      %p172 = scmp.lt.s32.totalorder %s171, 7
      %s173 = scalar_select %p172, %s171, 7
      %s174 = smul.addr %s173, 4
      %s175 = scalar_lea.vmem %s3, %s174
      %s176 = smul.u32 4, %s14
      %v178 = vld [vmem:[%s169] sm:$0xff]
      %v179 = vld [vmem:[%s169 + $0x8] sm:$0xff]
      %v180 = vld [vmem:[%s169 + $0x10] sm:$0xff]
      %v181 = vld [vmem:[%s169 + $0x18] sm:$0xff]
      %v182 = vld [vmem:[%s169 + $0x20] sm:$0xff]
      %v183 = vld [vmem:[%s169 + $0x28] sm:$0xff]
      %v184 = vld [vmem:[%s169 + $0x30] sm:$0xff]
      %v185 = vld [vmem:[%s169 + $0x38] sm:$0xff]
      %v186 = vld [vmem:[%s169 + $0x40] sm:$0xff]
      %v187 = vld [vmem:[%s169 + $0x48] sm:$0xff]
      %v188 = vld [vmem:[%s169 + $0x50] sm:$0xff]
      %v189 = vld [vmem:[%s169 + $0x58] sm:$0xff]
      %v190 = vld [vmem:[%s169 + $0x60] sm:$0xff]
      %v191 = vld [vmem:[%s169 + $0x68] sm:$0xff]
      %v192 = vld [vmem:[%s169 + $0x70] sm:$0xff]
      %v193 = vld [vmem:[%s169 + $0x78] sm:$0xff]
      %v194 = vld [vmem:[%s169 + $0x80] sm:$0xff]
      %v195 = vld [vmem:[%s169 + $0x88] sm:$0xff]
      %v196 = vld [vmem:[%s169 + $0x90] sm:$0xff]
      %v197 = vld [vmem:[%s169 + $0x98] sm:$0xff]
      %v198 = vld [vmem:[%s169 + $0xa0] sm:$0xff]
      %v199 = vld [vmem:[%s169 + $0xa8] sm:$0xff]
      %v200 = vld [vmem:[%s169 + $0xb0] sm:$0xff]
      %v201 = vld [vmem:[%s169 + $0xb8] sm:$0xff]
      %v202 = vld [vmem:[%s169 + $0xc0] sm:$0xff]
      %v203 = vld [vmem:[%s169 + $0xc8] sm:$0xff]
      %v204 = vld [vmem:[%s169 + $0xd0] sm:$0xff]
      %v205 = vld [vmem:[%s169 + $0xd8] sm:$0xff]
      %v206 = vld [vmem:[%s169 + $0xe0] sm:$0xff]
      %v207 = vld [vmem:[%s169 + $0xe8] sm:$0xff]
      %v208 = vld [vmem:[%s169 + $0xf0] sm:$0xff]
      %v209 = vld [vmem:[%s169 + $0xf8] sm:$0xff]
      %v210 = vld [vmem:[%s1] sm:$0xf]
      %v211 = vld [vmem:[%s1 + $0x4] sm:$0xf]
      %v212 = vld [vmem:[%s1 + $0x8] sm:$0xf]
      %v213 = vld [vmem:[%s1 + $0xc] sm:$0xf]
      %v214 = vld [vmem:[%s1 + $0x10] sm:$0xf]
      %v215 = vld [vmem:[%s1 + $0x14] sm:$0xf]
      %v216 = vld [vmem:[%s1 + $0x18] sm:$0xf]
      %v217 = vld [vmem:[%s1 + $0x1c] sm:$0xf]
      %v218 = vld [vmem:[%s1 + $0x20] sm:$0xf]
      %v219 = vld [vmem:[%s1 + $0x24] sm:$0xf]
      %v220 = vld [vmem:[%s1 + $0x28] sm:$0xf]
      %v221 = vld [vmem:[%s1 + $0x2c] sm:$0xf]
      %v222 = vld [vmem:[%s1 + $0x30] sm:$0xf]
      %v223 = vld [vmem:[%s1 + $0x34] sm:$0xf]
      %v224 = vld [vmem:[%s1 + $0x38] sm:$0xf]
      %v225 = vld [vmem:[%s1 + $0x3c] sm:$0xf]
      %v226 = vld [vmem:[%s1 + $0x40] sm:$0xf]
      %v227 = vld [vmem:[%s1 + $0x44] sm:$0xf]
      %v228 = vld [vmem:[%s1 + $0x48] sm:$0xf]
      %v229 = vld [vmem:[%s1 + $0x4c] sm:$0xf]
      %v230 = vld [vmem:[%s1 + $0x50] sm:$0xf]
      %v231 = vld [vmem:[%s1 + $0x54] sm:$0xf]
      %v232 = vld [vmem:[%s1 + $0x58] sm:$0xf]
      %v233 = vld [vmem:[%s1 + $0x5c] sm:$0xf]
      %v234 = vld [vmem:[%s1 + $0x60] sm:$0xf]
      %v235 = vld [vmem:[%s1 + $0x64] sm:$0xf]
      %v236 = vld [vmem:[%s1 + $0x68] sm:$0xf]
      %v237 = vld [vmem:[%s1 + $0x6c] sm:$0xf]
      %v238 = vld [vmem:[%s1 + $0x70] sm:$0xf]
      %v239 = vld [vmem:[%s1 + $0x74] sm:$0xf]
      %v240 = vld [vmem:[%s1 + $0x78] sm:$0xf]
      %v241 = vld [vmem:[%s1 + $0x7c] sm:$0xf]
      %v242 = vld [vmem:[%s1 + $0x80] sm:$0xf]
      %v243 = vld [vmem:[%s1 + $0x84] sm:$0xf]
      %v244 = vld [vmem:[%s1 + $0x88] sm:$0xf]
      %v245 = vld [vmem:[%s1 + $0x8c] sm:$0xf]
      %v246 = vld [vmem:[%s1 + $0x90] sm:$0xf]
      %v247 = vld [vmem:[%s1 + $0x94] sm:$0xf]
      %v248 = vld [vmem:[%s1 + $0x98] sm:$0xf]
      %v249 = vld [vmem:[%s1 + $0x9c] sm:$0xf]
      %v250 = vld [vmem:[%s1 + $0xa0] sm:$0xf]
      %v251 = vld [vmem:[%s1 + $0xa4] sm:$0xf]
      %v252 = vld [vmem:[%s1 + $0xa8] sm:$0xf]
      %v253 = vld [vmem:[%s1 + $0xac] sm:$0xf]
      %v254 = vld [vmem:[%s1 + $0xb0] sm:$0xf]
      %v255 = vld [vmem:[%s1 + $0xb4] sm:$0xf]
      %v256 = vld [vmem:[%s1 + $0xb8] sm:$0xf]
      %v257 = vld [vmem:[%s1 + $0xbc] sm:$0xf]
      %v258 = vld [vmem:[%s1 + $0xc0] sm:$0xf]
      %v259 = vld [vmem:[%s1 + $0xc4] sm:$0xf]
      %v260 = vld [vmem:[%s1 + $0xc8] sm:$0xf]
      %v261 = vld [vmem:[%s1 + $0xcc] sm:$0xf]
      %v262 = vld [vmem:[%s1 + $0xd0] sm:$0xf]
      %v263 = vld [vmem:[%s1 + $0xd4] sm:$0xf]
      %v264 = vld [vmem:[%s1 + $0xd8] sm:$0xf]
      %v265 = vld [vmem:[%s1 + $0xdc] sm:$0xf]
      %v266 = vld [vmem:[%s1 + $0xe0] sm:$0xf]
      %v267 = vld [vmem:[%s1 + $0xe4] sm:$0xf]
      %v268 = vld [vmem:[%s1 + $0xe8] sm:$0xf]
      %v269 = vld [vmem:[%s1 + $0xec] sm:$0xf]
      %v270 = vld [vmem:[%s1 + $0xf0] sm:$0xf]
      %v271 = vld [vmem:[%s1 + $0xf4] sm:$0xf]
      %v272 = vld [vmem:[%s1 + $0xf8] sm:$0xf]
      %v273 = vld [vmem:[%s1 + $0xfc] sm:$0xf]
      %v306 = vunpack.c.l.b16 %v178
      %v307 = vunpack.c.h.b16 %v178
      %v308 = vunpack.c.l.b16 %v179
      %v309 = vunpack.c.h.b16 %v179
      %v310 = vunpack.c.l.b16 %v180
      %v311 = vunpack.c.h.b16 %v180
      %v312 = vunpack.c.l.b16 %v181
      %v313 = vunpack.c.h.b16 %v181
      %v314 = vunpack.c.l.b16 %v182
      %v315 = vunpack.c.h.b16 %v182
      %v316 = vunpack.c.l.b16 %v183
      %v317 = vunpack.c.h.b16 %v183
      %v318 = vunpack.c.l.b16 %v184
      %v319 = vunpack.c.h.b16 %v184
      %v320 = vunpack.c.l.b16 %v185
      %v321 = vunpack.c.h.b16 %v185
      %v322 = vunpack.c.l.b16 %v186
      %v323 = vunpack.c.h.b16 %v186
      %v324 = vunpack.c.l.b16 %v187
      %v325 = vunpack.c.h.b16 %v187
      %v326 = vunpack.c.l.b16 %v188
      %v327 = vunpack.c.h.b16 %v188
      %v328 = vunpack.c.l.b16 %v189
      %v329 = vunpack.c.h.b16 %v189
      %v330 = vunpack.c.l.b16 %v190
      %v331 = vunpack.c.h.b16 %v190
      %v332 = vunpack.c.l.b16 %v191
      %v333 = vunpack.c.h.b16 %v191
      %v334 = vunpack.c.l.b16 %v192
      %v335 = vunpack.c.h.b16 %v192
      %v336 = vunpack.c.l.b16 %v193
      %v337 = vunpack.c.h.b16 %v193
      %v338 = vunpack.c.l.b16 %v194
      %v339 = vunpack.c.h.b16 %v194
      %v340 = vunpack.c.l.b16 %v195
      %v341 = vunpack.c.h.b16 %v195
      %v342 = vunpack.c.l.b16 %v196
      %v343 = vunpack.c.h.b16 %v196
      %v344 = vunpack.c.l.b16 %v197
      %v345 = vunpack.c.h.b16 %v197
      %v346 = vunpack.c.l.b16 %v198
      %v347 = vunpack.c.h.b16 %v198
      %v348 = vunpack.c.l.b16 %v199
      %v349 = vunpack.c.h.b16 %v199
      %v350 = vunpack.c.l.b16 %v200
      %v351 = vunpack.c.h.b16 %v200
      %v352 = vunpack.c.l.b16 %v201
      %v353 = vunpack.c.h.b16 %v201
      %v354 = vunpack.c.l.b16 %v202
      %v355 = vunpack.c.h.b16 %v202
      %v356 = vunpack.c.l.b16 %v203
      %v357 = vunpack.c.h.b16 %v203
      %v358 = vunpack.c.l.b16 %v204
      %v359 = vunpack.c.h.b16 %v204
      %v360 = vunpack.c.l.b16 %v205
      %v361 = vunpack.c.h.b16 %v205
      %v362 = vunpack.c.l.b16 %v206
      %v363 = vunpack.c.h.b16 %v206
      %v364 = vunpack.c.l.b16 %v207
      %v365 = vunpack.c.h.b16 %v207
      %v366 = vunpack.c.l.b16 %v208
      %v367 = vunpack.c.h.b16 %v208
      %v368 = vunpack.c.l.b16 %v209
      %v369 = vunpack.c.h.b16 %v209
      %v370 = vpack.c.b16 %v310, %v306
      %v371 = vpack.c.b16 %v311, %v307
      %v372 = vpack.c.b16 %v312, %v308
      %v373 = vpack.c.b16 %v313, %v309
      %v374 = vpack.c.b16 %v318, %v314
      %v375 = vpack.c.b16 %v319, %v315
      %v376 = vpack.c.b16 %v320, %v316
      %v377 = vpack.c.b16 %v321, %v317
      %v378 = vpack.c.b16 %v326, %v322
      %v379 = vpack.c.b16 %v327, %v323
      %v380 = vpack.c.b16 %v328, %v324
      %v381 = vpack.c.b16 %v329, %v325
      %v382 = vpack.c.b16 %v334, %v330
      %v383 = vpack.c.b16 %v335, %v331
      %v384 = vpack.c.b16 %v336, %v332
      %v385 = vpack.c.b16 %v337, %v333
      %v386 = vpack.c.b16 %v342, %v338
      %v387 = vpack.c.b16 %v343, %v339
      %v388 = vpack.c.b16 %v344, %v340
      %v389 = vpack.c.b16 %v345, %v341
      %v390 = vpack.c.b16 %v350, %v346
      %v391 = vpack.c.b16 %v351, %v347
      %v392 = vpack.c.b16 %v352, %v348
      %v393 = vpack.c.b16 %v353, %v349
      %v394 = vpack.c.b16 %v358, %v354
      %v395 = vpack.c.b16 %v359, %v355
      %v396 = vpack.c.b16 %v360, %v356
      %v397 = vpack.c.b16 %v361, %v357
      %v398 = vpack.c.b16 %v366, %v362
      %v399 = vpack.c.b16 %v367, %v363
      %v400 = vpack.c.b16 %v368, %v364
      %v401 = vpack.c.b16 %v369, %v365
      %v498 = vunpack.c.l.b16 %v210
      %v499 = vunpack.c.l.b16 %v211
      %v500 = vunpack.c.l.b16 %v212
      %v501 = vunpack.c.l.b16 %v213
      %v502 = vunpack.c.l.b16 %v214
      %v503 = vunpack.c.l.b16 %v215
      %v504 = vunpack.c.l.b16 %v216
      %v505 = vunpack.c.l.b16 %v217
      %v506 = vunpack.c.l.b16 %v218
      %v507 = vunpack.c.l.b16 %v219
      %v508 = vunpack.c.l.b16 %v220
      %v509 = vunpack.c.l.b16 %v221
      %v510 = vunpack.c.l.b16 %v222
      %v511 = vunpack.c.l.b16 %v223
      %v512 = vunpack.c.l.b16 %v224
      %v513 = vunpack.c.l.b16 %v225
      %v514 = vunpack.c.l.b16 %v226
      %v515 = vunpack.c.l.b16 %v227
      %v516 = vunpack.c.l.b16 %v228
      %v517 = vunpack.c.l.b16 %v229
      %v518 = vunpack.c.l.b16 %v230
      %v519 = vunpack.c.l.b16 %v231
      %v520 = vunpack.c.l.b16 %v232
      %v521 = vunpack.c.l.b16 %v233
      %v522 = vunpack.c.l.b16 %v234
      %v523 = vunpack.c.l.b16 %v235
      %v524 = vunpack.c.l.b16 %v236
      %v525 = vunpack.c.l.b16 %v237
      %v526 = vunpack.c.l.b16 %v238
      %v527 = vunpack.c.l.b16 %v239
      %v528 = vunpack.c.l.b16 %v240
      %v529 = vunpack.c.l.b16 %v241
      %v530 = vunpack.c.l.b16 %v242
      %v531 = vunpack.c.l.b16 %v243
      %v532 = vunpack.c.l.b16 %v244
      %v533 = vunpack.c.l.b16 %v245
      %v534 = vunpack.c.l.b16 %v246
      %v535 = vunpack.c.l.b16 %v247
      %v536 = vunpack.c.l.b16 %v248
      %v537 = vunpack.c.l.b16 %v249
      %v538 = vunpack.c.l.b16 %v250
      %v539 = vunpack.c.l.b16 %v251
      %v540 = vunpack.c.l.b16 %v252
      %v541 = vunpack.c.l.b16 %v253
      %v542 = vunpack.c.l.b16 %v254
      %v543 = vunpack.c.l.b16 %v255
      %v544 = vunpack.c.l.b16 %v256
      %v545 = vunpack.c.l.b16 %v257
      %v546 = vunpack.c.l.b16 %v258
      %v547 = vunpack.c.l.b16 %v259
      %v548 = vunpack.c.l.b16 %v260
      %v549 = vunpack.c.l.b16 %v261
      %v550 = vunpack.c.l.b16 %v262
      %v551 = vunpack.c.l.b16 %v263
      %v552 = vunpack.c.l.b16 %v264
      %v553 = vunpack.c.l.b16 %v265
      %v554 = vunpack.c.l.b16 %v266
      %v555 = vunpack.c.l.b16 %v267
      %v556 = vunpack.c.l.b16 %v268
      %v557 = vunpack.c.l.b16 %v269
      %v558 = vunpack.c.l.b16 %v270
      %v559 = vunpack.c.l.b16 %v271
      %v560 = vunpack.c.l.b16 %v272
      %v561 = vunpack.c.l.b16 %v273
      %v562 = vpack.c.b16 %v499, %v498
      %v563 = vpack.c.b16 %v501, %v500
      %v564 = vpack.c.b16 %v503, %v502
      %v565 = vpack.c.b16 %v505, %v504
      %v566 = vpack.c.b16 %v507, %v506
      %v567 = vpack.c.b16 %v509, %v508
      %v568 = vpack.c.b16 %v511, %v510
      %v569 = vpack.c.b16 %v513, %v512
      %v570 = vpack.c.b16 %v515, %v514
      %v571 = vpack.c.b16 %v517, %v516
      %v572 = vpack.c.b16 %v519, %v518
      %v573 = vpack.c.b16 %v521, %v520
      %v574 = vpack.c.b16 %v523, %v522
      %v575 = vpack.c.b16 %v525, %v524
      %v576 = vpack.c.b16 %v527, %v526
      %v577 = vpack.c.b16 %v529, %v528
      %v578 = vpack.c.b16 %v531, %v530
      %v579 = vpack.c.b16 %v533, %v532
      %v580 = vpack.c.b16 %v535, %v534
      %v581 = vpack.c.b16 %v537, %v536
      %v582 = vpack.c.b16 %v539, %v538
      %v583 = vpack.c.b16 %v541, %v540
      %v584 = vpack.c.b16 %v543, %v542
      %v585 = vpack.c.b16 %v545, %v544
      %v586 = vpack.c.b16 %v547, %v546
      %v587 = vpack.c.b16 %v549, %v548
      %v588 = vpack.c.b16 %v551, %v550
      %v589 = vpack.c.b16 %v553, %v552
      %v590 = vpack.c.b16 %v555, %v554
      %v591 = vpack.c.b16 %v557, %v556
      %v592 = vpack.c.b16 %v559, %v558
      %v593 = vpack.c.b16 %v561, %v560
      %626 = vmatprep.subr.bf16.mxu0 0
      %627 = vmatpush1.bf16.msra.mxu0 %v569
      %628 = vmatprep.subr.bf16.mxu0 0
      %629 = vmatpush1.bf16.msra.mxu0 %v568
      %630 = vmatprep.subr.bf16.mxu0 0
      %631 = vmatpush1.bf16.msra.mxu0 %v567
      %632 = vmatprep.subr.bf16.mxu0 0
      %633 = vmatpush1.bf16.msra.mxu0 %v566
      %634 = vmatprep.subr.bf16.mxu0 0
      %635 = vmatpush1.bf16.msra.mxu0 %v565
      %636 = vmatprep.subr.bf16.mxu0 0
      %637 = vmatpush1.bf16.msra.mxu0 %v564
      %638 = vmatprep.subr.bf16.mxu0 0
      %639 = vmatpush1.bf16.msra.mxu0 %v563
      %640 = vmatprep.subr.bf16.mxu0 0
      %641 = vmatpush1.bf16.msra.mxu0 %v562
      %642 = vmatprep.subr.bf16.mxu0 0
      %643 = vmatpush2.bf16.msra.mxu0 %v577
      %644 = vmatprep.subr.bf16.mxu0 0
      %645 = vmatpush2.bf16.msra.mxu0 %v576
      %646 = vmatprep.subr.bf16.mxu0 0
      %647 = vmatpush2.bf16.msra.mxu0 %v575
      %648 = vmatprep.subr.bf16.mxu0 0
      %649 = vmatpush2.bf16.msra.mxu0 %v574
      %650 = vmatprep.subr.bf16.mxu0 0
      %651 = vmatpush2.bf16.msra.mxu0 %v573
      %652 = vmatprep.subr.bf16.mxu0 0
      %653 = vmatpush2.bf16.msra.mxu0 %v572
      %654 = vmatprep.subr.bf16.mxu0 0
      %655 = vmatpush2.bf16.msra.mxu0 %v571
      %656 = vmatprep.subr.bf16.mxu0 0
      %657 = vmatpush2.bf16.msra.mxu0 %v570
      %658 = vmatprep.mubr.bf16.mxu0 %v371
      %659 = vmatmul.mubr.bf16.gmra.mxu0 %v370
      %v660 = vpop.f32.mrf.mxu0
      %v661 = vadd.f32 0.0, %v660
      %v662 = vpop.f32.mrf.mxu0
      %v663 = vpop.f32.mrf.mxu0
      %v664 = vadd.f32 0.0, %v663
      %v665 = vpop.f32.mrf.mxu0
      %666 = vmatprep.mubr.bf16.mxu0 %v375
      %667 = vmatmul.mubr.bf16.gmra.mxu0 %v374
      %v668 = vpop.f32.mrf.mxu0
      %v669 = vadd.f32 0.0, %v668
      %v670 = vpop.f32.mrf.mxu0
      %v671 = vpop.f32.mrf.mxu0
      %v672 = vadd.f32 0.0, %v671
      %v673 = vpop.f32.mrf.mxu0
      %674 = vmatprep.mubr.bf16.mxu0 %v379
      %675 = vmatmul.mubr.bf16.gmra.mxu0 %v378
      %v676 = vpop.f32.mrf.mxu0
      %v677 = vadd.f32 0.0, %v676
      %v678 = vpop.f32.mrf.mxu0
      %v679 = vpop.f32.mrf.mxu0
      %v680 = vadd.f32 0.0, %v679
      %v681 = vpop.f32.mrf.mxu0
      %682 = vmatprep.mubr.bf16.mxu0 %v383
      %683 = vmatmul.mubr.bf16.gmra.mxu0 %v382
      %v684 = vpop.f32.mrf.mxu0
      %v685 = vadd.f32 0.0, %v684
      %v686 = vpop.f32.mrf.mxu0
      %v687 = vpop.f32.mrf.mxu0
      %v688 = vadd.f32 0.0, %v687
      %v689 = vpop.f32.mrf.mxu0
      %690 = vmatprep.mubr.bf16.mxu0 %v387
      %691 = vmatmul.mubr.bf16.gmra.mxu0 %v386
      %v692 = vpop.f32.mrf.mxu0
      %v693 = vadd.f32 0.0, %v692
      %v694 = vpop.f32.mrf.mxu0
      %v695 = vpop.f32.mrf.mxu0
      %v696 = vadd.f32 0.0, %v695
      %v697 = vpop.f32.mrf.mxu0
      %698 = vmatprep.mubr.bf16.mxu0 %v391
      %699 = vmatmul.mubr.bf16.gmra.mxu0 %v390
      %v700 = vpop.f32.mrf.mxu0
      %v701 = vadd.f32 0.0, %v700
      %v702 = vpop.f32.mrf.mxu0
      %v703 = vpop.f32.mrf.mxu0
      %v704 = vadd.f32 0.0, %v703
      %v705 = vpop.f32.mrf.mxu0
      %706 = vmatprep.mubr.bf16.mxu0 %v395
      %707 = vmatmul.mubr.bf16.gmra.mxu0 %v394
      %v708 = vpop.f32.mrf.mxu0
      %v709 = vadd.f32 0.0, %v708
      %v710 = vpop.f32.mrf.mxu0
      %v711 = vpop.f32.mrf.mxu0
      %v712 = vadd.f32 0.0, %v711
      %v713 = vpop.f32.mrf.mxu0
      %714 = vmatprep.mubr.bf16.mxu0 %v399
      %715 = vmatmul.mubr.bf16.gmra.mxu0 %v398
      %v716 = vpop.f32.mrf.mxu0
      %v717 = vadd.f32 0.0, %v716
      %v718 = vpop.f32.mrf.mxu0
      %v719 = vpop.f32.mrf.mxu0
      %v720 = vadd.f32 0.0, %v719
      %v721 = vpop.f32.mrf.mxu0
      %722 = vdwg.mxu0
      %723 = vmatprep.subr.bf16.mxu0 0
      %724 = vmatpush1.bf16.msra.mxu0 %v585
      %725 = vmatprep.subr.bf16.mxu0 0
      %726 = vmatpush1.bf16.msra.mxu0 %v584
      %727 = vmatprep.subr.bf16.mxu0 0
      %728 = vmatpush1.bf16.msra.mxu0 %v583
      %729 = vmatprep.subr.bf16.mxu0 0
      %730 = vmatpush1.bf16.msra.mxu0 %v582
      %731 = vmatprep.subr.bf16.mxu0 0
      %732 = vmatpush1.bf16.msra.mxu0 %v581
      %733 = vmatprep.subr.bf16.mxu0 0
      %734 = vmatpush1.bf16.msra.mxu0 %v580
      %735 = vmatprep.subr.bf16.mxu0 0
      %736 = vmatpush1.bf16.msra.mxu0 %v579
      %737 = vmatprep.subr.bf16.mxu0 0
      %738 = vmatpush1.bf16.msra.mxu0 %v578
      %739 = vmatprep.subr.bf16.mxu0 0
      %740 = vmatpush2.bf16.msra.mxu0 %v593
      %741 = vmatprep.subr.bf16.mxu0 0
      %742 = vmatpush2.bf16.msra.mxu0 %v592
      %743 = vmatprep.subr.bf16.mxu0 0
      %744 = vmatpush2.bf16.msra.mxu0 %v591
      %745 = vmatprep.subr.bf16.mxu0 0
      %746 = vmatpush2.bf16.msra.mxu0 %v590
      %747 = vmatprep.subr.bf16.mxu0 0
      %748 = vmatpush2.bf16.msra.mxu0 %v589
      %749 = vmatprep.subr.bf16.mxu0 0
      %750 = vmatpush2.bf16.msra.mxu0 %v588
      %751 = vmatprep.subr.bf16.mxu0 0
      %752 = vmatpush2.bf16.msra.mxu0 %v587
      %753 = vmatprep.subr.bf16.mxu0 0
      %754 = vmatpush2.bf16.msra.mxu0 %v586
      %755 = vmatprep.mubr.bf16.mxu0 %v373
      %756 = vmatmul.mubr.bf16.gmra.mxu0 %v372
      %v757 = vpop.f32.mrf.mxu0
      %v758 = vadd.f32 %v661, %v757
      %v759 = vpop.f32.mrf.mxu0
      %v760 = vpop.f32.mrf.mxu0
      %v761 = vadd.f32 %v664, %v760
      %v762 = vpop.f32.mrf.mxu0
      %763 = vmatprep.mubr.bf16.mxu0 %v377
      %764 = vmatmul.mubr.bf16.gmra.mxu0 %v376
      %v765 = vpop.f32.mrf.mxu0
      %v766 = vadd.f32 %v669, %v765
      %v767 = vpop.f32.mrf.mxu0
      %v768 = vpop.f32.mrf.mxu0
      %v769 = vadd.f32 %v672, %v768
      %v770 = vpop.f32.mrf.mxu0
      %771 = vmatprep.mubr.bf16.mxu0 %v381
      %772 = vmatmul.mubr.bf16.gmra.mxu0 %v380
      %v773 = vpop.f32.mrf.mxu0
      %v774 = vadd.f32 %v677, %v773
      %v775 = vpop.f32.mrf.mxu0
      %v776 = vpop.f32.mrf.mxu0
      %v777 = vadd.f32 %v680, %v776
      %v778 = vpop.f32.mrf.mxu0
      %779 = vmatprep.mubr.bf16.mxu0 %v385
      %780 = vmatmul.mubr.bf16.gmra.mxu0 %v384
      %v781 = vpop.f32.mrf.mxu0
      %v782 = vadd.f32 %v685, %v781
      %v783 = vpop.f32.mrf.mxu0
      %v784 = vpop.f32.mrf.mxu0
      %v785 = vadd.f32 %v688, %v784
      %v786 = vpop.f32.mrf.mxu0
      %787 = vmatprep.mubr.bf16.mxu0 %v389
      %788 = vmatmul.mubr.bf16.gmra.mxu0 %v388
      %v789 = vpop.f32.mrf.mxu0
      %v790 = vadd.f32 %v693, %v789
      %v791 = vpop.f32.mrf.mxu0
      %v792 = vpop.f32.mrf.mxu0
      %v793 = vadd.f32 %v696, %v792
      %v794 = vpop.f32.mrf.mxu0
      %795 = vmatprep.mubr.bf16.mxu0 %v393
      %796 = vmatmul.mubr.bf16.gmra.mxu0 %v392
      %v797 = vpop.f32.mrf.mxu0
      %v798 = vadd.f32 %v701, %v797
      %v799 = vpop.f32.mrf.mxu0
      %v800 = vpop.f32.mrf.mxu0
      %v801 = vadd.f32 %v704, %v800
      %v802 = vpop.f32.mrf.mxu0
      %803 = vmatprep.mubr.bf16.mxu0 %v397
      %804 = vmatmul.mubr.bf16.gmra.mxu0 %v396
      %v805 = vpop.f32.mrf.mxu0
      %v806 = vadd.f32 %v709, %v805
      %v807 = vpop.f32.mrf.mxu0
      %v808 = vpop.f32.mrf.mxu0
      %v809 = vadd.f32 %v712, %v808
      %v810 = vpop.f32.mrf.mxu0
      %811 = vmatprep.mubr.bf16.mxu0 %v401
      %812 = vmatmul.mubr.bf16.gmra.mxu0 %v400
      %v813 = vpop.f32.mrf.mxu0
      %v814 = vadd.f32 %v717, %v813
      %v815 = vpop.f32.mrf.mxu0
      %v816 = vpop.f32.mrf.mxu0
      %v817 = vadd.f32 %v720, %v816
      %v818 = vpop.f32.mrf.mxu0
      %819 = vdwg.mxu0
      %v820 = vmax.f32 %v758, %v774
      %v821 = vmax.f32 %v761, %v777
      %v822 = vmax.f32 %v766, %v782
      %v823 = vmax.f32 %v769, %v785
      %v824 = vmax.f32 %v790, %v806
      %v825 = vmax.f32 %v793, %v809
      %v826 = vmax.f32 %v798, %v814
      %v827 = vmax.f32 %v801, %v817
      %v828 = vmax.f32 %v820, %v824
      %v829 = vmax.f32 %v821, %v825
      %v830 = vmax.f32 %v822, %v826
      %v831 = vmax.f32 %v823, %v827
      %v832 = vld [vmem:[%s2] sm:$0x1]
      %v834 = vlaneseq
      %v835 = vshrl.u32 %v834, 7
      %v836 = vsub.s32 0, %v835
      %v837 = vrot.slane %v832, %v836
      %v839 = vadd.f32 %v828, %v837
      %v840 = vadd.f32 %v829, %v837
      %v841 = vadd.f32 %v830, %v837
      %v842 = vadd.f32 %v831, %v837
      %v843 = vmax.f32 %v839, 0.0
      %v844 = vmax.f32 %v840, 0.0
      %v845 = vmax.f32 %v841, 0.0
      %v846 = vmax.f32 %v842, 0.0
      %v847 = vpack.c.bf16 %v844, %v843
      %v848 = vpack.c.bf16 %v846, %v845
      %v851 = vunpack.c.l.b16 %v847
      %v852 = vunpack.c.h.b16 %v847
      %v853 = vunpack.c.l.b16 %v848
      %v854 = vunpack.c.h.b16 %v848
      %v855 = vpack.c.b16 %v851, %v851
      %v856 = vpack.c.b16 %v852, %v852
      %v857 = vpack.c.b16 %v853, %v853
      %v858 = vpack.c.b16 %v854, %v854
      %863 = vst [vmem:[%s175] sm:$0xf] %v855
      %864 = vst [vmem:[%s175 + $0x4] sm:$0xf] %v856
      %865 = vst [vmem:[%s175 + $0x8] sm:$0xf] %v857
      %866 = vst [vmem:[%s175 + $0xc] sm:$0xf] %v858
      %s867 = smul.u32 4, %s14
      %p868 = scmp.lt.s32.totalorder %s867, 7
      %s869 = scalar_select %p868, %s867, 7
      %s870 = smul.addr %s869, 4
      %s871 = scalar_lea.vmem %s3, %s870
      // Predicated region
      $region33: #{lenet5_tr_forward.4} parent=31 // pred_check
        %p872 = pneg %p100
      $region34: #{lenet5_tr_forward.4} parent=31 // pred_check_branch
        %874 = sbr.rel (%p872) target = $region36
      $region35: #{lenet5_tr_forward.4} parent=31 // pred_region
        %s875 = smul.u32 4, %s14
      $region36: #{lenet5_tr_forward.4} parent=31 // pred_fallthru
        _
    $region32: #{lenet5_tr_forward.4} parent=5 // pred_fallthru
      _
    %p876 = scmp.le.s32.totalorder 2, %s9
    // Predicated region
    $region37: #{lenet5_tr_forward.4} parent=5 // pred_check
      %p877 = pneg %p876
    $region38: #{lenet5_tr_forward.4} parent=5 // pred_check_branch
      %879 = sbr.rel (%p877) target = $region40
    $region39: #{lenet5_tr_forward.4} parent=5 // pred_region
      %s880 = ssub.s32 %s9, 2
      // Predicated region
      $region41: #{lenet5_tr_forward.4} parent=39 // pred_check
        %p881 = pneg %p106
      $region42: #{lenet5_tr_forward.4} parent=39 // pred_check_branch
        %883 = sbr.rel (%p881) target = $region44
      $region43: #{lenet5_tr_forward.4} parent=39 // pred_region
        %s884 = smul.u32 4, %s15
        %p885 = scmp.lt.s32.totalorder %s884, 7
        %s886 = scalar_select %p885, %s884, 7
        %s887 = smul.addr %s886, 4
        %s888 = scalar_lea.vmem %s3, %s887
      $region44: #{lenet5_tr_forward.4} parent=39 // pred_fallthru
        _
    $region40: #{lenet5_tr_forward.4} parent=5 // pred_fallthru
      _
  $region6: #{lenet5_tr_forward.4} parent=0 // loop_footer
    %s13 = sadd.s32 1, %s9
  $region7: #{lenet5_tr_forward.4} parent=0 // loop_footer_branch
    %8 = sbr.rel target = $region3
  $region8: #{lenet5_tr_forward.4} parent=0 // loop_exit
    _

// kernel: lenet5_tr_forward.5
$region0: #{lenet5_tr_forward.5}
  #allocation0 [shape = 'u32[]', space=smem, size = 0x4, offset = 0x4, fixed_abs, tag = 'smem constant byte address 0x4 - core index']
  #allocation1 [shape = 'u32[144,128]{1,0:T(1,128)}', space=vmem, size = 0x12000, scoped, tag = 'internal scratch']
  %s0 = inlined_call_operand.vmem [shape: bf16[16,1280], index: 0, kind: input, shape index: {}]
  %s1 = inlined_call_operand.vmem [shape: bf16[1280,384], index: 1, kind: input, shape index: {}]
  %s2 = inlined_call_operand.vmem [shape: f32[1,384], index: 2, kind: input, shape index: {}]
  %s3 = inlined_call_operand.vmem [shape: bf16[384,128], index: 3, kind: input, shape index: {}]
  %s4 = inlined_call_operand.vmem [shape: f32[1,128], index: 4, kind: input, shape index: {}]
  %s5 = inlined_call_operand.vmem [shape: f32[16,128], index: 5, kind: output, shape index: {}]
  %s6 = sld [smem:[#allocation0]]
  $region30: #{lenet5_tr_forward.5} parent=0
    _
  %s8 = ssub.s32 1, %s6
  %s9 = scalar_select 0, %s8, %s6
  // Predicated region
  $region2: #{lenet5_tr_forward.5} parent=0 // pred_check
    _
  $region3: #{lenet5_tr_forward.5} parent=0 // pred_check_branch
    %11 = sbr.rel (0) target = $region5
  $region4: #{lenet5_tr_forward.5} parent=0 // pred_region
    _
  $region5: #{lenet5_tr_forward.5} parent=0 // pred_fallthru
    _
  // Predicated region
  $region6: #{lenet5_tr_forward.5} parent=0 // pred_check
    _
  $region7: #{lenet5_tr_forward.5} parent=0 // pred_check_branch
    %13 = sbr.rel (0) target = $region9
  $region8: #{lenet5_tr_forward.5} parent=0 // pred_region
    _
  $region9: #{lenet5_tr_forward.5} parent=0 // pred_fallthru
    _
  // Predicated region
  $region10: #{lenet5_tr_forward.5} parent=0 // pred_check
    _
  $region11: #{lenet5_tr_forward.5} parent=0 // pred_check_branch
    %15 = sbr.rel (0) target = $region13
  $region12: #{lenet5_tr_forward.5} parent=0 // pred_region
    _
  $region13: #{lenet5_tr_forward.5} parent=0 // pred_fallthru
    _
  // Predicated region
  $region14: #{lenet5_tr_forward.5} parent=0 // pred_check
    _
  $region15: #{lenet5_tr_forward.5} parent=0 // pred_check_branch
    %17 = sbr.rel (0) target = $region17
  $region16: #{lenet5_tr_forward.5} parent=0 // pred_region
    _
  $region17: #{lenet5_tr_forward.5} parent=0 // pred_fallthru
    _
  // Predicated region
  $region18: #{lenet5_tr_forward.5} parent=0 // pred_check
    _
  $region19: #{lenet5_tr_forward.5} parent=0 // pred_check_branch
    %19 = sbr.rel (0) target = $region21
  $region20: #{lenet5_tr_forward.5} parent=0 // pred_region
    _
  $region21: #{lenet5_tr_forward.5} parent=0 // pred_fallthru
    _
  %v21 = vld [vmem:[%s0] sm:$0xff]
  %v22 = vld [vmem:[%s0 + $0x8] sm:$0xff]
  %v23 = vld [vmem:[%s0 + $0x10] sm:$0xff]
  %v24 = vld [vmem:[%s0 + $0x18] sm:$0xff]
  %v25 = vld [vmem:[%s0 + $0x20] sm:$0xff]
  %v26 = vld [vmem:[%s0 + $0x28] sm:$0xff]
  %v27 = vld [vmem:[%s0 + $0x30] sm:$0xff]
  %v28 = vld [vmem:[%s0 + $0x38] sm:$0xff]
  %v29 = vld [vmem:[%s0 + $0x40] sm:$0xff]
  %v30 = vld [vmem:[%s0 + $0x48] sm:$0xff]
  %v31 = vld [vmem:[%s1] sm:$0xff]
  %v32 = vld [vmem:[%s1 + $0x8] sm:$0xf]
  %v33 = vld [vmem:[%s1 + $0xc] sm:$0xff]
  %v34 = vld [vmem:[%s1 + $0x14] sm:$0xf]
  %v35 = vld [vmem:[%s1 + $0x18] sm:$0xff]
  %v36 = vld [vmem:[%s1 + $0x20] sm:$0xf]
  %v37 = vld [vmem:[%s1 + $0x24] sm:$0xff]
  %v38 = vld [vmem:[%s1 + $0x2c] sm:$0xf]
  %v39 = vld [vmem:[%s1 + $0x30] sm:$0xff]
  %v40 = vld [vmem:[%s1 + $0x38] sm:$0xf]
  %v41 = vld [vmem:[%s1 + $0x3c] sm:$0xff]
  %v42 = vld [vmem:[%s1 + $0x44] sm:$0xf]
  %v43 = vld [vmem:[%s1 + $0x48] sm:$0xff]
  %v44 = vld [vmem:[%s1 + $0x50] sm:$0xf]
  %v45 = vld [vmem:[%s1 + $0x54] sm:$0xff]
  %v46 = vld [vmem:[%s1 + $0x5c] sm:$0xf]
  %v47 = vld [vmem:[%s1 + $0x60] sm:$0xff]
  %v48 = vld [vmem:[%s1 + $0x68] sm:$0xf]
  %v49 = vld [vmem:[%s1 + $0x6c] sm:$0xff]
  %v50 = vld [vmem:[%s1 + $0x74] sm:$0xf]
  %v51 = vld [vmem:[%s1 + $0x78] sm:$0xff]
  %v52 = vld [vmem:[%s1 + $0x80] sm:$0xf]
  %v53 = vld [vmem:[%s1 + $0x84] sm:$0xff]
  %v54 = vld [vmem:[%s1 + $0x8c] sm:$0xf]
  %v55 = vld [vmem:[%s1 + $0x90] sm:$0xff]
  %v56 = vld [vmem:[%s1 + $0x98] sm:$0xf]
  %v57 = vld [vmem:[%s1 + $0x9c] sm:$0xff]
  %v58 = vld [vmem:[%s1 + $0xa4] sm:$0xf]
  %v59 = vld [vmem:[%s1 + $0xa8] sm:$0xff]
  %v60 = vld [vmem:[%s1 + $0xb0] sm:$0xf]
  %v61 = vld [vmem:[%s1 + $0xb4] sm:$0xff]
  %v62 = vld [vmem:[%s1 + $0xbc] sm:$0xf]
  %v63 = vld [vmem:[%s1 + $0xc0] sm:$0xff]
  %v64 = vld [vmem:[%s1 + $0xc8] sm:$0xf]
  %v65 = vld [vmem:[%s1 + $0xcc] sm:$0xff]
  %v66 = vld [vmem:[%s1 + $0xd4] sm:$0xf]
  %v67 = vld [vmem:[%s1 + $0xd8] sm:$0xff]
  %v68 = vld [vmem:[%s1 + $0xe0] sm:$0xf]
  %v69 = vld [vmem:[%s1 + $0xe4] sm:$0xff]
  %v70 = vld [vmem:[%s1 + $0xec] sm:$0xf]
  %v71 = vld [vmem:[%s1 + $0xf0] sm:$0xff]
  %v72 = vld [vmem:[%s1 + $0xf8] sm:$0xf]
  %v73 = vld [vmem:[%s1 + $0xfc] sm:$0xff]
  %v74 = vld [vmem:[%s1 + $0x104] sm:$0xf]
  %v75 = vld [vmem:[%s1 + $0x108] sm:$0xff]
  %v76 = vld [vmem:[%s1 + $0x110] sm:$0xf]
  %v77 = vld [vmem:[%s1 + $0x114] sm:$0xff]
  %v78 = vld [vmem:[%s1 + $0x11c] sm:$0xf]
  %v79 = vld [vmem:[%s1 + $0x120] sm:$0xff]
  %v80 = vld [vmem:[%s1 + $0x128] sm:$0xf]
  %v81 = vld [vmem:[%s1 + $0x12c] sm:$0xff]
  %v82 = vld [vmem:[%s1 + $0x134] sm:$0xf]
  %v83 = vld [vmem:[%s1 + $0x138] sm:$0xff]
  %v84 = vld [vmem:[%s1 + $0x140] sm:$0xf]
  %v85 = vld [vmem:[%s1 + $0x144] sm:$0xff]
  %v86 = vld [vmem:[%s1 + $0x14c] sm:$0xf]
  %v87 = vld [vmem:[%s1 + $0x150] sm:$0xff]
  %v88 = vld [vmem:[%s1 + $0x158] sm:$0xf]
  %v89 = vld [vmem:[%s1 + $0x15c] sm:$0xff]
  %v90 = vld [vmem:[%s1 + $0x164] sm:$0xf]
  %v91 = vld [vmem:[%s1 + $0x168] sm:$0xff]
  %v92 = vld [vmem:[%s1 + $0x170] sm:$0xf]
  %v93 = vld [vmem:[%s1 + $0x174] sm:$0xff]
  %v94 = vld [vmem:[%s1 + $0x17c] sm:$0xf]
  %v95 = vld [vmem:[%s1 + $0x180] sm:$0xff]
  %v96 = vld [vmem:[%s1 + $0x188] sm:$0xf]
  %v97 = vld [vmem:[%s1 + $0x18c] sm:$0xff]
  %v98 = vld [vmem:[%s1 + $0x194] sm:$0xf]
  %v99 = vld [vmem:[%s1 + $0x198] sm:$0xff]
  %v100 = vld [vmem:[%s1 + $0x1a0] sm:$0xf]
  %v101 = vld [vmem:[%s1 + $0x1a4] sm:$0xff]
  %v102 = vld [vmem:[%s1 + $0x1ac] sm:$0xf]
  %v103 = vld [vmem:[%s1 + $0x1b0] sm:$0xff]
  %v104 = vld [vmem:[%s1 + $0x1b8] sm:$0xf]
  %v105 = vld [vmem:[%s1 + $0x1bc] sm:$0xff]
  %v106 = vld [vmem:[%s1 + $0x1c4] sm:$0xf]
  %v107 = vld [vmem:[%s1 + $0x1c8] sm:$0xff]
  %v108 = vld [vmem:[%s1 + $0x1d0] sm:$0xf]
  %v109 = vld [vmem:[%s1 + $0x1d4] sm:$0xff]
  %v110 = vld [vmem:[%s1 + $0x1dc] sm:$0xf]
  %v111 = vld [vmem:[%s1 + $0x1e0] sm:$0xff]
  %v112 = vld [vmem:[%s1 + $0x1e8] sm:$0xf]
  %v113 = vld [vmem:[%s1 + $0x1ec] sm:$0xff]
  %v114 = vld [vmem:[%s1 + $0x1f4] sm:$0xf]
  %v115 = vld [vmem:[%s1 + $0x1f8] sm:$0xff]
  %v116 = vld [vmem:[%s1 + $0x200] sm:$0xf]
  %v117 = vld [vmem:[%s1 + $0x204] sm:$0xff]
  %v118 = vld [vmem:[%s1 + $0x20c] sm:$0xf]
  %v119 = vld [vmem:[%s1 + $0x210] sm:$0xff]
  %v120 = vld [vmem:[%s1 + $0x218] sm:$0xf]
  %v121 = vld [vmem:[%s1 + $0x21c] sm:$0xff]
  %v122 = vld [vmem:[%s1 + $0x224] sm:$0xf]
  %v123 = vld [vmem:[%s1 + $0x228] sm:$0xff]
  %v124 = vld [vmem:[%s1 + $0x230] sm:$0xf]
  %v125 = vld [vmem:[%s1 + $0x234] sm:$0xff]
  %v126 = vld [vmem:[%s1 + $0x23c] sm:$0xf]
  %v127 = vld [vmem:[%s1 + $0x240] sm:$0xff]
  %v128 = vld [vmem:[%s1 + $0x248] sm:$0xf]
  %v129 = vld [vmem:[%s1 + $0x24c] sm:$0xff]
  %v130 = vld [vmem:[%s1 + $0x254] sm:$0xf]
  %v131 = vld [vmem:[%s1 + $0x258] sm:$0xff]
  %v132 = vld [vmem:[%s1 + $0x260] sm:$0xf]
  %v133 = vld [vmem:[%s1 + $0x264] sm:$0xff]
  %v134 = vld [vmem:[%s1 + $0x26c] sm:$0xf]
  %v135 = vld [vmem:[%s1 + $0x270] sm:$0xff]
  %v136 = vld [vmem:[%s1 + $0x278] sm:$0xf]
  %v137 = vld [vmem:[%s1 + $0x27c] sm:$0xff]
  %v138 = vld [vmem:[%s1 + $0x284] sm:$0xf]
  %v139 = vld [vmem:[%s1 + $0x288] sm:$0xff]
  %v140 = vld [vmem:[%s1 + $0x290] sm:$0xf]
  %v141 = vld [vmem:[%s1 + $0x294] sm:$0xff]
  %v142 = vld [vmem:[%s1 + $0x29c] sm:$0xf]
  %v143 = vld [vmem:[%s1 + $0x2a0] sm:$0xff]
  %v144 = vld [vmem:[%s1 + $0x2a8] sm:$0xf]
  %v145 = vld [vmem:[%s1 + $0x2ac] sm:$0xff]
  %v146 = vld [vmem:[%s1 + $0x2b4] sm:$0xf]
  %v147 = vld [vmem:[%s1 + $0x2b8] sm:$0xff]
  %v148 = vld [vmem:[%s1 + $0x2c0] sm:$0xf]
  %v149 = vld [vmem:[%s1 + $0x2c4] sm:$0xff]
  %v150 = vld [vmem:[%s1 + $0x2cc] sm:$0xf]
  %v151 = vld [vmem:[%s1 + $0x2d0] sm:$0xff]
  %v152 = vld [vmem:[%s1 + $0x2d8] sm:$0xf]
  %v153 = vld [vmem:[%s1 + $0x2dc] sm:$0xff]
  %v154 = vld [vmem:[%s1 + $0x2e4] sm:$0xf]
  %v155 = vld [vmem:[%s1 + $0x2e8] sm:$0xff]
  %v156 = vld [vmem:[%s1 + $0x2f0] sm:$0xf]
  %v157 = vld [vmem:[%s1 + $0x2f4] sm:$0xff]
  %v158 = vld [vmem:[%s1 + $0x2fc] sm:$0xf]
  %v159 = vld [vmem:[%s1 + $0x300] sm:$0xff]
  %v160 = vld [vmem:[%s1 + $0x308] sm:$0xf]
  %v161 = vld [vmem:[%s1 + $0x30c] sm:$0xff]
  %v162 = vld [vmem:[%s1 + $0x314] sm:$0xf]
  %v163 = vld [vmem:[%s1 + $0x318] sm:$0xff]
  %v164 = vld [vmem:[%s1 + $0x320] sm:$0xf]
  %v165 = vld [vmem:[%s1 + $0x324] sm:$0xff]
  %v166 = vld [vmem:[%s1 + $0x32c] sm:$0xf]
  %v167 = vld [vmem:[%s1 + $0x330] sm:$0xff]
  %v168 = vld [vmem:[%s1 + $0x338] sm:$0xf]
  %v169 = vld [vmem:[%s1 + $0x33c] sm:$0xff]
  %v170 = vld [vmem:[%s1 + $0x344] sm:$0xf]
  %v171 = vld [vmem:[%s1 + $0x348] sm:$0xff]
  %v172 = vld [vmem:[%s1 + $0x350] sm:$0xf]
  %v173 = vld [vmem:[%s1 + $0x354] sm:$0xff]
  %v174 = vld [vmem:[%s1 + $0x35c] sm:$0xf]
  %v175 = vld [vmem:[%s1 + $0x360] sm:$0xff]
  %v176 = vld [vmem:[%s1 + $0x368] sm:$0xf]
  %v177 = vld [vmem:[%s1 + $0x36c] sm:$0xff]
  %v178 = vld [vmem:[%s1 + $0x374] sm:$0xf]
  %v179 = vld [vmem:[%s1 + $0x378] sm:$0xff]
  %v180 = vld [vmem:[%s1 + $0x380] sm:$0xf]
  %v181 = vld [vmem:[%s1 + $0x384] sm:$0xff]
  %v182 = vld [vmem:[%s1 + $0x38c] sm:$0xf]
  %v183 = vld [vmem:[%s1 + $0x390] sm:$0xff]
  %v184 = vld [vmem:[%s1 + $0x398] sm:$0xf]
  %v185 = vld [vmem:[%s1 + $0x39c] sm:$0xff]
  %v186 = vld [vmem:[%s1 + $0x3a4] sm:$0xf]
  %v187 = vld [vmem:[%s1 + $0x3a8] sm:$0xff]
  %v188 = vld [vmem:[%s1 + $0x3b0] sm:$0xf]
  %v189 = vld [vmem:[%s1 + $0x3b4] sm:$0xff]
  %v190 = vld [vmem:[%s1 + $0x3bc] sm:$0xf]
  %v191 = vld [vmem:[%s1 + $0x3c0] sm:$0xff]
  %v192 = vld [vmem:[%s1 + $0x3c8] sm:$0xf]
  %v193 = vld [vmem:[%s1 + $0x3cc] sm:$0xff]
  %v194 = vld [vmem:[%s1 + $0x3d4] sm:$0xf]
  %v195 = vld [vmem:[%s1 + $0x3d8] sm:$0xff]
  %v196 = vld [vmem:[%s1 + $0x3e0] sm:$0xf]
  %v197 = vld [vmem:[%s1 + $0x3e4] sm:$0xff]
  %v198 = vld [vmem:[%s1 + $0x3ec] sm:$0xf]
  %v199 = vld [vmem:[%s1 + $0x3f0] sm:$0xff]
  %v200 = vld [vmem:[%s1 + $0x3f8] sm:$0xf]
  %v201 = vld [vmem:[%s1 + $0x3fc] sm:$0xff]
  %v202 = vld [vmem:[%s1 + $0x404] sm:$0xf]
  %v203 = vld [vmem:[%s1 + $0x408] sm:$0xff]
  %v204 = vld [vmem:[%s1 + $0x410] sm:$0xf]
  %v205 = vld [vmem:[%s1 + $0x414] sm:$0xff]
  %v206 = vld [vmem:[%s1 + $0x41c] sm:$0xf]
  %v207 = vld [vmem:[%s1 + $0x420] sm:$0xff]
  %v208 = vld [vmem:[%s1 + $0x428] sm:$0xf]
  %v209 = vld [vmem:[%s1 + $0x42c] sm:$0xff]
  %v210 = vld [vmem:[%s1 + $0x434] sm:$0xf]
  %v211 = vld [vmem:[%s1 + $0x438] sm:$0xff]
  %v212 = vld [vmem:[%s1 + $0x440] sm:$0xf]
  %v213 = vld [vmem:[%s1 + $0x444] sm:$0xff]
  %v214 = vld [vmem:[%s1 + $0x44c] sm:$0xf]
  %v215 = vld [vmem:[%s1 + $0x450] sm:$0xff]
  %v216 = vld [vmem:[%s1 + $0x458] sm:$0xf]
  %v217 = vld [vmem:[%s1 + $0x45c] sm:$0xff]
  %v218 = vld [vmem:[%s1 + $0x464] sm:$0xf]
  %v219 = vld [vmem:[%s1 + $0x468] sm:$0xff]
  %v220 = vld [vmem:[%s1 + $0x470] sm:$0xf]
  %v221 = vld [vmem:[%s1 + $0x474] sm:$0xff]
  %v222 = vld [vmem:[%s1 + $0x47c] sm:$0xf]
  %v223 = vld [vmem:[%s1 + $0x480] sm:$0xff]
  %v224 = vld [vmem:[%s1 + $0x488] sm:$0xf]
  %v225 = vld [vmem:[%s1 + $0x48c] sm:$0xff]
  %v226 = vld [vmem:[%s1 + $0x494] sm:$0xf]
  %v227 = vld [vmem:[%s1 + $0x498] sm:$0xff]
  %v228 = vld [vmem:[%s1 + $0x4a0] sm:$0xf]
  %v229 = vld [vmem:[%s1 + $0x4a4] sm:$0xff]
  %v230 = vld [vmem:[%s1 + $0x4ac] sm:$0xf]
  %v231 = vld [vmem:[%s1 + $0x4b0] sm:$0xff]
  %v232 = vld [vmem:[%s1 + $0x4b8] sm:$0xf]
  %v233 = vld [vmem:[%s1 + $0x4bc] sm:$0xff]
  %v234 = vld [vmem:[%s1 + $0x4c4] sm:$0xf]
  %v235 = vld [vmem:[%s1 + $0x4c8] sm:$0xff]
  %v236 = vld [vmem:[%s1 + $0x4d0] sm:$0xf]
  %v237 = vld [vmem:[%s1 + $0x4d4] sm:$0xff]
  %v238 = vld [vmem:[%s1 + $0x4dc] sm:$0xf]
  %v239 = vld [vmem:[%s1 + $0x4e0] sm:$0xff]
  %v240 = vld [vmem:[%s1 + $0x4e8] sm:$0xf]
  %v241 = vld [vmem:[%s1 + $0x4ec] sm:$0xff]
  %v242 = vld [vmem:[%s1 + $0x4f4] sm:$0xf]
  %v243 = vld [vmem:[%s1 + $0x4f8] sm:$0xff]
  %v244 = vld [vmem:[%s1 + $0x500] sm:$0xf]
  %v245 = vld [vmem:[%s1 + $0x504] sm:$0xff]
  %v246 = vld [vmem:[%s1 + $0x50c] sm:$0xf]
  %v247 = vld [vmem:[%s1 + $0x510] sm:$0xff]
  %v248 = vld [vmem:[%s1 + $0x518] sm:$0xf]
  %v249 = vld [vmem:[%s1 + $0x51c] sm:$0xff]
  %v250 = vld [vmem:[%s1 + $0x524] sm:$0xf]
  %v251 = vld [vmem:[%s1 + $0x528] sm:$0xff]
  %v252 = vld [vmem:[%s1 + $0x530] sm:$0xf]
  %v253 = vld [vmem:[%s1 + $0x534] sm:$0xff]
  %v254 = vld [vmem:[%s1 + $0x53c] sm:$0xf]
  %v255 = vld [vmem:[%s1 + $0x540] sm:$0xff]
  %v256 = vld [vmem:[%s1 + $0x548] sm:$0xf]
  %v257 = vld [vmem:[%s1 + $0x54c] sm:$0xff]
  %v258 = vld [vmem:[%s1 + $0x554] sm:$0xf]
  %v259 = vld [vmem:[%s1 + $0x558] sm:$0xff]
  %v260 = vld [vmem:[%s1 + $0x560] sm:$0xf]
  %v261 = vld [vmem:[%s1 + $0x564] sm:$0xff]
  %v262 = vld [vmem:[%s1 + $0x56c] sm:$0xf]
  %v263 = vld [vmem:[%s1 + $0x570] sm:$0xff]
  %v264 = vld [vmem:[%s1 + $0x578] sm:$0xf]
  %v265 = vld [vmem:[%s1 + $0x57c] sm:$0xff]
  %v266 = vld [vmem:[%s1 + $0x584] sm:$0xf]
  %v267 = vld [vmem:[%s1 + $0x588] sm:$0xff]
  %v268 = vld [vmem:[%s1 + $0x590] sm:$0xf]
  %v269 = vld [vmem:[%s1 + $0x594] sm:$0xff]
  %v270 = vld [vmem:[%s1 + $0x59c] sm:$0xf]
  %v271 = vld [vmem:[%s1 + $0x5a0] sm:$0xff]
  %v272 = vld [vmem:[%s1 + $0x5a8] sm:$0xf]
  %v273 = vld [vmem:[%s1 + $0x5ac] sm:$0xff]
  %v274 = vld [vmem:[%s1 + $0x5b4] sm:$0xf]
  %v275 = vld [vmem:[%s1 + $0x5b8] sm:$0xff]
  %v276 = vld [vmem:[%s1 + $0x5c0] sm:$0xf]
  %v277 = vld [vmem:[%s1 + $0x5c4] sm:$0xff]
  %v278 = vld [vmem:[%s1 + $0x5cc] sm:$0xf]
  %v279 = vld [vmem:[%s1 + $0x5d0] sm:$0xff]
  %v280 = vld [vmem:[%s1 + $0x5d8] sm:$0xf]
  %v281 = vld [vmem:[%s1 + $0x5dc] sm:$0xff]
  %v282 = vld [vmem:[%s1 + $0x5e4] sm:$0xf]
  %v283 = vld [vmem:[%s1 + $0x5e8] sm:$0xff]
  %v284 = vld [vmem:[%s1 + $0x5f0] sm:$0xf]
  %v285 = vld [vmem:[%s1 + $0x5f4] sm:$0xff]
  %v286 = vld [vmem:[%s1 + $0x5fc] sm:$0xf]
  %v287 = vld [vmem:[%s1 + $0x600] sm:$0xff]
  %v288 = vld [vmem:[%s1 + $0x608] sm:$0xf]
  %v289 = vld [vmem:[%s1 + $0x60c] sm:$0xff]
  %v290 = vld [vmem:[%s1 + $0x614] sm:$0xf]
  %v291 = vld [vmem:[%s1 + $0x618] sm:$0xff]
  %v292 = vld [vmem:[%s1 + $0x620] sm:$0xf]
  %v293 = vld [vmem:[%s1 + $0x624] sm:$0xff]
  %v294 = vld [vmem:[%s1 + $0x62c] sm:$0xf]
  %v295 = vld [vmem:[%s1 + $0x630] sm:$0xff]
  %v296 = vld [vmem:[%s1 + $0x638] sm:$0xf]
  %v297 = vld [vmem:[%s1 + $0x63c] sm:$0xff]
  %v298 = vld [vmem:[%s1 + $0x644] sm:$0xf]
  %v299 = vld [vmem:[%s1 + $0x648] sm:$0xff]
  %v300 = vld [vmem:[%s1 + $0x650] sm:$0xf]
  %v301 = vld [vmem:[%s1 + $0x654] sm:$0xff]
  %v302 = vld [vmem:[%s1 + $0x65c] sm:$0xf]
  %v303 = vld [vmem:[%s1 + $0x660] sm:$0xff]
  %v304 = vld [vmem:[%s1 + $0x668] sm:$0xf]
  %v305 = vld [vmem:[%s1 + $0x66c] sm:$0xff]
  %v306 = vld [vmem:[%s1 + $0x674] sm:$0xf]
  %v307 = vld [vmem:[%s1 + $0x678] sm:$0xff]
  %v308 = vld [vmem:[%s1 + $0x680] sm:$0xf]
  %v309 = vld [vmem:[%s1 + $0x684] sm:$0xff]
  %v310 = vld [vmem:[%s1 + $0x68c] sm:$0xf]
  %v311 = vld [vmem:[%s1 + $0x690] sm:$0xff]
  %v312 = vld [vmem:[%s1 + $0x698] sm:$0xf]
  %v313 = vld [vmem:[%s1 + $0x69c] sm:$0xff]
  %v314 = vld [vmem:[%s1 + $0x6a4] sm:$0xf]
  %v315 = vld [vmem:[%s1 + $0x6a8] sm:$0xff]
  %v316 = vld [vmem:[%s1 + $0x6b0] sm:$0xf]
  %v317 = vld [vmem:[%s1 + $0x6b4] sm:$0xff]
  %v318 = vld [vmem:[%s1 + $0x6bc] sm:$0xf]
  %v319 = vld [vmem:[%s1 + $0x6c0] sm:$0xff]
  %v320 = vld [vmem:[%s1 + $0x6c8] sm:$0xf]
  %v321 = vld [vmem:[%s1 + $0x6cc] sm:$0xff]
  %v322 = vld [vmem:[%s1 + $0x6d4] sm:$0xf]
  %v323 = vld [vmem:[%s1 + $0x6d8] sm:$0xff]
  %v324 = vld [vmem:[%s1 + $0x6e0] sm:$0xf]
  %v325 = vld [vmem:[%s1 + $0x6e4] sm:$0xff]
  %v326 = vld [vmem:[%s1 + $0x6ec] sm:$0xf]
  %v327 = vld [vmem:[%s1 + $0x6f0] sm:$0xff]
  %v328 = vld [vmem:[%s1 + $0x6f8] sm:$0xf]
  %v329 = vld [vmem:[%s1 + $0x6fc] sm:$0xff]
  %v330 = vld [vmem:[%s1 + $0x704] sm:$0xf]
  %v331 = vld [vmem:[%s1 + $0x708] sm:$0xff]
  %v332 = vld [vmem:[%s1 + $0x710] sm:$0xf]
  %v333 = vld [vmem:[%s1 + $0x714] sm:$0xff]
  %v334 = vld [vmem:[%s1 + $0x71c] sm:$0xf]
  %v335 = vld [vmem:[%s1 + $0x720] sm:$0xff]
  %v336 = vld [vmem:[%s1 + $0x728] sm:$0xf]
  %v337 = vld [vmem:[%s1 + $0x72c] sm:$0xff]
  %v338 = vld [vmem:[%s1 + $0x734] sm:$0xf]
  %v339 = vld [vmem:[%s1 + $0x738] sm:$0xff]
  %v340 = vld [vmem:[%s1 + $0x740] sm:$0xf]
  %v341 = vld [vmem:[%s1 + $0x744] sm:$0xff]
  %v342 = vld [vmem:[%s1 + $0x74c] sm:$0xf]
  %v343 = vld [vmem:[%s1 + $0x750] sm:$0xff]
  %v344 = vld [vmem:[%s1 + $0x758] sm:$0xf]
  %v345 = vld [vmem:[%s1 + $0x75c] sm:$0xff]
  %v346 = vld [vmem:[%s1 + $0x764] sm:$0xf]
  %v347 = vld [vmem:[%s1 + $0x768] sm:$0xff]
  %v348 = vld [vmem:[%s1 + $0x770] sm:$0xf]
  %v349 = vld [vmem:[%s1 + $0x774] sm:$0xff]
  %v350 = vld [vmem:[%s1 + $0x77c] sm:$0xf]
  %v351 = vld [vmem:[%s2] sm:$0x7]
  %v353 = vlaneseq
  %v354 = vshrl.u32 %v353, 7
  %v355 = vsub.s32 0, %v354
  %v356 = vrot.slane %v351, %v355
  %v357 = vlaneseq
  %v358 = vshrl.u32 %v357, 7
  %v359 = vsub.s32 1, %v358
  %v360 = vrot.slane %v351, %v359
  %v361 = vlaneseq
  %v362 = vshrl.u32 %v361, 7
  %v363 = vsub.s32 2, %v362
  %v364 = vrot.slane %v351, %v363
  %v378 = vunpack.c.l.b16 %v21
  %v379 = vunpack.c.h.b16 %v21
  %v380 = vunpack.c.l.b16 %v22
  %v381 = vunpack.c.h.b16 %v22
  %v382 = vunpack.c.l.b16 %v23
  %v383 = vunpack.c.h.b16 %v23
  %v384 = vunpack.c.l.b16 %v24
  %v385 = vunpack.c.h.b16 %v24
  %v386 = vunpack.c.l.b16 %v25
  %v387 = vunpack.c.h.b16 %v25
  %v388 = vunpack.c.l.b16 %v26
  %v389 = vunpack.c.h.b16 %v26
  %v390 = vunpack.c.l.b16 %v27
  %v391 = vunpack.c.h.b16 %v27
  %v392 = vunpack.c.l.b16 %v28
  %v393 = vunpack.c.h.b16 %v28
  %v394 = vunpack.c.l.b16 %v29
  %v395 = vunpack.c.h.b16 %v29
  %v396 = vunpack.c.l.b16 %v30
  %v397 = vunpack.c.h.b16 %v30
  %v398 = vpack.c.b16 %v388, %v378
  %v399 = vpack.c.b16 %v389, %v379
  %v400 = vpack.c.b16 %v390, %v380
  %v401 = vpack.c.b16 %v391, %v381
  %v402 = vpack.c.b16 %v392, %v382
  %v403 = vpack.c.b16 %v393, %v383
  %v404 = vpack.c.b16 %v394, %v384
  %v405 = vpack.c.b16 %v395, %v385
  %v406 = vpack.c.b16 %v396, %v386
  %v407 = vpack.c.b16 %v397, %v387
  %v738 = vunpack.c.l.b16 %v31
  %v739 = vunpack.c.h.b16 %v31
  %v740 = vunpack.c.l.b16 %v32
  %v741 = vunpack.c.l.b16 %v33
  %v742 = vunpack.c.h.b16 %v33
  %v743 = vunpack.c.l.b16 %v34
  %v744 = vunpack.c.l.b16 %v35
  %v745 = vunpack.c.h.b16 %v35
  %v746 = vunpack.c.l.b16 %v36
  %v747 = vunpack.c.l.b16 %v37
  %v748 = vunpack.c.h.b16 %v37
  %v749 = vunpack.c.l.b16 %v38
  %v750 = vunpack.c.l.b16 %v39
  %v751 = vunpack.c.h.b16 %v39
  %v752 = vunpack.c.l.b16 %v40
  %v753 = vunpack.c.l.b16 %v41
  %v754 = vunpack.c.h.b16 %v41
  %v755 = vunpack.c.l.b16 %v42
  %v756 = vunpack.c.l.b16 %v43
  %v757 = vunpack.c.h.b16 %v43
  %v758 = vunpack.c.l.b16 %v44
  %v759 = vunpack.c.l.b16 %v45
  %v760 = vunpack.c.h.b16 %v45
  %v761 = vunpack.c.l.b16 %v46
  %v762 = vunpack.c.l.b16 %v47
  %v763 = vunpack.c.h.b16 %v47
  %v764 = vunpack.c.l.b16 %v48
  %v765 = vunpack.c.l.b16 %v49
  %v766 = vunpack.c.h.b16 %v49
  %v767 = vunpack.c.l.b16 %v50
  %v768 = vunpack.c.l.b16 %v51
  %v769 = vunpack.c.h.b16 %v51
  %v770 = vunpack.c.l.b16 %v52
  %v771 = vunpack.c.l.b16 %v53
  %v772 = vunpack.c.h.b16 %v53
  %v773 = vunpack.c.l.b16 %v54
  %v774 = vunpack.c.l.b16 %v55
  %v775 = vunpack.c.h.b16 %v55
  %v776 = vunpack.c.l.b16 %v56
  %v777 = vunpack.c.l.b16 %v57
  %v778 = vunpack.c.h.b16 %v57
  %v779 = vunpack.c.l.b16 %v58
  %v780 = vunpack.c.l.b16 %v59
  %v781 = vunpack.c.h.b16 %v59
  %v782 = vunpack.c.l.b16 %v60
  %v783 = vunpack.c.l.b16 %v61
  %v784 = vunpack.c.h.b16 %v61
  %v785 = vunpack.c.l.b16 %v62
  %v786 = vunpack.c.l.b16 %v63
  %v787 = vunpack.c.h.b16 %v63
  %v788 = vunpack.c.l.b16 %v64
  %v789 = vunpack.c.l.b16 %v65
  %v790 = vunpack.c.h.b16 %v65
  %v791 = vunpack.c.l.b16 %v66
  %v792 = vunpack.c.l.b16 %v67
  %v793 = vunpack.c.h.b16 %v67
  %v794 = vunpack.c.l.b16 %v68
  %v795 = vunpack.c.l.b16 %v69
  %v796 = vunpack.c.h.b16 %v69
  %v797 = vunpack.c.l.b16 %v70
  %v798 = vunpack.c.l.b16 %v71
  %v799 = vunpack.c.h.b16 %v71
  %v800 = vunpack.c.l.b16 %v72
  %v801 = vunpack.c.l.b16 %v73
  %v802 = vunpack.c.h.b16 %v73
  %v803 = vunpack.c.l.b16 %v74
  %v804 = vunpack.c.l.b16 %v75
  %v805 = vunpack.c.h.b16 %v75
  %v806 = vunpack.c.l.b16 %v76
  %v807 = vunpack.c.l.b16 %v77
  %v808 = vunpack.c.h.b16 %v77
  %v809 = vunpack.c.l.b16 %v78
  %v810 = vunpack.c.l.b16 %v79
  %v811 = vunpack.c.h.b16 %v79
  %v812 = vunpack.c.l.b16 %v80
  %v813 = vunpack.c.l.b16 %v81
  %v814 = vunpack.c.h.b16 %v81
  %v815 = vunpack.c.l.b16 %v82
  %v816 = vunpack.c.l.b16 %v83
  %v817 = vunpack.c.h.b16 %v83
  %v818 = vunpack.c.l.b16 %v84
  %v819 = vunpack.c.l.b16 %v85
  %v820 = vunpack.c.h.b16 %v85
  %v821 = vunpack.c.l.b16 %v86
  %v822 = vunpack.c.l.b16 %v87
  %v823 = vunpack.c.h.b16 %v87
  %v824 = vunpack.c.l.b16 %v88
  %v825 = vunpack.c.l.b16 %v89
  %v826 = vunpack.c.h.b16 %v89
  %v827 = vunpack.c.l.b16 %v90
  %v828 = vunpack.c.l.b16 %v91
  %v829 = vunpack.c.h.b16 %v91
  %v830 = vunpack.c.l.b16 %v92
  %v831 = vunpack.c.l.b16 %v93
  %v832 = vunpack.c.h.b16 %v93
  %v833 = vunpack.c.l.b16 %v94
  %v834 = vunpack.c.l.b16 %v95
  %v835 = vunpack.c.h.b16 %v95
  %v836 = vunpack.c.l.b16 %v96
  %v837 = vunpack.c.l.b16 %v97
  %v838 = vunpack.c.h.b16 %v97
  %v839 = vunpack.c.l.b16 %v98
  %v840 = vunpack.c.l.b16 %v99
  %v841 = vunpack.c.h.b16 %v99
  %v842 = vunpack.c.l.b16 %v100
  %v843 = vunpack.c.l.b16 %v101
  %v844 = vunpack.c.h.b16 %v101
  %v845 = vunpack.c.l.b16 %v102
  %v846 = vunpack.c.l.b16 %v103
  %v847 = vunpack.c.h.b16 %v103
  %v848 = vunpack.c.l.b16 %v104
  %v849 = vunpack.c.l.b16 %v105
  %v850 = vunpack.c.h.b16 %v105
  %v851 = vunpack.c.l.b16 %v106
  %v852 = vunpack.c.l.b16 %v107
  %v853 = vunpack.c.h.b16 %v107
  %v854 = vunpack.c.l.b16 %v108
  %v855 = vunpack.c.l.b16 %v109
  %v856 = vunpack.c.h.b16 %v109
  %v857 = vunpack.c.l.b16 %v110
  %v858 = vunpack.c.l.b16 %v111
  %v859 = vunpack.c.h.b16 %v111
  %v860 = vunpack.c.l.b16 %v112
  %v861 = vunpack.c.l.b16 %v113
  %v862 = vunpack.c.h.b16 %v113
  %v863 = vunpack.c.l.b16 %v114
  %v864 = vunpack.c.l.b16 %v115
  %v865 = vunpack.c.h.b16 %v115
  %v866 = vunpack.c.l.b16 %v116
  %v867 = vunpack.c.l.b16 %v117
  %v868 = vunpack.c.h.b16 %v117
  %v869 = vunpack.c.l.b16 %v118
  %v870 = vunpack.c.l.b16 %v119
  %v871 = vunpack.c.h.b16 %v119
  %v872 = vunpack.c.l.b16 %v120
  %v873 = vunpack.c.l.b16 %v121
  %v874 = vunpack.c.h.b16 %v121
  %v875 = vunpack.c.l.b16 %v122
  %v876 = vunpack.c.l.b16 %v123
  %v877 = vunpack.c.h.b16 %v123
  %v878 = vunpack.c.l.b16 %v124
  %v879 = vunpack.c.l.b16 %v125
  %v880 = vunpack.c.h.b16 %v125
  %v881 = vunpack.c.l.b16 %v126
  %v882 = vunpack.c.l.b16 %v127
  %v883 = vunpack.c.h.b16 %v127
  %v884 = vunpack.c.l.b16 %v128
  %v885 = vunpack.c.l.b16 %v129
  %v886 = vunpack.c.h.b16 %v129
  %v887 = vunpack.c.l.b16 %v130
  %v888 = vunpack.c.l.b16 %v131
  %v889 = vunpack.c.h.b16 %v131
  %v890 = vunpack.c.l.b16 %v132
  %v891 = vunpack.c.l.b16 %v133
  %v892 = vunpack.c.h.b16 %v133
  %v893 = vunpack.c.l.b16 %v134
  %v894 = vunpack.c.l.b16 %v135
  %v895 = vunpack.c.h.b16 %v135
  %v896 = vunpack.c.l.b16 %v136
  %v897 = vunpack.c.l.b16 %v137
  %v898 = vunpack.c.h.b16 %v137
  %v899 = vunpack.c.l.b16 %v138
  %v900 = vunpack.c.l.b16 %v139
  %v901 = vunpack.c.h.b16 %v139
  %v902 = vunpack.c.l.b16 %v140
  %v903 = vunpack.c.l.b16 %v141
  %v904 = vunpack.c.h.b16 %v141
  %v905 = vunpack.c.l.b16 %v142
  %v906 = vunpack.c.l.b16 %v143
  %v907 = vunpack.c.h.b16 %v143
  %v908 = vunpack.c.l.b16 %v144
  %v909 = vunpack.c.l.b16 %v145
  %v910 = vunpack.c.h.b16 %v145
  %v911 = vunpack.c.l.b16 %v146
  %v912 = vunpack.c.l.b16 %v147
  %v913 = vunpack.c.h.b16 %v147
  %v914 = vunpack.c.l.b16 %v148
  %v915 = vunpack.c.l.b16 %v149
  %v916 = vunpack.c.h.b16 %v149
  %v917 = vunpack.c.l.b16 %v150
  %v918 = vunpack.c.l.b16 %v151
  %v919 = vunpack.c.h.b16 %v151
  %v920 = vunpack.c.l.b16 %v152
  %v921 = vunpack.c.l.b16 %v153
  %v922 = vunpack.c.h.b16 %v153
  %v923 = vunpack.c.l.b16 %v154
  %v924 = vunpack.c.l.b16 %v155
  %v925 = vunpack.c.h.b16 %v155
  %v926 = vunpack.c.l.b16 %v156
  %v927 = vunpack.c.l.b16 %v157
  %v928 = vunpack.c.h.b16 %v157
  %v929 = vunpack.c.l.b16 %v158
  %v930 = vunpack.c.l.b16 %v159
  %v931 = vunpack.c.h.b16 %v159
  %v932 = vunpack.c.l.b16 %v160
  %v933 = vunpack.c.l.b16 %v161
  %v934 = vunpack.c.h.b16 %v161
  %v935 = vunpack.c.l.b16 %v162
  %v936 = vunpack.c.l.b16 %v163
  %v937 = vunpack.c.h.b16 %v163
  %v938 = vunpack.c.l.b16 %v164
  %v939 = vunpack.c.l.b16 %v165
  %v940 = vunpack.c.h.b16 %v165
  %v941 = vunpack.c.l.b16 %v166
  %v942 = vunpack.c.l.b16 %v167
  %v943 = vunpack.c.h.b16 %v167
  %v944 = vunpack.c.l.b16 %v168
  %v945 = vunpack.c.l.b16 %v169
  %v946 = vunpack.c.h.b16 %v169
  %v947 = vunpack.c.l.b16 %v170
  %v948 = vunpack.c.l.b16 %v171
  %v949 = vunpack.c.h.b16 %v171
  %v950 = vunpack.c.l.b16 %v172
  %v951 = vunpack.c.l.b16 %v173
  %v952 = vunpack.c.h.b16 %v173
  %v953 = vunpack.c.l.b16 %v174
  %v954 = vunpack.c.l.b16 %v175
  %v955 = vunpack.c.h.b16 %v175
  %v956 = vunpack.c.l.b16 %v176
  %v957 = vunpack.c.l.b16 %v177
  %v958 = vunpack.c.h.b16 %v177
  %v959 = vunpack.c.l.b16 %v178
  %v960 = vunpack.c.l.b16 %v179
  %v961 = vunpack.c.h.b16 %v179
  %v962 = vunpack.c.l.b16 %v180
  %v963 = vunpack.c.l.b16 %v181
  %v964 = vunpack.c.h.b16 %v181
  %v965 = vunpack.c.l.b16 %v182
  %v966 = vunpack.c.l.b16 %v183
  %v967 = vunpack.c.h.b16 %v183
  %v968 = vunpack.c.l.b16 %v184
  %v969 = vunpack.c.l.b16 %v185
  %v970 = vunpack.c.h.b16 %v185
  %v971 = vunpack.c.l.b16 %v186
  %v972 = vunpack.c.l.b16 %v187
  %v973 = vunpack.c.h.b16 %v187
  %v974 = vunpack.c.l.b16 %v188
  %v975 = vunpack.c.l.b16 %v189
  %v976 = vunpack.c.h.b16 %v189
  %v977 = vunpack.c.l.b16 %v190
  %v978 = vunpack.c.l.b16 %v191
  %v979 = vunpack.c.h.b16 %v191
  %v980 = vunpack.c.l.b16 %v192
  %v981 = vunpack.c.l.b16 %v193
  %v982 = vunpack.c.h.b16 %v193
  %v983 = vunpack.c.l.b16 %v194
  %v984 = vunpack.c.l.b16 %v195
  %v985 = vunpack.c.h.b16 %v195
  %v986 = vunpack.c.l.b16 %v196
  %v987 = vunpack.c.l.b16 %v197
  %v988 = vunpack.c.h.b16 %v197
  %v989 = vunpack.c.l.b16 %v198
  %v990 = vunpack.c.l.b16 %v199
  %v991 = vunpack.c.h.b16 %v199
  %v992 = vunpack.c.l.b16 %v200
  %v993 = vunpack.c.l.b16 %v201
  %v994 = vunpack.c.h.b16 %v201
  %v995 = vunpack.c.l.b16 %v202
  %v996 = vunpack.c.l.b16 %v203
  %v997 = vunpack.c.h.b16 %v203
  %v998 = vunpack.c.l.b16 %v204
  %v999 = vunpack.c.l.b16 %v205
  %v1000 = vunpack.c.h.b16 %v205
  %v1001 = vunpack.c.l.b16 %v206
  %v1002 = vunpack.c.l.b16 %v207
  %v1003 = vunpack.c.h.b16 %v207
  %v1004 = vunpack.c.l.b16 %v208
  %v1005 = vunpack.c.l.b16 %v209
  %v1006 = vunpack.c.h.b16 %v209
  %v1007 = vunpack.c.l.b16 %v210
  %v1008 = vunpack.c.l.b16 %v211
  %v1009 = vunpack.c.h.b16 %v211
  %v1010 = vunpack.c.l.b16 %v212
  %v1011 = vunpack.c.l.b16 %v213
  %v1012 = vunpack.c.h.b16 %v213
  %v1013 = vunpack.c.l.b16 %v214
  %v1014 = vunpack.c.l.b16 %v215
  %v1015 = vunpack.c.h.b16 %v215
  %v1016 = vunpack.c.l.b16 %v216
  %v1017 = vunpack.c.l.b16 %v217
  %v1018 = vunpack.c.h.b16 %v217
  %v1019 = vunpack.c.l.b16 %v218
  %v1020 = vunpack.c.l.b16 %v219
  %v1021 = vunpack.c.h.b16 %v219
  %v1022 = vunpack.c.l.b16 %v220
  %v1023 = vunpack.c.l.b16 %v221
  %v1024 = vunpack.c.h.b16 %v221
  %v1025 = vunpack.c.l.b16 %v222
  %v1026 = vunpack.c.l.b16 %v223
  %v1027 = vunpack.c.h.b16 %v223
  %v1028 = vunpack.c.l.b16 %v224
  %v1029 = vunpack.c.l.b16 %v225
  %v1030 = vunpack.c.h.b16 %v225
  %v1031 = vunpack.c.l.b16 %v226
  %v1032 = vunpack.c.l.b16 %v227
  %v1033 = vunpack.c.h.b16 %v227
  %v1034 = vunpack.c.l.b16 %v228
  %v1035 = vunpack.c.l.b16 %v229
  %v1036 = vunpack.c.h.b16 %v229
  %v1037 = vunpack.c.l.b16 %v230
  %v1038 = vunpack.c.l.b16 %v231
  %v1039 = vunpack.c.h.b16 %v231
  %v1040 = vunpack.c.l.b16 %v232
  %v1041 = vunpack.c.l.b16 %v233
  %v1042 = vunpack.c.h.b16 %v233
  %v1043 = vunpack.c.l.b16 %v234
  %v1044 = vunpack.c.l.b16 %v235
  %v1045 = vunpack.c.h.b16 %v235
  %v1046 = vunpack.c.l.b16 %v236
  %v1047 = vunpack.c.l.b16 %v237
  %v1048 = vunpack.c.h.b16 %v237
  %v1049 = vunpack.c.l.b16 %v238
  %v1050 = vunpack.c.l.b16 %v239
  %v1051 = vunpack.c.h.b16 %v239
  %v1052 = vunpack.c.l.b16 %v240
  %v1053 = vunpack.c.l.b16 %v241
  %v1054 = vunpack.c.h.b16 %v241
  %v1055 = vunpack.c.l.b16 %v242
  %v1056 = vunpack.c.l.b16 %v243
  %v1057 = vunpack.c.h.b16 %v243
  %v1058 = vunpack.c.l.b16 %v244
  %v1059 = vunpack.c.l.b16 %v245
  %v1060 = vunpack.c.h.b16 %v245
  %v1061 = vunpack.c.l.b16 %v246
  %v1062 = vunpack.c.l.b16 %v247
  %v1063 = vunpack.c.h.b16 %v247
  %v1064 = vunpack.c.l.b16 %v248
  %v1065 = vunpack.c.l.b16 %v249
  %v1066 = vunpack.c.h.b16 %v249
  %v1067 = vunpack.c.l.b16 %v250
  %v1068 = vunpack.c.l.b16 %v251
  %v1069 = vunpack.c.h.b16 %v251
  %v1070 = vunpack.c.l.b16 %v252
  %v1071 = vunpack.c.l.b16 %v253
  %v1072 = vunpack.c.h.b16 %v253
  %v1073 = vunpack.c.l.b16 %v254
  %v1074 = vunpack.c.l.b16 %v255
  %v1075 = vunpack.c.h.b16 %v255
  %v1076 = vunpack.c.l.b16 %v256
  %v1077 = vunpack.c.l.b16 %v257
  %v1078 = vunpack.c.h.b16 %v257
  %v1079 = vunpack.c.l.b16 %v258
  %v1080 = vunpack.c.l.b16 %v259
  %v1081 = vunpack.c.h.b16 %v259
  %v1082 = vunpack.c.l.b16 %v260
  %v1083 = vunpack.c.l.b16 %v261
  %v1084 = vunpack.c.h.b16 %v261
  %v1085 = vunpack.c.l.b16 %v262
  %v1086 = vunpack.c.l.b16 %v263
  %v1087 = vunpack.c.h.b16 %v263
  %v1088 = vunpack.c.l.b16 %v264
  %v1089 = vunpack.c.l.b16 %v265
  %v1090 = vunpack.c.h.b16 %v265
  %v1091 = vunpack.c.l.b16 %v266
  %v1092 = vunpack.c.l.b16 %v267
  %v1093 = vunpack.c.h.b16 %v267
  %v1094 = vunpack.c.l.b16 %v268
  %v1095 = vunpack.c.l.b16 %v269
  %v1096 = vunpack.c.h.b16 %v269
  %v1097 = vunpack.c.l.b16 %v270
  %v1098 = vunpack.c.l.b16 %v271
  %v1099 = vunpack.c.h.b16 %v271
  %v1100 = vunpack.c.l.b16 %v272
  %v1101 = vunpack.c.l.b16 %v273
  %v1102 = vunpack.c.h.b16 %v273
  %v1103 = vunpack.c.l.b16 %v274
  %v1104 = vunpack.c.l.b16 %v275
  %v1105 = vunpack.c.h.b16 %v275
  %v1106 = vunpack.c.l.b16 %v276
  %v1107 = vunpack.c.l.b16 %v277
  %v1108 = vunpack.c.h.b16 %v277
  %v1109 = vunpack.c.l.b16 %v278
  %v1110 = vunpack.c.l.b16 %v279
  %v1111 = vunpack.c.h.b16 %v279
  %v1112 = vunpack.c.l.b16 %v280
  %v1113 = vunpack.c.l.b16 %v281
  %v1114 = vunpack.c.h.b16 %v281
  %v1115 = vunpack.c.l.b16 %v282
  %v1116 = vunpack.c.l.b16 %v283
  %v1117 = vunpack.c.h.b16 %v283
  %v1118 = vunpack.c.l.b16 %v284
  %v1119 = vunpack.c.l.b16 %v285
  %v1120 = vunpack.c.h.b16 %v285
  %v1121 = vunpack.c.l.b16 %v286
  %v1122 = vunpack.c.l.b16 %v287
  %v1123 = vunpack.c.h.b16 %v287
  %v1124 = vunpack.c.l.b16 %v288
  %v1125 = vunpack.c.l.b16 %v289
  %v1126 = vunpack.c.h.b16 %v289
  %v1127 = vunpack.c.l.b16 %v290
  %v1128 = vunpack.c.l.b16 %v291
  %v1129 = vunpack.c.h.b16 %v291
  %v1130 = vunpack.c.l.b16 %v292
  %v1131 = vunpack.c.l.b16 %v293
  %v1132 = vunpack.c.h.b16 %v293
  %v1133 = vunpack.c.l.b16 %v294
  %v1134 = vunpack.c.l.b16 %v295
  %v1135 = vunpack.c.h.b16 %v295
  %v1136 = vunpack.c.l.b16 %v296
  %v1137 = vunpack.c.l.b16 %v297
  %v1138 = vunpack.c.h.b16 %v297
  %v1139 = vunpack.c.l.b16 %v298
  %v1140 = vunpack.c.l.b16 %v299
  %v1141 = vunpack.c.h.b16 %v299
  %v1142 = vunpack.c.l.b16 %v300
  %v1143 = vunpack.c.l.b16 %v301
  %v1144 = vunpack.c.h.b16 %v301
  %v1145 = vunpack.c.l.b16 %v302
  %v1146 = vunpack.c.l.b16 %v303
  %v1147 = vunpack.c.h.b16 %v303
  %v1148 = vunpack.c.l.b16 %v304
  %v1149 = vunpack.c.l.b16 %v305
  %v1150 = vunpack.c.h.b16 %v305
  %v1151 = vunpack.c.l.b16 %v306
  %v1152 = vunpack.c.l.b16 %v307
  %v1153 = vunpack.c.h.b16 %v307
  %v1154 = vunpack.c.l.b16 %v308
  %v1155 = vunpack.c.l.b16 %v309
  %v1156 = vunpack.c.h.b16 %v309
  %v1157 = vunpack.c.l.b16 %v310
  %v1158 = vunpack.c.l.b16 %v311
  %v1159 = vunpack.c.h.b16 %v311
  %v1160 = vunpack.c.l.b16 %v312
  %v1161 = vunpack.c.l.b16 %v313
  %v1162 = vunpack.c.h.b16 %v313
  %v1163 = vunpack.c.l.b16 %v314
  %v1164 = vunpack.c.l.b16 %v315
  %v1165 = vunpack.c.h.b16 %v315
  %v1166 = vunpack.c.l.b16 %v316
  %v1167 = vunpack.c.l.b16 %v317
  %v1168 = vunpack.c.h.b16 %v317
  %v1169 = vunpack.c.l.b16 %v318
  %v1170 = vunpack.c.l.b16 %v319
  %v1171 = vunpack.c.h.b16 %v319
  %v1172 = vunpack.c.l.b16 %v320
  %v1173 = vunpack.c.l.b16 %v321
  %v1174 = vunpack.c.h.b16 %v321
  %v1175 = vunpack.c.l.b16 %v322
  %v1176 = vunpack.c.l.b16 %v323
  %v1177 = vunpack.c.h.b16 %v323
  %v1178 = vunpack.c.l.b16 %v324
  %v1179 = vunpack.c.l.b16 %v325
  %v1180 = vunpack.c.h.b16 %v325
  %v1181 = vunpack.c.l.b16 %v326
  %v1182 = vunpack.c.l.b16 %v327
  %v1183 = vunpack.c.h.b16 %v327
  %v1184 = vunpack.c.l.b16 %v328
  %v1185 = vunpack.c.l.b16 %v329
  %v1186 = vunpack.c.h.b16 %v329
  %v1187 = vunpack.c.l.b16 %v330
  %v1188 = vunpack.c.l.b16 %v331
  %v1189 = vunpack.c.h.b16 %v331
  %v1190 = vunpack.c.l.b16 %v332
  %v1191 = vunpack.c.l.b16 %v333
  %v1192 = vunpack.c.h.b16 %v333
  %v1193 = vunpack.c.l.b16 %v334
  %v1194 = vunpack.c.l.b16 %v335
  %v1195 = vunpack.c.h.b16 %v335
  %v1196 = vunpack.c.l.b16 %v336
  %v1197 = vunpack.c.l.b16 %v337
  %v1198 = vunpack.c.h.b16 %v337
  %v1199 = vunpack.c.l.b16 %v338
  %v1200 = vunpack.c.l.b16 %v339
  %v1201 = vunpack.c.h.b16 %v339
  %v1202 = vunpack.c.l.b16 %v340
  %v1203 = vunpack.c.l.b16 %v341
  %v1204 = vunpack.c.h.b16 %v341
  %v1205 = vunpack.c.l.b16 %v342
  %v1206 = vunpack.c.l.b16 %v343
  %v1207 = vunpack.c.h.b16 %v343
  %v1208 = vunpack.c.l.b16 %v344
  %v1209 = vunpack.c.l.b16 %v345
  %v1210 = vunpack.c.h.b16 %v345
  %v1211 = vunpack.c.l.b16 %v346
  %v1212 = vunpack.c.l.b16 %v347
  %v1213 = vunpack.c.h.b16 %v347
  %v1214 = vunpack.c.l.b16 %v348
  %v1215 = vunpack.c.l.b16 %v349
  %v1216 = vunpack.c.h.b16 %v349
  %v1217 = vunpack.c.l.b16 %v350
  %v1218 = vpack.c.b16 %v741, %v738
  %v1219 = vpack.c.b16 %v742, %v739
  %v1220 = vpack.c.b16 %v743, %v740
  %v1221 = vpack.c.b16 %v747, %v744
  %v1222 = vpack.c.b16 %v748, %v745
  %v1223 = vpack.c.b16 %v749, %v746
  %v1224 = vpack.c.b16 %v753, %v750
  %v1225 = vpack.c.b16 %v754, %v751
  %v1226 = vpack.c.b16 %v755, %v752
  %v1227 = vpack.c.b16 %v759, %v756
  %v1228 = vpack.c.b16 %v760, %v757
  %v1229 = vpack.c.b16 %v761, %v758
  %v1230 = vpack.c.b16 %v765, %v762
  %v1231 = vpack.c.b16 %v766, %v763
  %v1232 = vpack.c.b16 %v767, %v764
  %v1233 = vpack.c.b16 %v771, %v768
  %v1234 = vpack.c.b16 %v772, %v769
  %v1235 = vpack.c.b16 %v773, %v770
  %v1236 = vpack.c.b16 %v777, %v774
  %v1237 = vpack.c.b16 %v778, %v775
  %v1238 = vpack.c.b16 %v779, %v776
  %v1239 = vpack.c.b16 %v783, %v780
  %v1240 = vpack.c.b16 %v784, %v781
  %v1241 = vpack.c.b16 %v785, %v782
  %v1242 = vpack.c.b16 %v789, %v786
  %v1243 = vpack.c.b16 %v790, %v787
  %v1244 = vpack.c.b16 %v791, %v788
  %v1245 = vpack.c.b16 %v795, %v792
  %v1246 = vpack.c.b16 %v796, %v793
  %v1247 = vpack.c.b16 %v797, %v794
  %v1248 = vpack.c.b16 %v801, %v798
  %v1249 = vpack.c.b16 %v802, %v799
  %v1250 = vpack.c.b16 %v803, %v800
  %v1251 = vpack.c.b16 %v807, %v804
  %v1252 = vpack.c.b16 %v808, %v805
  %v1253 = vpack.c.b16 %v809, %v806
  %v1254 = vpack.c.b16 %v813, %v810
  %v1255 = vpack.c.b16 %v814, %v811
  %v1256 = vpack.c.b16 %v815, %v812
  %v1257 = vpack.c.b16 %v819, %v816
  %v1258 = vpack.c.b16 %v820, %v817
  %v1259 = vpack.c.b16 %v821, %v818
  %v1260 = vpack.c.b16 %v825, %v822
  %v1261 = vpack.c.b16 %v826, %v823
  %v1262 = vpack.c.b16 %v827, %v824
  %v1263 = vpack.c.b16 %v831, %v828
  %v1264 = vpack.c.b16 %v832, %v829
  %v1265 = vpack.c.b16 %v833, %v830
  %v1266 = vpack.c.b16 %v837, %v834
  %v1267 = vpack.c.b16 %v838, %v835
  %v1268 = vpack.c.b16 %v839, %v836
  %v1269 = vpack.c.b16 %v843, %v840
  %v1270 = vpack.c.b16 %v844, %v841
  %v1271 = vpack.c.b16 %v845, %v842
  %v1272 = vpack.c.b16 %v849, %v846
  %v1273 = vpack.c.b16 %v850, %v847
  %v1274 = vpack.c.b16 %v851, %v848
  %v1275 = vpack.c.b16 %v855, %v852
  %v1276 = vpack.c.b16 %v856, %v853
  %v1277 = vpack.c.b16 %v857, %v854
  %v1278 = vpack.c.b16 %v861, %v858
  %v1279 = vpack.c.b16 %v862, %v859
  %v1280 = vpack.c.b16 %v863, %v860
  %v1281 = vpack.c.b16 %v867, %v864
  %v1282 = vpack.c.b16 %v868, %v865
  %v1283 = vpack.c.b16 %v869, %v866
  %v1284 = vpack.c.b16 %v873, %v870
  %v1285 = vpack.c.b16 %v874, %v871
  %v1286 = vpack.c.b16 %v875, %v872
  %v1287 = vpack.c.b16 %v879, %v876
  %v1288 = vpack.c.b16 %v880, %v877
  %v1289 = vpack.c.b16 %v881, %v878
  %v1290 = vpack.c.b16 %v885, %v882
  %v1291 = vpack.c.b16 %v886, %v883
  %v1292 = vpack.c.b16 %v887, %v884
  %v1293 = vpack.c.b16 %v891, %v888
  %v1294 = vpack.c.b16 %v892, %v889
  %v1295 = vpack.c.b16 %v893, %v890
  %v1296 = vpack.c.b16 %v897, %v894
  %v1297 = vpack.c.b16 %v898, %v895
  %v1298 = vpack.c.b16 %v899, %v896
  %v1299 = vpack.c.b16 %v903, %v900
  %v1300 = vpack.c.b16 %v904, %v901
  %v1301 = vpack.c.b16 %v905, %v902
  %v1302 = vpack.c.b16 %v909, %v906
  %v1303 = vpack.c.b16 %v910, %v907
  %v1304 = vpack.c.b16 %v911, %v908
  %v1305 = vpack.c.b16 %v915, %v912
  %v1306 = vpack.c.b16 %v916, %v913
  %v1307 = vpack.c.b16 %v917, %v914
  %v1308 = vpack.c.b16 %v921, %v918
  %v1309 = vpack.c.b16 %v922, %v919
  %v1310 = vpack.c.b16 %v923, %v920
  %v1311 = vpack.c.b16 %v927, %v924
  %v1312 = vpack.c.b16 %v928, %v925
  %v1313 = vpack.c.b16 %v929, %v926
  %v1314 = vpack.c.b16 %v933, %v930
  %v1315 = vpack.c.b16 %v934, %v931
  %v1316 = vpack.c.b16 %v935, %v932
  %v1317 = vpack.c.b16 %v939, %v936
  %v1318 = vpack.c.b16 %v940, %v937
  %v1319 = vpack.c.b16 %v941, %v938
  %v1320 = vpack.c.b16 %v945, %v942
  %v1321 = vpack.c.b16 %v946, %v943
  %v1322 = vpack.c.b16 %v947, %v944
  %v1323 = vpack.c.b16 %v951, %v948
  %v1324 = vpack.c.b16 %v952, %v949
  %v1325 = vpack.c.b16 %v953, %v950
  %v1326 = vpack.c.b16 %v957, %v954
  %v1327 = vpack.c.b16 %v958, %v955
  %v1328 = vpack.c.b16 %v959, %v956
  %v1329 = vpack.c.b16 %v963, %v960
  %v1330 = vpack.c.b16 %v964, %v961
  %v1331 = vpack.c.b16 %v965, %v962
  %v1332 = vpack.c.b16 %v969, %v966
  %v1333 = vpack.c.b16 %v970, %v967
  %v1334 = vpack.c.b16 %v971, %v968
  %v1335 = vpack.c.b16 %v975, %v972
  %v1336 = vpack.c.b16 %v976, %v973
  %v1337 = vpack.c.b16 %v977, %v974
  %v1338 = vpack.c.b16 %v981, %v978
  %v1339 = vpack.c.b16 %v982, %v979
  %v1340 = vpack.c.b16 %v983, %v980
  %v1341 = vpack.c.b16 %v987, %v984
  %v1342 = vpack.c.b16 %v988, %v985
  %v1343 = vpack.c.b16 %v989, %v986
  %v1344 = vpack.c.b16 %v993, %v990
  %v1345 = vpack.c.b16 %v994, %v991
  %v1346 = vpack.c.b16 %v995, %v992
  %v1347 = vpack.c.b16 %v999, %v996
  %v1348 = vpack.c.b16 %v1000, %v997
  %v1349 = vpack.c.b16 %v1001, %v998
  %v1350 = vpack.c.b16 %v1005, %v1002
  %v1351 = vpack.c.b16 %v1006, %v1003
  %v1352 = vpack.c.b16 %v1007, %v1004
  %v1353 = vpack.c.b16 %v1011, %v1008
  %v1354 = vpack.c.b16 %v1012, %v1009
  %v1355 = vpack.c.b16 %v1013, %v1010
  %v1356 = vpack.c.b16 %v1017, %v1014
  %v1357 = vpack.c.b16 %v1018, %v1015
  %v1358 = vpack.c.b16 %v1019, %v1016
  %v1359 = vpack.c.b16 %v1023, %v1020
  %v1360 = vpack.c.b16 %v1024, %v1021
  %v1361 = vpack.c.b16 %v1025, %v1022
  %v1362 = vpack.c.b16 %v1029, %v1026
  %v1363 = vpack.c.b16 %v1030, %v1027
  %v1364 = vpack.c.b16 %v1031, %v1028
  %v1365 = vpack.c.b16 %v1035, %v1032
  %v1366 = vpack.c.b16 %v1036, %v1033
  %v1367 = vpack.c.b16 %v1037, %v1034
  %v1368 = vpack.c.b16 %v1041, %v1038
  %v1369 = vpack.c.b16 %v1042, %v1039
  %v1370 = vpack.c.b16 %v1043, %v1040
  %v1371 = vpack.c.b16 %v1047, %v1044
  %v1372 = vpack.c.b16 %v1048, %v1045
  %v1373 = vpack.c.b16 %v1049, %v1046
  %v1374 = vpack.c.b16 %v1053, %v1050
  %v1375 = vpack.c.b16 %v1054, %v1051
  %v1376 = vpack.c.b16 %v1055, %v1052
  %v1377 = vpack.c.b16 %v1059, %v1056
  %v1378 = vpack.c.b16 %v1060, %v1057
  %v1379 = vpack.c.b16 %v1061, %v1058
  %v1380 = vpack.c.b16 %v1065, %v1062
  %v1381 = vpack.c.b16 %v1066, %v1063
  %v1382 = vpack.c.b16 %v1067, %v1064
  %v1383 = vpack.c.b16 %v1071, %v1068
  %v1384 = vpack.c.b16 %v1072, %v1069
  %v1385 = vpack.c.b16 %v1073, %v1070
  %v1386 = vpack.c.b16 %v1077, %v1074
  %v1387 = vpack.c.b16 %v1078, %v1075
  %v1388 = vpack.c.b16 %v1079, %v1076
  %v1389 = vpack.c.b16 %v1083, %v1080
  %v1390 = vpack.c.b16 %v1084, %v1081
  %v1391 = vpack.c.b16 %v1085, %v1082
  %v1392 = vpack.c.b16 %v1089, %v1086
  %v1393 = vpack.c.b16 %v1090, %v1087
  %v1394 = vpack.c.b16 %v1091, %v1088
  %v1395 = vpack.c.b16 %v1095, %v1092
  %v1396 = vpack.c.b16 %v1096, %v1093
  %v1397 = vpack.c.b16 %v1097, %v1094
  %v1398 = vpack.c.b16 %v1101, %v1098
  %v1399 = vpack.c.b16 %v1102, %v1099
  %v1400 = vpack.c.b16 %v1103, %v1100
  %v1401 = vpack.c.b16 %v1107, %v1104
  %v1402 = vpack.c.b16 %v1108, %v1105
  %v1403 = vpack.c.b16 %v1109, %v1106
  %v1404 = vpack.c.b16 %v1113, %v1110
  %v1405 = vpack.c.b16 %v1114, %v1111
  %v1406 = vpack.c.b16 %v1115, %v1112
  %v1407 = vpack.c.b16 %v1119, %v1116
  %v1408 = vpack.c.b16 %v1120, %v1117
  %v1409 = vpack.c.b16 %v1121, %v1118
  %v1410 = vpack.c.b16 %v1125, %v1122
  %v1411 = vpack.c.b16 %v1126, %v1123
  %v1412 = vpack.c.b16 %v1127, %v1124
  %v1413 = vpack.c.b16 %v1131, %v1128
  %v1414 = vpack.c.b16 %v1132, %v1129
  %v1415 = vpack.c.b16 %v1133, %v1130
  %v1416 = vpack.c.b16 %v1137, %v1134
  %v1417 = vpack.c.b16 %v1138, %v1135
  %v1418 = vpack.c.b16 %v1139, %v1136
  %v1419 = vpack.c.b16 %v1143, %v1140
  %v1420 = vpack.c.b16 %v1144, %v1141
  %v1421 = vpack.c.b16 %v1145, %v1142
  %v1422 = vpack.c.b16 %v1149, %v1146
  %v1423 = vpack.c.b16 %v1150, %v1147
  %v1424 = vpack.c.b16 %v1151, %v1148
  %v1425 = vpack.c.b16 %v1155, %v1152
  %v1426 = vpack.c.b16 %v1156, %v1153
  %v1427 = vpack.c.b16 %v1157, %v1154
  %v1428 = vpack.c.b16 %v1161, %v1158
  %v1429 = vpack.c.b16 %v1162, %v1159
  %v1430 = vpack.c.b16 %v1163, %v1160
  %v1431 = vpack.c.b16 %v1167, %v1164
  %v1432 = vpack.c.b16 %v1168, %v1165
  %v1433 = vpack.c.b16 %v1169, %v1166
  %v1434 = vpack.c.b16 %v1173, %v1170
  %v1435 = vpack.c.b16 %v1174, %v1171
  %v1436 = vpack.c.b16 %v1175, %v1172
  %v1437 = vpack.c.b16 %v1179, %v1176
  %v1438 = vpack.c.b16 %v1180, %v1177
  %v1439 = vpack.c.b16 %v1181, %v1178
  %v1440 = vpack.c.b16 %v1185, %v1182
  %v1441 = vpack.c.b16 %v1186, %v1183
  %v1442 = vpack.c.b16 %v1187, %v1184
  %v1443 = vpack.c.b16 %v1191, %v1188
  %v1444 = vpack.c.b16 %v1192, %v1189
  %v1445 = vpack.c.b16 %v1193, %v1190
  %v1446 = vpack.c.b16 %v1197, %v1194
  %v1447 = vpack.c.b16 %v1198, %v1195
  %v1448 = vpack.c.b16 %v1199, %v1196
  %v1449 = vpack.c.b16 %v1203, %v1200
  %v1450 = vpack.c.b16 %v1204, %v1201
  %v1451 = vpack.c.b16 %v1205, %v1202
  %v1452 = vpack.c.b16 %v1209, %v1206
  %v1453 = vpack.c.b16 %v1210, %v1207
  %v1454 = vpack.c.b16 %v1211, %v1208
  %v1455 = vpack.c.b16 %v1215, %v1212
  %v1456 = vpack.c.b16 %v1216, %v1213
  %v1457 = vpack.c.b16 %v1217, %v1214
  %1698 = vmatprep.subr.bf16.mxu0 %v1240
  %1699 = vmatpush1.bf16.msra.mxu0 %v1239
  %1700 = vmatprep.subr.bf16.mxu0 %v1237
  %1701 = vmatpush1.bf16.msra.mxu0 %v1236
  %1702 = vmatprep.subr.bf16.mxu0 %v1234
  %1703 = vmatpush1.bf16.msra.mxu0 %v1233
  %1704 = vmatprep.subr.bf16.mxu0 %v1231
  %1705 = vmatpush1.bf16.msra.mxu0 %v1230
  %1706 = vmatprep.subr.bf16.mxu0 %v1228
  %1707 = vmatpush1.bf16.msra.mxu0 %v1227
  %1708 = vmatprep.subr.bf16.mxu0 %v1225
  %1709 = vmatpush1.bf16.msra.mxu0 %v1224
  %1710 = vmatprep.subr.bf16.mxu0 %v1222
  %1711 = vmatpush1.bf16.msra.mxu0 %v1221
  %1712 = vmatprep.subr.bf16.mxu0 %v1219
  %1713 = vmatpush1.bf16.msra.mxu0 %v1218
  %1714 = vmatprep.subr.bf16.mxu0 %v1264
  %1715 = vmatpush2.bf16.msra.mxu0 %v1263
  %1716 = vmatprep.subr.bf16.mxu0 %v1261
  %1717 = vmatpush2.bf16.msra.mxu0 %v1260
  %1718 = vmatprep.subr.bf16.mxu0 %v1258
  %1719 = vmatpush2.bf16.msra.mxu0 %v1257
  %1720 = vmatprep.subr.bf16.mxu0 %v1255
  %1721 = vmatpush2.bf16.msra.mxu0 %v1254
  %1722 = vmatprep.subr.bf16.mxu0 %v1252
  %1723 = vmatpush2.bf16.msra.mxu0 %v1251
  %1724 = vmatprep.subr.bf16.mxu0 %v1249
  %1725 = vmatpush2.bf16.msra.mxu0 %v1248
  %1726 = vmatprep.subr.bf16.mxu0 %v1246
  %1727 = vmatpush2.bf16.msra.mxu0 %v1245
  %1728 = vmatprep.subr.bf16.mxu0 %v1243
  %1729 = vmatpush2.bf16.msra.mxu0 %v1242
  %1730 = vmatprep.mubr.bf16.mxu0 %v399
  %1731 = vmatmul.mubr.bf16.gmra.mxu0 %v398
  %v1732 = vpop.f32.mrf.mxu0
  %v1733 = vadd.f32 %v356, %v1732
  %v1734 = vpop.f32.mrf.mxu0
  %v1735 = vadd.f32 %v360, %v1734
  %v1736 = vpop.f32.mrf.mxu0
  %v1737 = vadd.f32 %v356, %v1736
  %v1738 = vpop.f32.mrf.mxu0
  %v1739 = vadd.f32 %v360, %v1738
  %1740 = vdwg.mxu0
  %1741 = vmatprep.subr.bf16.mxu0 %v1288
  %1742 = vmatpush1.bf16.msra.mxu0 %v1287
  %1743 = vmatprep.subr.bf16.mxu0 %v1285
  %1744 = vmatpush1.bf16.msra.mxu0 %v1284
  %1745 = vmatprep.subr.bf16.mxu0 %v1282
  %1746 = vmatpush1.bf16.msra.mxu0 %v1281
  %1747 = vmatprep.subr.bf16.mxu0 %v1279
  %1748 = vmatpush1.bf16.msra.mxu0 %v1278
  %1749 = vmatprep.subr.bf16.mxu0 %v1276
  %1750 = vmatpush1.bf16.msra.mxu0 %v1275
  %1751 = vmatprep.subr.bf16.mxu0 %v1273
  %1752 = vmatpush1.bf16.msra.mxu0 %v1272
  %1753 = vmatprep.subr.bf16.mxu0 %v1270
  %1754 = vmatpush1.bf16.msra.mxu0 %v1269
  %1755 = vmatprep.subr.bf16.mxu0 %v1267
  %1756 = vmatpush1.bf16.msra.mxu0 %v1266
  %1757 = vmatprep.subr.bf16.mxu0 %v1312
  %1758 = vmatpush2.bf16.msra.mxu0 %v1311
  %1759 = vmatprep.subr.bf16.mxu0 %v1309
  %1760 = vmatpush2.bf16.msra.mxu0 %v1308
  %1761 = vmatprep.subr.bf16.mxu0 %v1306
  %1762 = vmatpush2.bf16.msra.mxu0 %v1305
  %1763 = vmatprep.subr.bf16.mxu0 %v1303
  %1764 = vmatpush2.bf16.msra.mxu0 %v1302
  %1765 = vmatprep.subr.bf16.mxu0 %v1300
  %1766 = vmatpush2.bf16.msra.mxu0 %v1299
  %1767 = vmatprep.subr.bf16.mxu0 %v1297
  %1768 = vmatpush2.bf16.msra.mxu0 %v1296
  %1769 = vmatprep.subr.bf16.mxu0 %v1294
  %1770 = vmatpush2.bf16.msra.mxu0 %v1293
  %1771 = vmatprep.subr.bf16.mxu0 %v1291
  %1772 = vmatpush2.bf16.msra.mxu0 %v1290
  %1773 = vmatprep.mubr.bf16.mxu0 %v401
  %1774 = vmatmul.mubr.bf16.gmra.mxu0 %v400
  %v1775 = vpop.f32.mrf.mxu0
  %v1776 = vadd.f32 %v1733, %v1775
  %v1777 = vpop.f32.mrf.mxu0
  %v1778 = vadd.f32 %v1735, %v1777
  %v1779 = vpop.f32.mrf.mxu0
  %v1780 = vadd.f32 %v1737, %v1779
  %v1781 = vpop.f32.mrf.mxu0
  %v1782 = vadd.f32 %v1739, %v1781
  %1783 = vdwg.mxu0
  %1784 = vmatprep.subr.bf16.mxu0 %v1336
  %1785 = vmatpush1.bf16.msra.mxu0 %v1335
  %1786 = vmatprep.subr.bf16.mxu0 %v1333
  %1787 = vmatpush1.bf16.msra.mxu0 %v1332
  %1788 = vmatprep.subr.bf16.mxu0 %v1330
  %1789 = vmatpush1.bf16.msra.mxu0 %v1329
  %1790 = vmatprep.subr.bf16.mxu0 %v1327
  %1791 = vmatpush1.bf16.msra.mxu0 %v1326
  %1792 = vmatprep.subr.bf16.mxu0 %v1324
  %1793 = vmatpush1.bf16.msra.mxu0 %v1323
  %1794 = vmatprep.subr.bf16.mxu0 %v1321
  %1795 = vmatpush1.bf16.msra.mxu0 %v1320
  %1796 = vmatprep.subr.bf16.mxu0 %v1318
  %1797 = vmatpush1.bf16.msra.mxu0 %v1317
  %1798 = vmatprep.subr.bf16.mxu0 %v1315
  %1799 = vmatpush1.bf16.msra.mxu0 %v1314
  %1800 = vmatprep.subr.bf16.mxu0 %v1360
  %1801 = vmatpush2.bf16.msra.mxu0 %v1359
  %1802 = vmatprep.subr.bf16.mxu0 %v1357
  %1803 = vmatpush2.bf16.msra.mxu0 %v1356
  %1804 = vmatprep.subr.bf16.mxu0 %v1354
  %1805 = vmatpush2.bf16.msra.mxu0 %v1353
  %1806 = vmatprep.subr.bf16.mxu0 %v1351
  %1807 = vmatpush2.bf16.msra.mxu0 %v1350
  %1808 = vmatprep.subr.bf16.mxu0 %v1348
  %1809 = vmatpush2.bf16.msra.mxu0 %v1347
  %1810 = vmatprep.subr.bf16.mxu0 %v1345
  %1811 = vmatpush2.bf16.msra.mxu0 %v1344
  %1812 = vmatprep.subr.bf16.mxu0 %v1342
  %1813 = vmatpush2.bf16.msra.mxu0 %v1341
  %1814 = vmatprep.subr.bf16.mxu0 %v1339
  %1815 = vmatpush2.bf16.msra.mxu0 %v1338
  %1816 = vmatprep.mubr.bf16.mxu0 %v403
  %1817 = vmatmul.mubr.bf16.gmra.mxu0 %v402
  %v1818 = vpop.f32.mrf.mxu0
  %v1819 = vadd.f32 %v1776, %v1818
  %v1820 = vpop.f32.mrf.mxu0
  %v1821 = vadd.f32 %v1778, %v1820
  %v1822 = vpop.f32.mrf.mxu0
  %v1823 = vadd.f32 %v1780, %v1822
  %v1824 = vpop.f32.mrf.mxu0
  %v1825 = vadd.f32 %v1782, %v1824
  %1826 = vdwg.mxu0
  %1827 = vmatprep.subr.bf16.mxu0 %v1384
  %1828 = vmatpush1.bf16.msra.mxu0 %v1383
  %1829 = vmatprep.subr.bf16.mxu0 %v1381
  %1830 = vmatpush1.bf16.msra.mxu0 %v1380
  %1831 = vmatprep.subr.bf16.mxu0 %v1378
  %1832 = vmatpush1.bf16.msra.mxu0 %v1377
  %1833 = vmatprep.subr.bf16.mxu0 %v1375
  %1834 = vmatpush1.bf16.msra.mxu0 %v1374
  %1835 = vmatprep.subr.bf16.mxu0 %v1372
  %1836 = vmatpush1.bf16.msra.mxu0 %v1371
  %1837 = vmatprep.subr.bf16.mxu0 %v1369
  %1838 = vmatpush1.bf16.msra.mxu0 %v1368
  %1839 = vmatprep.subr.bf16.mxu0 %v1366
  %1840 = vmatpush1.bf16.msra.mxu0 %v1365
  %1841 = vmatprep.subr.bf16.mxu0 %v1363
  %1842 = vmatpush1.bf16.msra.mxu0 %v1362
  %1843 = vmatprep.subr.bf16.mxu0 %v1408
  %1844 = vmatpush2.bf16.msra.mxu0 %v1407
  %1845 = vmatprep.subr.bf16.mxu0 %v1405
  %1846 = vmatpush2.bf16.msra.mxu0 %v1404
  %1847 = vmatprep.subr.bf16.mxu0 %v1402
  %1848 = vmatpush2.bf16.msra.mxu0 %v1401
  %1849 = vmatprep.subr.bf16.mxu0 %v1399
  %1850 = vmatpush2.bf16.msra.mxu0 %v1398
  %1851 = vmatprep.subr.bf16.mxu0 %v1396
  %1852 = vmatpush2.bf16.msra.mxu0 %v1395
  %1853 = vmatprep.subr.bf16.mxu0 %v1393
  %1854 = vmatpush2.bf16.msra.mxu0 %v1392
  %1855 = vmatprep.subr.bf16.mxu0 %v1390
  %1856 = vmatpush2.bf16.msra.mxu0 %v1389
  %1857 = vmatprep.subr.bf16.mxu0 %v1387
  %1858 = vmatpush2.bf16.msra.mxu0 %v1386
  %1859 = vmatprep.mubr.bf16.mxu0 %v405
  %1860 = vmatmul.mubr.bf16.gmra.mxu0 %v404
  %v1861 = vpop.f32.mrf.mxu0
  %v1862 = vadd.f32 %v1819, %v1861
  %v1863 = vpop.f32.mrf.mxu0
  %v1864 = vadd.f32 %v1821, %v1863
  %v1865 = vpop.f32.mrf.mxu0
  %v1866 = vadd.f32 %v1823, %v1865
  %v1867 = vpop.f32.mrf.mxu0
  %v1868 = vadd.f32 %v1825, %v1867
  %1869 = vdwg.mxu0
  %1870 = vmatprep.subr.bf16.mxu0 %v1432
  %1871 = vmatpush1.bf16.msra.mxu0 %v1431
  %1872 = vmatprep.subr.bf16.mxu0 %v1429
  %1873 = vmatpush1.bf16.msra.mxu0 %v1428
  %1874 = vmatprep.subr.bf16.mxu0 %v1426
  %1875 = vmatpush1.bf16.msra.mxu0 %v1425
  %1876 = vmatprep.subr.bf16.mxu0 %v1423
  %1877 = vmatpush1.bf16.msra.mxu0 %v1422
  %1878 = vmatprep.subr.bf16.mxu0 %v1420
  %1879 = vmatpush1.bf16.msra.mxu0 %v1419
  %1880 = vmatprep.subr.bf16.mxu0 %v1417
  %1881 = vmatpush1.bf16.msra.mxu0 %v1416
  %1882 = vmatprep.subr.bf16.mxu0 %v1414
  %1883 = vmatpush1.bf16.msra.mxu0 %v1413
  %1884 = vmatprep.subr.bf16.mxu0 %v1411
  %1885 = vmatpush1.bf16.msra.mxu0 %v1410
  %1886 = vmatprep.subr.bf16.mxu0 %v1456
  %1887 = vmatpush2.bf16.msra.mxu0 %v1455
  %1888 = vmatprep.subr.bf16.mxu0 %v1453
  %1889 = vmatpush2.bf16.msra.mxu0 %v1452
  %1890 = vmatprep.subr.bf16.mxu0 %v1450
  %1891 = vmatpush2.bf16.msra.mxu0 %v1449
  %1892 = vmatprep.subr.bf16.mxu0 %v1447
  %1893 = vmatpush2.bf16.msra.mxu0 %v1446
  %1894 = vmatprep.subr.bf16.mxu0 %v1444
  %1895 = vmatpush2.bf16.msra.mxu0 %v1443
  %1896 = vmatprep.subr.bf16.mxu0 %v1441
  %1897 = vmatpush2.bf16.msra.mxu0 %v1440
  %1898 = vmatprep.subr.bf16.mxu0 %v1438
  %1899 = vmatpush2.bf16.msra.mxu0 %v1437
  %1900 = vmatprep.subr.bf16.mxu0 %v1435
  %1901 = vmatpush2.bf16.msra.mxu0 %v1434
  %1902 = vmatprep.mubr.bf16.mxu0 %v407
  %1903 = vmatmul.mubr.bf16.gmra.mxu0 %v406
  %v1904 = vpop.f32.mrf.mxu0
  %v1905 = vadd.f32 %v1862, %v1904
  %v1906 = vpop.f32.mrf.mxu0
  %v1907 = vadd.f32 %v1864, %v1906
  %v1908 = vpop.f32.mrf.mxu0
  %v1909 = vadd.f32 %v1866, %v1908
  %v1910 = vpop.f32.mrf.mxu0
  %v1911 = vadd.f32 %v1868, %v1910
  %1912 = vdwg.mxu0
  %1913 = vmatprep.subr.bf16.mxu0 0
  %1914 = vmatpush1.bf16.msra.mxu0 %v1241
  %1915 = vmatprep.subr.bf16.mxu0 0
  %1916 = vmatpush1.bf16.msra.mxu0 %v1238
  %1917 = vmatprep.subr.bf16.mxu0 0
  %1918 = vmatpush1.bf16.msra.mxu0 %v1235
  %1919 = vmatprep.subr.bf16.mxu0 0
  %1920 = vmatpush1.bf16.msra.mxu0 %v1232
  %1921 = vmatprep.subr.bf16.mxu0 0
  %1922 = vmatpush1.bf16.msra.mxu0 %v1229
  %1923 = vmatprep.subr.bf16.mxu0 0
  %1924 = vmatpush1.bf16.msra.mxu0 %v1226
  %1925 = vmatprep.subr.bf16.mxu0 0
  %1926 = vmatpush1.bf16.msra.mxu0 %v1223
  %1927 = vmatprep.subr.bf16.mxu0 0
  %1928 = vmatpush1.bf16.msra.mxu0 %v1220
  %1929 = vmatprep.subr.bf16.mxu0 0
  %1930 = vmatpush2.bf16.msra.mxu0 %v1265
  %1931 = vmatprep.subr.bf16.mxu0 0
  %1932 = vmatpush2.bf16.msra.mxu0 %v1262
  %1933 = vmatprep.subr.bf16.mxu0 0
  %1934 = vmatpush2.bf16.msra.mxu0 %v1259
  %1935 = vmatprep.subr.bf16.mxu0 0
  %1936 = vmatpush2.bf16.msra.mxu0 %v1256
  %1937 = vmatprep.subr.bf16.mxu0 0
  %1938 = vmatpush2.bf16.msra.mxu0 %v1253
  %1939 = vmatprep.subr.bf16.mxu0 0
  %1940 = vmatpush2.bf16.msra.mxu0 %v1250
  %1941 = vmatprep.subr.bf16.mxu0 0
  %1942 = vmatpush2.bf16.msra.mxu0 %v1247
  %1943 = vmatprep.subr.bf16.mxu0 0
  %1944 = vmatpush2.bf16.msra.mxu0 %v1244
  %1945 = vmatprep.mubr.bf16.mxu0 %v399
  %1946 = vmatmul.mubr.bf16.gmra.mxu0 %v398
  %v1947 = vpop.f32.mrf.mxu0
  %v1948 = vadd.f32 %v364, %v1947
  %v1949 = vpop.f32.mrf.mxu0
  %v1950 = vpop.f32.mrf.mxu0
  %v1951 = vadd.f32 %v364, %v1950
  %v1952 = vpop.f32.mrf.mxu0
  %1953 = vdwg.mxu0
  %1954 = vmatprep.subr.bf16.mxu0 0
  %1955 = vmatpush1.bf16.msra.mxu0 %v1289
  %1956 = vmatprep.subr.bf16.mxu0 0
  %1957 = vmatpush1.bf16.msra.mxu0 %v1286
  %1958 = vmatprep.subr.bf16.mxu0 0
  %1959 = vmatpush1.bf16.msra.mxu0 %v1283
  %1960 = vmatprep.subr.bf16.mxu0 0
  %1961 = vmatpush1.bf16.msra.mxu0 %v1280
  %1962 = vmatprep.subr.bf16.mxu0 0
  %1963 = vmatpush1.bf16.msra.mxu0 %v1277
  %1964 = vmatprep.subr.bf16.mxu0 0
  %1965 = vmatpush1.bf16.msra.mxu0 %v1274
  %1966 = vmatprep.subr.bf16.mxu0 0
  %1967 = vmatpush1.bf16.msra.mxu0 %v1271
  %1968 = vmatprep.subr.bf16.mxu0 0
  %1969 = vmatpush1.bf16.msra.mxu0 %v1268
  %1970 = vmatprep.subr.bf16.mxu0 0
  %1971 = vmatpush2.bf16.msra.mxu0 %v1313
  %1972 = vmatprep.subr.bf16.mxu0 0
  %1973 = vmatpush2.bf16.msra.mxu0 %v1310
  %1974 = vmatprep.subr.bf16.mxu0 0
  %1975 = vmatpush2.bf16.msra.mxu0 %v1307
  %1976 = vmatprep.subr.bf16.mxu0 0
  %1977 = vmatpush2.bf16.msra.mxu0 %v1304
  %1978 = vmatprep.subr.bf16.mxu0 0
  %1979 = vmatpush2.bf16.msra.mxu0 %v1301
  %1980 = vmatprep.subr.bf16.mxu0 0
  %1981 = vmatpush2.bf16.msra.mxu0 %v1298
  %1982 = vmatprep.subr.bf16.mxu0 0
  %1983 = vmatpush2.bf16.msra.mxu0 %v1295
  %1984 = vmatprep.subr.bf16.mxu0 0
  %1985 = vmatpush2.bf16.msra.mxu0 %v1292
  %1986 = vmatprep.mubr.bf16.mxu0 %v401
  %1987 = vmatmul.mubr.bf16.gmra.mxu0 %v400
  %v1988 = vpop.f32.mrf.mxu0
  %v1989 = vadd.f32 %v1948, %v1988
  %v1990 = vpop.f32.mrf.mxu0
  %v1991 = vpop.f32.mrf.mxu0
  %v1992 = vadd.f32 %v1951, %v1991
  %v1993 = vpop.f32.mrf.mxu0
  %1994 = vdwg.mxu0
  %1995 = vmatprep.subr.bf16.mxu0 0
  %1996 = vmatpush1.bf16.msra.mxu0 %v1337
  %1997 = vmatprep.subr.bf16.mxu0 0
  %1998 = vmatpush1.bf16.msra.mxu0 %v1334
  %1999 = vmatprep.subr.bf16.mxu0 0
  %2000 = vmatpush1.bf16.msra.mxu0 %v1331
  %2001 = vmatprep.subr.bf16.mxu0 0
  %2002 = vmatpush1.bf16.msra.mxu0 %v1328
  %2003 = vmatprep.subr.bf16.mxu0 0
  %2004 = vmatpush1.bf16.msra.mxu0 %v1325
  %2005 = vmatprep.subr.bf16.mxu0 0
  %2006 = vmatpush1.bf16.msra.mxu0 %v1322
  %2007 = vmatprep.subr.bf16.mxu0 0
  %2008 = vmatpush1.bf16.msra.mxu0 %v1319
  %2009 = vmatprep.subr.bf16.mxu0 0
  %2010 = vmatpush1.bf16.msra.mxu0 %v1316
  %2011 = vmatprep.subr.bf16.mxu0 0
  %2012 = vmatpush2.bf16.msra.mxu0 %v1361
  %2013 = vmatprep.subr.bf16.mxu0 0
  %2014 = vmatpush2.bf16.msra.mxu0 %v1358
  %2015 = vmatprep.subr.bf16.mxu0 0
  %2016 = vmatpush2.bf16.msra.mxu0 %v1355
  %2017 = vmatprep.subr.bf16.mxu0 0
  %2018 = vmatpush2.bf16.msra.mxu0 %v1352
  %2019 = vmatprep.subr.bf16.mxu0 0
  %2020 = vmatpush2.bf16.msra.mxu0 %v1349
  %2021 = vmatprep.subr.bf16.mxu0 0
  %2022 = vmatpush2.bf16.msra.mxu0 %v1346
  %2023 = vmatprep.subr.bf16.mxu0 0
  %2024 = vmatpush2.bf16.msra.mxu0 %v1343
  %2025 = vmatprep.subr.bf16.mxu0 0
  %2026 = vmatpush2.bf16.msra.mxu0 %v1340
  %2027 = vmatprep.mubr.bf16.mxu0 %v403
  %2028 = vmatmul.mubr.bf16.gmra.mxu0 %v402
  %v2029 = vpop.f32.mrf.mxu0
  %v2030 = vadd.f32 %v1989, %v2029
  %v2031 = vpop.f32.mrf.mxu0
  %v2032 = vpop.f32.mrf.mxu0
  %v2033 = vadd.f32 %v1992, %v2032
  %v2034 = vpop.f32.mrf.mxu0
  %2035 = vdwg.mxu0
  %2036 = vmatprep.subr.bf16.mxu0 0
  %2037 = vmatpush1.bf16.msra.mxu0 %v1385
  %2038 = vmatprep.subr.bf16.mxu0 0
  %2039 = vmatpush1.bf16.msra.mxu0 %v1382
  %2040 = vmatprep.subr.bf16.mxu0 0
  %2041 = vmatpush1.bf16.msra.mxu0 %v1379
  %2042 = vmatprep.subr.bf16.mxu0 0
  %2043 = vmatpush1.bf16.msra.mxu0 %v1376
  %2044 = vmatprep.subr.bf16.mxu0 0
  %2045 = vmatpush1.bf16.msra.mxu0 %v1373
  %2046 = vmatprep.subr.bf16.mxu0 0
  %2047 = vmatpush1.bf16.msra.mxu0 %v1370
  %2048 = vmatprep.subr.bf16.mxu0 0
  %2049 = vmatpush1.bf16.msra.mxu0 %v1367
  %2050 = vmatprep.subr.bf16.mxu0 0
  %2051 = vmatpush1.bf16.msra.mxu0 %v1364
  %2052 = vmatprep.subr.bf16.mxu0 0
  %2053 = vmatpush2.bf16.msra.mxu0 %v1409
  %2054 = vmatprep.subr.bf16.mxu0 0
  %2055 = vmatpush2.bf16.msra.mxu0 %v1406
  %2056 = vmatprep.subr.bf16.mxu0 0
  %2057 = vmatpush2.bf16.msra.mxu0 %v1403
  %2058 = vmatprep.subr.bf16.mxu0 0
  %2059 = vmatpush2.bf16.msra.mxu0 %v1400
  %2060 = vmatprep.subr.bf16.mxu0 0
  %2061 = vmatpush2.bf16.msra.mxu0 %v1397
  %2062 = vmatprep.subr.bf16.mxu0 0
  %2063 = vmatpush2.bf16.msra.mxu0 %v1394
  %2064 = vmatprep.subr.bf16.mxu0 0
  %2065 = vmatpush2.bf16.msra.mxu0 %v1391
  %2066 = vmatprep.subr.bf16.mxu0 0
  %2067 = vmatpush2.bf16.msra.mxu0 %v1388
  %2068 = vmatprep.mubr.bf16.mxu0 %v405
  %2069 = vmatmul.mubr.bf16.gmra.mxu0 %v404
  %v2070 = vpop.f32.mrf.mxu0
  %v2071 = vadd.f32 %v2030, %v2070
  %v2072 = vpop.f32.mrf.mxu0
  %v2073 = vpop.f32.mrf.mxu0
  %v2074 = vadd.f32 %v2033, %v2073
  %v2075 = vpop.f32.mrf.mxu0
  %2076 = vdwg.mxu0
  %2077 = vmatprep.subr.bf16.mxu0 0
  %2078 = vmatpush1.bf16.msra.mxu0 %v1433
  %2079 = vmatprep.subr.bf16.mxu0 0
  %2080 = vmatpush1.bf16.msra.mxu0 %v1430
  %2081 = vmatprep.subr.bf16.mxu0 0
  %2082 = vmatpush1.bf16.msra.mxu0 %v1427
  %2083 = vmatprep.subr.bf16.mxu0 0
  %2084 = vmatpush1.bf16.msra.mxu0 %v1424
  %2085 = vmatprep.subr.bf16.mxu0 0
  %2086 = vmatpush1.bf16.msra.mxu0 %v1421
  %2087 = vmatprep.subr.bf16.mxu0 0
  %2088 = vmatpush1.bf16.msra.mxu0 %v1418
  %2089 = vmatprep.subr.bf16.mxu0 0
  %2090 = vmatpush1.bf16.msra.mxu0 %v1415
  %2091 = vmatprep.subr.bf16.mxu0 0
  %2092 = vmatpush1.bf16.msra.mxu0 %v1412
  %2093 = vmatprep.subr.bf16.mxu0 0
  %2094 = vmatpush2.bf16.msra.mxu0 %v1457
  %2095 = vmatprep.subr.bf16.mxu0 0
  %2096 = vmatpush2.bf16.msra.mxu0 %v1454
  %2097 = vmatprep.subr.bf16.mxu0 0
  %2098 = vmatpush2.bf16.msra.mxu0 %v1451
  %2099 = vmatprep.subr.bf16.mxu0 0
  %2100 = vmatpush2.bf16.msra.mxu0 %v1448
  %2101 = vmatprep.subr.bf16.mxu0 0
  %2102 = vmatpush2.bf16.msra.mxu0 %v1445
  %2103 = vmatprep.subr.bf16.mxu0 0
  %2104 = vmatpush2.bf16.msra.mxu0 %v1442
  %2105 = vmatprep.subr.bf16.mxu0 0
  %2106 = vmatpush2.bf16.msra.mxu0 %v1439
  %2107 = vmatprep.subr.bf16.mxu0 0
  %2108 = vmatpush2.bf16.msra.mxu0 %v1436
  %2109 = vmatprep.mubr.bf16.mxu0 %v407
  %2110 = vmatmul.mubr.bf16.gmra.mxu0 %v406
  %v2111 = vpop.f32.mrf.mxu0
  %v2112 = vadd.f32 %v2071, %v2111
  %v2113 = vpop.f32.mrf.mxu0
  %v2114 = vpop.f32.mrf.mxu0
  %v2115 = vadd.f32 %v2074, %v2114
  %v2116 = vpop.f32.mrf.mxu0
  %2117 = vdwg.mxu0
  %v2118 = vmax.f32 %v1905, 0.0
  %v2119 = vmax.f32 %v1907, 0.0
  %v2120 = vmax.f32 %v2112, 0.0
  %v2121 = vmax.f32 %v1909, 0.0
  %v2122 = vmax.f32 %v1911, 0.0
  %v2123 = vmax.f32 %v2115, 0.0
  %v2124 = vpack.c.bf16 %v2121, %v2118
  %v2125 = vpack.c.bf16 %v2122, %v2119
  %v2126 = vpack.c.bf16 %v2123, %v2120
  %v2127 = vld [vmem:[%s3] sm:$0xf]
  %v2128 = vld [vmem:[%s3 + $0x4] sm:$0xf]
  %v2129 = vld [vmem:[%s3 + $0x8] sm:$0xf]
  %v2130 = vld [vmem:[%s3 + $0xc] sm:$0xf]
  %v2131 = vld [vmem:[%s3 + $0x10] sm:$0xf]
  %v2132 = vld [vmem:[%s3 + $0x14] sm:$0xf]
  %v2133 = vld [vmem:[%s3 + $0x18] sm:$0xf]
  %v2134 = vld [vmem:[%s3 + $0x1c] sm:$0xf]
  %v2135 = vld [vmem:[%s3 + $0x20] sm:$0xf]
  %v2136 = vld [vmem:[%s3 + $0x24] sm:$0xf]
  %v2137 = vld [vmem:[%s3 + $0x28] sm:$0xf]
  %v2138 = vld [vmem:[%s3 + $0x2c] sm:$0xf]
  %v2139 = vld [vmem:[%s3 + $0x30] sm:$0xf]
  %v2140 = vld [vmem:[%s3 + $0x34] sm:$0xf]
  %v2141 = vld [vmem:[%s3 + $0x38] sm:$0xf]
  %v2142 = vld [vmem:[%s3 + $0x3c] sm:$0xf]
  %v2143 = vld [vmem:[%s3 + $0x40] sm:$0xf]
  %v2144 = vld [vmem:[%s3 + $0x44] sm:$0xf]
  %v2145 = vld [vmem:[%s3 + $0x48] sm:$0xf]
  %v2146 = vld [vmem:[%s3 + $0x4c] sm:$0xf]
  %v2147 = vld [vmem:[%s3 + $0x50] sm:$0xf]
  %v2148 = vld [vmem:[%s3 + $0x54] sm:$0xf]
  %v2149 = vld [vmem:[%s3 + $0x58] sm:$0xf]
  %v2150 = vld [vmem:[%s3 + $0x5c] sm:$0xf]
  %v2151 = vld [vmem:[%s3 + $0x60] sm:$0xf]
  %v2152 = vld [vmem:[%s3 + $0x64] sm:$0xf]
  %v2153 = vld [vmem:[%s3 + $0x68] sm:$0xf]
  %v2154 = vld [vmem:[%s3 + $0x6c] sm:$0xf]
  %v2155 = vld [vmem:[%s3 + $0x70] sm:$0xf]
  %v2156 = vld [vmem:[%s3 + $0x74] sm:$0xf]
  %v2157 = vld [vmem:[%s3 + $0x78] sm:$0xf]
  %v2158 = vld [vmem:[%s3 + $0x7c] sm:$0xf]
  %v2159 = vld [vmem:[%s3 + $0x80] sm:$0xf]
  %v2160 = vld [vmem:[%s3 + $0x84] sm:$0xf]
  %v2161 = vld [vmem:[%s3 + $0x88] sm:$0xf]
  %v2162 = vld [vmem:[%s3 + $0x8c] sm:$0xf]
  %v2163 = vld [vmem:[%s3 + $0x90] sm:$0xf]
  %v2164 = vld [vmem:[%s3 + $0x94] sm:$0xf]
  %v2165 = vld [vmem:[%s3 + $0x98] sm:$0xf]
  %v2166 = vld [vmem:[%s3 + $0x9c] sm:$0xf]
  %v2167 = vld [vmem:[%s3 + $0xa0] sm:$0xf]
  %v2168 = vld [vmem:[%s3 + $0xa4] sm:$0xf]
  %v2169 = vld [vmem:[%s3 + $0xa8] sm:$0xf]
  %v2170 = vld [vmem:[%s3 + $0xac] sm:$0xf]
  %v2171 = vld [vmem:[%s3 + $0xb0] sm:$0xf]
  %v2172 = vld [vmem:[%s3 + $0xb4] sm:$0xf]
  %v2173 = vld [vmem:[%s3 + $0xb8] sm:$0xf]
  %v2174 = vld [vmem:[%s3 + $0xbc] sm:$0xf]
  %v2175 = vld [vmem:[%s4] sm:$0x1]
  %v2177 = vlaneseq
  %v2178 = vshrl.u32 %v2177, 7
  %v2179 = vsub.s32 0, %v2178
  %v2180 = vrot.slane %v2175, %v2179
  %v2230 = vunpack.c.l.b16 %v2127
  %v2231 = vunpack.c.l.b16 %v2128
  %v2232 = vunpack.c.l.b16 %v2129
  %v2233 = vunpack.c.l.b16 %v2130
  %v2234 = vunpack.c.l.b16 %v2131
  %v2235 = vunpack.c.l.b16 %v2132
  %v2236 = vunpack.c.l.b16 %v2133
  %v2237 = vunpack.c.l.b16 %v2134
  %v2238 = vunpack.c.l.b16 %v2135
  %v2239 = vunpack.c.l.b16 %v2136
  %v2240 = vunpack.c.l.b16 %v2137
  %v2241 = vunpack.c.l.b16 %v2138
  %v2242 = vunpack.c.l.b16 %v2139
  %v2243 = vunpack.c.l.b16 %v2140
  %v2244 = vunpack.c.l.b16 %v2141
  %v2245 = vunpack.c.l.b16 %v2142
  %v2246 = vunpack.c.l.b16 %v2143
  %v2247 = vunpack.c.l.b16 %v2144
  %v2248 = vunpack.c.l.b16 %v2145
  %v2249 = vunpack.c.l.b16 %v2146
  %v2250 = vunpack.c.l.b16 %v2147
  %v2251 = vunpack.c.l.b16 %v2148
  %v2252 = vunpack.c.l.b16 %v2149
  %v2253 = vunpack.c.l.b16 %v2150
  %v2254 = vunpack.c.l.b16 %v2151
  %v2255 = vunpack.c.l.b16 %v2152
  %v2256 = vunpack.c.l.b16 %v2153
  %v2257 = vunpack.c.l.b16 %v2154
  %v2258 = vunpack.c.l.b16 %v2155
  %v2259 = vunpack.c.l.b16 %v2156
  %v2260 = vunpack.c.l.b16 %v2157
  %v2261 = vunpack.c.l.b16 %v2158
  %v2262 = vunpack.c.l.b16 %v2159
  %v2263 = vunpack.c.l.b16 %v2160
  %v2264 = vunpack.c.l.b16 %v2161
  %v2265 = vunpack.c.l.b16 %v2162
  %v2266 = vunpack.c.l.b16 %v2163
  %v2267 = vunpack.c.l.b16 %v2164
  %v2268 = vunpack.c.l.b16 %v2165
  %v2269 = vunpack.c.l.b16 %v2166
  %v2270 = vunpack.c.l.b16 %v2167
  %v2271 = vunpack.c.l.b16 %v2168
  %v2272 = vunpack.c.l.b16 %v2169
  %v2273 = vunpack.c.l.b16 %v2170
  %v2274 = vunpack.c.l.b16 %v2171
  %v2275 = vunpack.c.l.b16 %v2172
  %v2276 = vunpack.c.l.b16 %v2173
  %v2277 = vunpack.c.l.b16 %v2174
  %v2278 = vpack.c.b16 %v2231, %v2230
  %v2279 = vpack.c.b16 %v2233, %v2232
  %v2280 = vpack.c.b16 %v2235, %v2234
  %v2281 = vpack.c.b16 %v2237, %v2236
  %v2282 = vpack.c.b16 %v2239, %v2238
  %v2283 = vpack.c.b16 %v2241, %v2240
  %v2284 = vpack.c.b16 %v2243, %v2242
  %v2285 = vpack.c.b16 %v2245, %v2244
  %v2286 = vpack.c.b16 %v2247, %v2246
  %v2287 = vpack.c.b16 %v2249, %v2248
  %v2288 = vpack.c.b16 %v2251, %v2250
  %v2289 = vpack.c.b16 %v2253, %v2252
  %v2290 = vpack.c.b16 %v2255, %v2254
  %v2291 = vpack.c.b16 %v2257, %v2256
  %v2292 = vpack.c.b16 %v2259, %v2258
  %v2293 = vpack.c.b16 %v2261, %v2260
  %v2294 = vpack.c.b16 %v2263, %v2262
  %v2295 = vpack.c.b16 %v2265, %v2264
  %v2296 = vpack.c.b16 %v2267, %v2266
  %v2297 = vpack.c.b16 %v2269, %v2268
  %v2298 = vpack.c.b16 %v2271, %v2270
  %v2299 = vpack.c.b16 %v2273, %v2272
  %v2300 = vpack.c.b16 %v2275, %v2274
  %v2301 = vpack.c.b16 %v2277, %v2276
  %2326 = vmatprep.subr.bf16.mxu0 0
  %2327 = vmatpush1.bf16.msra.mxu0 %v2285
  %2328 = vmatprep.subr.bf16.mxu0 0
  %2329 = vmatpush1.bf16.msra.mxu0 %v2284
  %2330 = vmatprep.subr.bf16.mxu0 0
  %2331 = vmatpush1.bf16.msra.mxu0 %v2283
  %2332 = vmatprep.subr.bf16.mxu0 0
  %2333 = vmatpush1.bf16.msra.mxu0 %v2282
  %2334 = vmatprep.subr.bf16.mxu0 0
  %2335 = vmatpush1.bf16.msra.mxu0 %v2281
  %2336 = vmatprep.subr.bf16.mxu0 0
  %2337 = vmatpush1.bf16.msra.mxu0 %v2280
  %2338 = vmatprep.subr.bf16.mxu0 0
  %2339 = vmatpush1.bf16.msra.mxu0 %v2279
  %2340 = vmatprep.subr.bf16.mxu0 0
  %2341 = vmatpush1.bf16.msra.mxu0 %v2278
  %2342 = vmatprep.subr.bf16.mxu0 0
  %2343 = vmatpush2.bf16.msra.mxu0 %v2293
  %2344 = vmatprep.subr.bf16.mxu0 0
  %2345 = vmatpush2.bf16.msra.mxu0 %v2292
  %2346 = vmatprep.subr.bf16.mxu0 0
  %2347 = vmatpush2.bf16.msra.mxu0 %v2291
  %2348 = vmatprep.subr.bf16.mxu0 0
  %2349 = vmatpush2.bf16.msra.mxu0 %v2290
  %2350 = vmatprep.subr.bf16.mxu0 0
  %2351 = vmatpush2.bf16.msra.mxu0 %v2289
  %2352 = vmatprep.subr.bf16.mxu0 0
  %2353 = vmatpush2.bf16.msra.mxu0 %v2288
  %2354 = vmatprep.subr.bf16.mxu0 0
  %2355 = vmatpush2.bf16.msra.mxu0 %v2287
  %2356 = vmatprep.subr.bf16.mxu0 0
  %2357 = vmatpush2.bf16.msra.mxu0 %v2286
  %2358 = vmatprep.mubr.bf16.mxu0 %v2125
  %2359 = vmatmul.mubr.bf16.gmra.mxu0 %v2124
  %v2360 = vpop.f32.mrf.mxu0
  %v2361 = vadd.f32 %v2180, %v2360
  %v2362 = vpop.f32.mrf.mxu0
  %v2363 = vpop.f32.mrf.mxu0
  %v2364 = vadd.f32 %v2180, %v2363
  %v2365 = vpop.f32.mrf.mxu0
  %2366 = vdwg.mxu0
  %2367 = vmatprep.subr.bf16.mxu0 0
  %2368 = vmatpush1.bf16.msra.mxu0 %v2301
  %2369 = vmatprep.subr.bf16.mxu0 0
  %2370 = vmatpush1.bf16.msra.mxu0 %v2300
  %2371 = vmatprep.subr.bf16.mxu0 0
  %2372 = vmatpush1.bf16.msra.mxu0 %v2299
  %2373 = vmatprep.subr.bf16.mxu0 0
  %2374 = vmatpush1.bf16.msra.mxu0 %v2298
  %2375 = vmatprep.subr.bf16.mxu0 0
  %2376 = vmatpush1.bf16.msra.mxu0 %v2297
  %2377 = vmatprep.subr.bf16.mxu0 0
  %2378 = vmatpush1.bf16.msra.mxu0 %v2296
  %2379 = vmatprep.subr.bf16.mxu0 0
  %2380 = vmatpush1.bf16.msra.mxu0 %v2295
  %2381 = vmatprep.subr.bf16.mxu0 0
  %2382 = vmatpush1.bf16.msra.mxu0 %v2294
  %2383 = vmatprep.subr.bf16.mxu0 0
  %2384 = vmatpush2.bf16.msra.mxu0 0
  %2385 = vmatprep.subr.bf16.mxu0 0
  %2386 = vmatpush2.bf16.msra.mxu0 0
  %2387 = vmatprep.subr.bf16.mxu0 0
  %2388 = vmatpush2.bf16.msra.mxu0 0
  %2389 = vmatprep.subr.bf16.mxu0 0
  %2390 = vmatpush2.bf16.msra.mxu0 0
  %2391 = vmatprep.subr.bf16.mxu0 0
  %2392 = vmatpush2.bf16.msra.mxu0 0
  %2393 = vmatprep.subr.bf16.mxu0 0
  %2394 = vmatpush2.bf16.msra.mxu0 0
  %2395 = vmatprep.subr.bf16.mxu0 0
  %2396 = vmatpush2.bf16.msra.mxu0 0
  %2397 = vmatprep.subr.bf16.mxu0 0
  %2398 = vmatpush2.bf16.msra.mxu0 0
  %2399 = vmatprep.mubr.bf16.mxu0 0
  %2400 = vmatmul.mubr.bf16.gmra.mxu0 %v2126
  %v2401 = vpop.f32.mrf.mxu0
  %v2402 = vadd.f32 %v2361, %v2401
  %v2403 = vpop.f32.mrf.mxu0
  %v2404 = vpop.f32.mrf.mxu0
  %v2405 = vadd.f32 %v2364, %v2404
  %v2406 = vpop.f32.mrf.mxu0
  %2407 = vdwg.mxu0
  %2408 = vst [vmem:[%s5] sm:$0xff] %v2402
  %2409 = vst [vmem:[%s5 + $0x8] sm:$0xff] %v2405
  // Predicated region
  $region22: #{lenet5_tr_forward.5} parent=0 // pred_check
    _
  $region23: #{lenet5_tr_forward.5} parent=0 // pred_check_branch
    %2411 = sbr.rel (0) target = $region25
  $region24: #{lenet5_tr_forward.5} parent=0 // pred_region
    _
  $region25: #{lenet5_tr_forward.5} parent=0 // pred_fallthru
    _
  // Predicated region
  $region26: #{lenet5_tr_forward.5} parent=0 // pred_check
    _
  $region27: #{lenet5_tr_forward.5} parent=0 // pred_check_branch
    %2413 = sbr.rel (0) target = $region29
  $region28: #{lenet5_tr_forward.5} parent=0 // pred_region
    _
  $region29: #{lenet5_tr_forward.5} parent=0 // pred_fallthru
    _

</llo_original>
